<compile_context>
chip_gen: v7x
topology: tpu7x:2x2x1
jax: 0.10.0
libtpu: 0.0.40
codegen_flags: <defaults>
</compile_context>

<pallas_src>
import functools

import jax
import jax.numpy as jnp
import numpy as np
from jax.experimental import pallas as pl
from jax.experimental.pallas import tpu as pltpu

EPS = 1e-5
VMEM_LIMIT = 48 * 1024 * 1024   # > v5e's 16 MiB scoped default, < v7x's 64 MiB physical


def _row_tile(m, min_steps=4):
    """Largest row tile that still gives the grid several parallel steps."""
    for t in (1024, 512, 256, 128, 64, 32, 16):
        if m % t == 0 and m // t >= min_steps:
            return t
    for t in (1024, 512, 256, 128, 64, 32, 16):
        if m % t == 0 and m // t >= 2:
            return t
    return m  # fallback: whole extent (equals full array dim)


def _k_tile(k):
    """K tile for the conv matmul: keep per-step VMEM bounded at large channel counts."""
    if k <= 1024:
        return k
    for t in (512, 384, 256, 128):
        if k % t == 0:
            return t
    return k


# ---------------------------- Pallas kernels ----------------------------

def _bn_stats_kernel(x_ref, sum_ref, sq_ref):
    # Per-channel sum / sum-of-squares accumulated across the row grid axis.
    # TODO(synk): for very large M switch to a two-pass / Welford formulation
    # (E[x^2]-E[x]^2 can lose precision); fine at these sizes.
    @pl.when(pl.program_id(0) == 0)
    def _():
        sum_ref[...] = jnp.zeros_like(sum_ref)
        sq_ref[...] = jnp.zeros_like(sq_ref)

    x = x_ref[...].astype(jnp.float32)
    sum_ref[...] += jnp.sum(x, axis=0, keepdims=True)
    sq_ref[...] += jnp.sum(x * x, axis=0, keepdims=True)


def _mod_adain_relu_kernel(a_ref, wg_ref, wb_ref, bg_ref, bb_ref,
                           h_ref, mean_ref, inv_ref, o_ref):
    # Fused: gamma = A @ Wg + bg ; beta = A @ Wb + bb   (MXU, bf16 operands)
    #        out = relu(gamma * (h - mean) * invstd + beta)   (VPU epilogue)
    # gamma/beta stay in registers/VMEM -> no HBM round trip.
    a = a_ref[...]
    gamma = jnp.dot(a, wg_ref[...], preferred_element_type=jnp.float32) + bg_ref[...]
    beta = jnp.dot(a, wb_ref[...], preferred_element_type=jnp.float32) + bb_ref[...]
    norm = (h_ref[...].astype(jnp.float32) - mean_ref[...]) * inv_ref[...]
    o_ref[...] = jnp.maximum(gamma * norm + beta, 0.0).astype(o_ref.dtype)


def _make_conv_kernel(with_residual):
    # K-tiled matmul + bias (+ optional fused residual add) with f32 accumulator.
    def kernel(a_ref, b_ref, bias_ref, *rest):
        if with_residual:
            res_ref, o_ref, acc_ref = rest
        else:
            o_ref, acc_ref = rest

        @pl.when(pl.program_id(1) == 0)
        def _():
            acc_ref[...] = jnp.zeros_like(acc_ref)

        acc_ref[...] += jnp.dot(a_ref[...], b_ref[...],
                                preferred_element_type=jnp.float32)

        @pl.when(pl.program_id(1) == pl.num_programs(1) - 1)
        def _():
            out = acc_ref[...] + bias_ref[...]
            if with_residual:
                out = out + res_ref[...].astype(jnp.float32)
            o_ref[...] = out.astype(o_ref.dtype)

    return kernel


# ---------------------------- Pallas wrappers ----------------------------

def bn_stats(x2d):
    """x2d: (M, C) -> (mean, invstd) each (1, C), biased variance (training BN)."""
    m, c = x2d.shape
    tm = _row_tile(m)
    s, sq = pl.pallas_call(
        _bn_stats_kernel,
        out_shape=(jax.ShapeDtypeStruct((1, c), jnp.float32),
                   jax.ShapeDtypeStruct((1, c), jnp.float32)),
        grid_spec=pltpu.PrefetchScalarGridSpec(
            num_scalar_prefetch=0,
            grid=(m // tm,),
            in_specs=[pl.BlockSpec((tm, c), lambda i: (i, 0))],
            out_specs=(pl.BlockSpec((1, c), lambda i: (0, 0)),
                       pl.BlockSpec((1, c), lambda i: (0, 0)))),
        compiler_params=pltpu.CompilerParams(
            dimension_semantics=("arbitrary",),
            vmem_limit_bytes=VMEM_LIMIT),
    )(x2d)
    mean = s / m
    var = sq / m - mean * mean
    invstd = jax.lax.rsqrt(var + EPS)
    return mean, invstd


def mod_adain_relu(a_x, wg_oikk, bg, wb_oikk, bb, h2, mean, invstd):
    """Fused gamma/beta 3x3 convs (as matmuls on im2col(x)) + AdaIN + ReLU.

    a_x: (M, 9*Cin) bf16 im2col of x (built once, shared by all AdaIN stages).
    Returns (M, C) bf16 (only ever consumed as a conv input).
    """
    m, k = a_x.shape
    c = wg_oikk.shape[0]
    wg = jnp.transpose(wg_oikk, (2, 3, 1, 0)).reshape(k, c).astype(jnp.bfloat16)
    wb = jnp.transpose(wb_oikk, (2, 3, 1, 0)).reshape(k, c).astype(jnp.bfloat16)
    bg2 = bg.reshape(1, c).astype(jnp.float32)
    bb2 = bb.reshape(1, c).astype(jnp.float32)
    tm = _row_tile(m)
    out = pl.pallas_call(
        _mod_adain_relu_kernel,
        out_shape=jax.ShapeDtypeStruct((m, c), jnp.bfloat16),
        grid_spec=pltpu.PrefetchScalarGridSpec(
            num_scalar_prefetch=0,
            grid=(m // tm,),
            in_specs=[pl.BlockSpec((tm, k), lambda i: (i, 0)),
                      pl.BlockSpec((k, c), lambda i: (0, 0)),
                      pl.BlockSpec((k, c), lambda i: (0, 0)),
                      pl.BlockSpec((1, c), lambda i: (0, 0)),
                      pl.BlockSpec((1, c), lambda i: (0, 0)),
                      pl.BlockSpec((tm, c), lambda i: (i, 0)),
                      pl.BlockSpec((1, c), lambda i: (0, 0)),
                      pl.BlockSpec((1, c), lambda i: (0, 0))],
            out_specs=pl.BlockSpec((tm, c), lambda i: (i, 0))),
        compiler_params=pltpu.CompilerParams(
            dimension_semantics=("parallel",),
            vmem_limit_bytes=VMEM_LIMIT),
    )(a_x, wg, wb, bg2, bb2, h2, mean, invstd)
    return out


def _im2col(x_nhwc, kh, kw):
    # TODO(synk): pad/concat im2col kept as XLA glue; an in-kernel halo'd
    # shifted-matmul conv would avoid the 9x HBM blow-up entirely.
    n, hgt, wid, c = x_nhwc.shape
    ph, pw = kh // 2, kw // 2
    xp = jnp.pad(x_nhwc, ((0, 0), (ph, ph), (pw, pw), (0, 0)))
    cols = [xp[:, dy:dy + hgt, dx:dx + wid, :]
            for dy in range(kh) for dx in range(kw)]
    out = jnp.concatenate(cols, axis=-1).reshape(n * hgt * wid, kh * kw * c)
    return out.astype(jnp.bfloat16)


def conv2d(x_nhwc, w_oikk, bias=None, residual2d=None):
    """Same-padding, stride-1 Conv2d (PyTorch (Cout,Cin,KH,KW) weight layout).

    Optionally fuses a residual add (residual2d: (M, Cout) f32) into the epilogue.
    """
    cout, cin, kh, kw = w_oikk.shape
    n, hgt, wid, _ = x_nhwc.shape
    m = n * hgt * wid
    if kh == 1 and kw == 1:
        a = x_nhwc.reshape(m, cin).astype(jnp.bfloat16)
    else:
        a = _im2col(x_nhwc, kh, kw)                                # (M, KH*KW*Cin) bf16
    b = jnp.transpose(w_oikk, (2, 3, 1, 0)).reshape(kh * kw * cin, cout).astype(jnp.bfloat16)
    bias2 = (jnp.zeros((1, cout), jnp.float32) if bias is None
             else bias.reshape(1, cout).astype(jnp.float32))

    k = a.shape[1]
    tm = _row_tile(m)
    tk = _k_tile(k)
    grid = (m // tm, k // tk)

    in_specs = [pl.BlockSpec((tm, tk), lambda i, kk: (i, kk)),
                pl.BlockSpec((tk, cout), lambda i, kk: (kk, 0)),
                pl.BlockSpec((1, cout), lambda i, kk: (0, 0))]
    inputs = [a, b, bias2]
    with_res = residual2d is not None
    if with_res:
        in_specs.append(pl.BlockSpec((tm, cout), lambda i, kk: (i, 0)))
        inputs.append(residual2d.astype(jnp.float32))

    out = pl.pallas_call(
        _make_conv_kernel(with_res),
        out_shape=jax.ShapeDtypeStruct((m, cout), jnp.float32),
        grid_spec=pltpu.PrefetchScalarGridSpec(
            num_scalar_prefetch=0,
            grid=grid,
            in_specs=in_specs,
            out_specs=pl.BlockSpec((tm, cout), lambda i, kk: (i, 0)),
            scratch_shapes=[pltpu.VMEM((tm, cout), jnp.float32)]),
        compiler_params=pltpu.CompilerParams(
            dimension_semantics=("parallel", "arbitrary"),
            vmem_limit_bytes=VMEM_LIMIT),
    )(*inputs)
    return out.reshape(n, hgt, wid, cout)


# ---------------------------- Model (forward + params) ----------------------------

def init_params(key, n_hin, n_hout, n_in):
    def conv_init(k, cout, cin, kh, kw, use_bias=True):
        k1, k2 = jax.random.split(k)
        bound = 1.0 / np.sqrt(cin * kh * kw)
        w = jax.random.uniform(k1, (cout, cin, kh, kw), jnp.float32, -bound, bound)
        b = (jax.random.uniform(k2, (cout,), jnp.float32, -bound, bound)
             if use_bias else None)
        return w, b

    keys = jax.random.split(key, 9)
    p = {}
    p['adin1_gamma_w'], p['adin1_gamma_b'] = conv_init(keys[0], n_hin, n_in, 3, 3)
    p['adin1_beta_w'], p['adin1_beta_b'] = conv_init(keys[1], n_hin, n_in, 3, 3)
    p['conv1_w'], p['conv1_b'] = conv_init(keys[2], n_hin, n_hin, 3, 3)
    p['adin2_gamma_w'], p['adin2_gamma_b'] = conv_init(keys[3], n_hin, n_in, 3, 3)
    p['adin2_beta_w'], p['adin2_beta_b'] = conv_init(keys[4], n_hin, n_in, 3, 3)
    p['conv2_w'], p['conv2_b'] = conv_init(keys[5], n_hout, n_hin, 3, 3)
    if n_hin != n_hout:
        p['adin3_gamma_w'], p['adin3_gamma_b'] = conv_init(keys[6], n_hin, n_in, 3, 3)
        p['adin3_beta_w'], p['adin3_beta_b'] = conv_init(keys[7], n_hin, n_in, 3, 3)
        p['conv3_w'], _ = conv_init(keys[8], n_hout, n_hin, 1, 1, use_bias=False)
    return p


def adain_resblock_forward(h_nchw, x_nchw, params, *, n_hin, n_hout):
    h = jnp.transpose(h_nchw, (0, 2, 3, 1))   # NCHW -> NHWC
    x = jnp.transpose(x_nchw, (0, 2, 3, 1))
    if x.shape[1:3] != h.shape[1:3]:
        # TODO(synk): F.interpolate(mode='nearest') equivalent kept as XLA glue.
        x = jax.image.resize(x, (x.shape[0], h.shape[1], h.shape[2], x.shape[3]),
                             method='nearest')
    n, hgt, wid, _ = h.shape
    m = n * hgt * wid

    # im2col(x) built once (bf16), reused by every AdaIN stage's gamma/beta matmul.
    a_x = _im2col(x, 3, 3)                    # (M, 9*n_in)
    h2 = h.reshape(m, n_hin)

    # Batch stats of h_in: shared by AdaIN1 and AdaIN3.
    mean_h, inv_h = bn_stats(h2)

    # Stage 1: fused gamma/beta convs + AdaIN + ReLU, then conv1.
    mod1 = mod_adain_relu(a_x, params['adin1_gamma_w'], params['adin1_gamma_b'],
                          params['adin1_beta_w'], params['adin1_beta_b'],
                          h2, mean_h, inv_h)
    out1 = conv2d(mod1.reshape(n, hgt, wid, n_hin), params['conv1_w'], params['conv1_b'])

    # Stage 2: stats of out1, fused AdaIN2 + ReLU.
    out1_2 = out1.reshape(m, n_hin)
    mean_1, inv_1 = bn_stats(out1_2)
    mod2 = mod_adain_relu(a_x, params['adin2_gamma_w'], params['adin2_gamma_b'],
                          params['adin2_beta_w'], params['adin2_beta_b'],
                          out1_2, mean_1, inv_1)

    # Skip connection.
    if n_hin != n_hout:
        mod3 = mod_adain_relu(a_x, params['adin3_gamma_w'], params['adin3_gamma_b'],
                              params['adin3_beta_w'], params['adin3_beta_b'],
                              h2, mean_h, inv_h)
        skip = conv2d(mod3.reshape(n, hgt, wid, n_hin), params['conv3_w'], None)
        skip2 = skip.reshape(m, n_hout)
    else:
        skip2 = x.reshape(m, -1).astype(jnp.float32)  # matches PyTorch: skip_connection = input

    # conv2 with the residual add fused into its epilogue.
    out = conv2d(mod2.reshape(n, hgt, wid, n_hin), params['conv2_w'], params['conv2_b'],
                 residual2d=skip2)
    return jnp.transpose(out, (0, 3, 1, 2))   # NHWC -> NCHW


# ---------------------------- pure-JAX reference ----------------------------

def _ref_conv(x_nhwc, w_oikk, bias=None):
    w = jnp.transpose(w_oikk, (2, 3, 1, 0))
    out = jax.lax.conv_general_dilated(
        x_nhwc, w, window_strides=(1, 1), padding='SAME',
        dimension_numbers=('NHWC', 'HWIO', 'NHWC'))
    if bias is not None:
        out = out + bias.reshape(1, 1, 1, -1)
    return out


def _ref_adain_relu(h, gamma, beta):
    mean = jnp.mean(h, axis=(0, 1, 2), keepdims=True)
    var = jnp.mean((h - mean) ** 2, axis=(0, 1, 2), keepdims=True)
    norm = (h - mean) * jax.lax.rsqrt(var + EPS)
    return jnp.maximum(gamma * norm + beta, 0.0)


def _ref_forward(h_nchw, x_nchw, params, n_hin, n_hout):
    h = jnp.transpose(h_nchw, (0, 2, 3, 1))
    x = jnp.transpose(x_nchw, (0, 2, 3, 1))
    if x.shape[1:3] != h.shape[1:3]:
        x = jax.image.resize(x, (x.shape[0], h.shape[1], h.shape[2], x.shape[3]),
                             method='nearest')
    g1 = _ref_conv(x, params['adin1_gamma_w'], params['adin1_gamma_b'])
    b1 = _ref_conv(x, params['adin1_beta_w'], params['adin1_beta_b'])
    o1 = _ref_conv(_ref_adain_relu(h, g1, b1), params['conv1_w'], params['conv1_b'])
    g2 = _ref_conv(x, params['adin2_gamma_w'], params['adin2_gamma_b'])
    b2 = _ref_conv(x, params['adin2_beta_w'], params['adin2_beta_b'])
    o2 = _ref_conv(_ref_adain_relu(o1, g2, b2), params['conv2_w'], params['conv2_b'])
    if n_hin != n_hout:
        g3 = _ref_conv(x, params['adin3_gamma_w'], params['adin3_gamma_b'])
        b3 = _ref_conv(x, params['adin3_beta_w'], params['adin3_beta_b'])
        skip = _ref_conv(_ref_adain_relu(h, g3, b3), params['conv3_w'], None)
    else:
        skip = x
    return jnp.transpose(o2 + skip, (0, 3, 1, 2))


# ---------------------------- main ----------------------------

if __name__ == "__main__":
    n_hin, n_hout, n_in = 4, 8, 4
    N, H, W = 2, 16, 16

    key = jax.random.PRNGKey(0)
    k1, k2, k3 = jax.random.split(key, 3)
    h_in = jax.random.normal(k1, (N, n_hin, H, W), jnp.float32)
    x_in = jax.random.normal(k2, (N, n_in, H, W), jnp.float32)
    params = init_params(k3, n_hin, n_hout, n_in)

    fwd = jax.jit(functools.partial(adain_resblock_forward, n_hin=n_hin, n_hout=n_hout))
    out = jax.block_until_ready(fwd(h_in, x_in, params))

    assert out.shape == (N, n_hout, H, W), out.shape
    ref = _ref_forward(h_in, x_in, params, n_hin, n_hout)
    # Tolerance accounts for bf16 matmul operands / bf16 intermediate storage
    # (per the perf review) vs. the f32 pure-JAX reference.
    np.testing.assert_allclose(np.asarray(out), np.asarray(ref), atol=2e-2, rtol=2e-2)

    print("KERNEL_OK")
</pallas_src>

<mosaic_0001>
module attributes {stable_mosaic.version = 11 : i64} {
  func.func @_bn_stats_kernel(%arg0: i32, %arg1: memref<128x4xf32, #tpu.memory_space<vmem>>, %arg2: memref<1x4xf32, #tpu.memory_space<vmem>>, %arg3: memref<1x4xf32, #tpu.memory_space<vmem>>) attributes {dimension_semantics = [#tpu.dimension_semantics<arbitrary>], iteration_bounds = array<i64: 4>, scalar_prefetch = 0 : i64, scratch_operands = 0 : i64, tpu.core_type = #tpu.core_type<tc>, window_params = [{transform_indices = @transform_0, window_bounds = array<i64: 128, 4>}, {pipeline_mode = #tpu.pipeline_mode<synchronous>, transform_indices = @transform_1, window_bounds = array<i64: 1, 4>}, {pipeline_mode = #tpu.pipeline_mode<synchronous>, transform_indices = @transform_2, window_bounds = array<i64: 1, 4>}]} {
    %c0_i32 = arith.constant 0 : i32
    %0 = arith.cmpi eq, %arg0, %c0_i32 : i32
    %1 = arith.extui %0 : i1 to i32
    %c0_i32_0 = arith.constant 0 : i32
    %2 = arith.cmpi ne, %1, %c0_i32_0 : i32
    scf.if %2 {
      %cst_11 = arith.constant 0.000000e+00 : f32
      %15 = vector.broadcast %cst_11 : f32 to vector<1x4xf32>
      %c0_12 = arith.constant 0 : index
      %c0_13 = arith.constant 0 : index
      %16 = vector.load %arg2[%c0_12, %c0_13] : memref<1x4xf32, #tpu.memory_space<vmem>>, vector<1x4xf32>
      tpu.vector_store %arg2[%c0_12, %c0_13], %15 {strides = array<i32>} : memref<1x4xf32, #tpu.memory_space<vmem>>, vector<1x4xf32>,
      %cst_14 = arith.constant 0.000000e+00 : f32
      %17 = vector.broadcast %cst_14 : f32 to vector<1x4xf32>
      %c0_15 = arith.constant 0 : index
      %c0_16 = arith.constant 0 : index
      %18 = vector.load %arg3[%c0_15, %c0_16] : memref<1x4xf32, #tpu.memory_space<vmem>>, vector<1x4xf32>
      tpu.vector_store %arg3[%c0_15, %c0_16], %17 {strides = array<i32>} : memref<1x4xf32, #tpu.memory_space<vmem>>, vector<1x4xf32>,
    } else {
    }
    %c0 = arith.constant 0 : index
    %c0_1 = arith.constant 0 : index
    %3 = vector.load %arg1[%c0, %c0_1] : memref<128x4xf32, #tpu.memory_space<vmem>>, vector<128x4xf32>
    %c0_2 = arith.constant 0 : index
    %c0_3 = arith.constant 0 : index
    %4 = vector.load %arg2[%c0_2, %c0_3] : memref<1x4xf32, #tpu.memory_space<vmem>>, vector<1x4xf32>
    %cst = arith.constant dense<0.000000e+00> : vector<4xf32>
    %5 = vector.multi_reduction <add>, %3, %cst [0] : vector<128x4xf32> to vector<4xf32>
    %6 = vector.shape_cast %5 : vector<4xf32> to vector<1x4xf32>
    %7 = arith.addf %4, %6 : vector<1x4xf32>
    %c0_4 = arith.constant 0 : index
    %c0_5 = arith.constant 0 : index
    %8 = vector.load %arg2[%c0_4, %c0_5] : memref<1x4xf32, #tpu.memory_space<vmem>>, vector<1x4xf32>
    tpu.vector_store %arg2[%c0_4, %c0_5], %7 {strides = array<i32>} : memref<1x4xf32, #tpu.memory_space<vmem>>, vector<1x4xf32>,
    %c0_6 = arith.constant 0 : index
    %c0_7 = arith.constant 0 : index
    %9 = vector.load %arg3[%c0_6, %c0_7] : memref<1x4xf32, #tpu.memory_space<vmem>>, vector<1x4xf32>
    %10 = arith.mulf %3, %3 : vector<128x4xf32>
    %cst_8 = arith.constant dense<0.000000e+00> : vector<4xf32>
    %11 = vector.multi_reduction <add>, %10, %cst_8 [0] : vector<128x4xf32> to vector<4xf32>
    %12 = vector.shape_cast %11 : vector<4xf32> to vector<1x4xf32>
    %13 = arith.addf %9, %12 : vector<1x4xf32>
    %c0_9 = arith.constant 0 : index
    %c0_10 = arith.constant 0 : index
    %14 = vector.load %arg3[%c0_9, %c0_10] : memref<1x4xf32, #tpu.memory_space<vmem>>, vector<1x4xf32>
    tpu.vector_store %arg3[%c0_9, %c0_10], %13 {strides = array<i32>} : memref<1x4xf32, #tpu.memory_space<vmem>>, vector<1x4xf32>,
    return
  }
  func.func @transform_0(%arg0: i32) -> (i32, i32) {
    %c0_i32 = arith.constant 0 : i32
    %c0_i32_0 = arith.constant 0 : i32
    return %arg0, %c0_i32 : i32, i32
  }
  func.func @transform_1(%arg0: i32) -> (i32, i32) {
    %c0_i32 = arith.constant 0 : i32
    %c0_i32_0 = arith.constant 0 : i32
    %c0_i32_1 = arith.constant 0 : i32
    return %c0_i32, %c0_i32_0 : i32, i32
  }
  func.func @transform_2(%arg0: i32) -> (i32, i32) {
    %c0_i32 = arith.constant 0 : i32
    %c0_i32_0 = arith.constant 0 : i32
    %c0_i32_1 = arith.constant 0 : i32
    return %c0_i32, %c0_i32_0 : i32, i32
  }
}

module attributes {stable_mosaic.version = 11 : i64} {
  func.func @_mod_adain_relu_kernel(%arg0: i32, %arg1: memref<128x36xbf16, #tpu.memory_space<vmem>>, %arg2: memref<36x4xbf16, #tpu.memory_space<vmem>>, %arg3: memref<36x4xbf16, #tpu.memory_space<vmem>>, %arg4: memref<1x4xf32, #tpu.memory_space<vmem>>, %arg5: memref<1x4xf32, #tpu.memory_space<vmem>>, %arg6: memref<128x4xf32, #tpu.memory_space<vmem>>, %arg7: memref<1x4xf32, #tpu.memory_space<vmem>>, %arg8: memref<1x4xf32, #tpu.memory_space<vmem>>, %arg9: memref<128x4xbf16, #tpu.memory_space<vmem>>) attributes {dimension_semantics = [#tpu.dimension_semantics<parallel>], iteration_bounds = array<i64: 4>, scalar_prefetch = 0 : i64, scratch_operands = 0 : i64, tpu.core_type = #tpu.core_type<tc>, window_params = [{transform_indices = @transform_0, window_bounds = array<i64: 128, 36>}, {pipeline_mode = #tpu.pipeline_mode<synchronous>, transform_indices = @transform_1, window_bounds = array<i64: 36, 4>}, {pipeline_mode = #tpu.pipeline_mode<synchronous>, transform_indices = @transform_2, window_bounds = array<i64: 36, 4>}, {pipeline_mode = #tpu.pipeline_mode<synchronous>, transform_indices = @transform_3, window_bounds = array<i64: 1, 4>}, {pipeline_mode = #tpu.pipeline_mode<synchronous>, transform_indices = @transform_4, window_bounds = array<i64: 1, 4>}, {transform_indices = @transform_5, window_bounds = array<i64: 128, 4>}, {pipeline_mode = #tpu.pipeline_mode<synchronous>, transform_indices = @transform_6, window_bounds = array<i64: 1, 4>}, {pipeline_mode = #tpu.pipeline_mode<synchronous>, transform_indices = @transform_7, window_bounds = array<i64: 1, 4>}, {transform_indices = @transform_8, window_bounds = array<i64: 128, 4>}]} {
    %c0 = arith.constant 0 : index
    %c0_0 = arith.constant 0 : index
    %0 = vector.load %arg1[%c0, %c0_0] : memref<128x36xbf16, #tpu.memory_space<vmem>>, vector<128x36xbf16>
    %c0_1 = arith.constant 0 : index
    %c0_2 = arith.constant 0 : index
    %1 = vector.load %arg2[%c0_1, %c0_2] : memref<36x4xbf16, #tpu.memory_space<vmem>>, vector<36x4xbf16>
    %cst = arith.constant dense<0.000000e+00> : vector<128x4xf32>
    %2 = tpu.matmul %0, %1, %cst {dimension_numbers = #tpu.dot_dimension_numbers<[1], [0], [0], [1], [0, 0, 1, 1], [], []>} : vector<128x36xbf16>, vector<36x4xbf16>, vector<128x4xf32> -> vector<128x4xf32>
    %c0_3 = arith.constant 0 : index
    %c0_4 = arith.constant 0 : index
    %3 = vector.load %arg4[%c0_3, %c0_4] : memref<1x4xf32, #tpu.memory_space<vmem>>, vector<1x4xf32>
    %4 = vector.broadcast %3 : vector<1x4xf32> to vector<128x4xf32>
    %5 = arith.addf %2, %4 : vector<128x4xf32>
    %c0_5 = arith.constant 0 : index
    %c0_6 = arith.constant 0 : index
    %6 = vector.load %arg3[%c0_5, %c0_6] : memref<36x4xbf16, #tpu.memory_space<vmem>>, vector<36x4xbf16>
    %cst_7 = arith.constant dense<0.000000e+00> : vector<128x4xf32>
    %7 = tpu.matmul %0, %6, %cst_7 {dimension_numbers = #tpu.dot_dimension_numbers<[1], [0], [0], [1], [0, 0, 1, 1], [], []>} : vector<128x36xbf16>, vector<36x4xbf16>, vector<128x4xf32> -> vector<128x4xf32>
    %c0_8 = arith.constant 0 : index
    %c0_9 = arith.constant 0 : index
    %8 = vector.load %arg5[%c0_8, %c0_9] : memref<1x4xf32, #tpu.memory_space<vmem>>, vector<1x4xf32>
    %9 = vector.broadcast %8 : vector<1x4xf32> to vector<128x4xf32>
    %10 = arith.addf %7, %9 : vector<128x4xf32>
    %c0_10 = arith.constant 0 : index
    %c0_11 = arith.constant 0 : index
    %11 = vector.load %arg6[%c0_10, %c0_11] : memref<128x4xf32, #tpu.memory_space<vmem>>, vector<128x4xf32>
    %c0_12 = arith.constant 0 : index
    %c0_13 = arith.constant 0 : index
    %12 = vector.load %arg7[%c0_12, %c0_13] : memref<1x4xf32, #tpu.memory_space<vmem>>, vector<1x4xf32>
    %13 = vector.broadcast %12 : vector<1x4xf32> to vector<128x4xf32>
    %14 = arith.subf %11, %13 : vector<128x4xf32>
    %c0_14 = arith.constant 0 : index
    %c0_15 = arith.constant 0 : index
    %15 = vector.load %arg8[%c0_14, %c0_15] : memref<1x4xf32, #tpu.memory_space<vmem>>, vector<1x4xf32>
    %16 = vector.broadcast %15 : vector<1x4xf32> to vector<128x4xf32>
    %17 = arith.mulf %14, %16 : vector<128x4xf32>
    %18 = arith.mulf %5, %17 : vector<128x4xf32>
    %19 = arith.addf %18, %10 : vector<128x4xf32>
    %cst_16 = arith.constant 0.000000e+00 : f32
    %20 = vector.broadcast %cst_16 : f32 to vector<128x4xf32>
    %21 = arith.maximumf %19, %20 : vector<128x4xf32>
    %22 = arith.truncf %21 : vector<128x4xf32> to vector<128x4xbf16>
    %c0_17 = arith.constant 0 : index
    %c0_18 = arith.constant 0 : index
    %23 = vector.load %arg9[%c0_17, %c0_18] : memref<128x4xbf16, #tpu.memory_space<vmem>>, vector<128x4xbf16>
    tpu.vector_store %arg9[%c0_17, %c0_18], %22 {strides = array<i32>} : memref<128x4xbf16, #tpu.memory_space<vmem>>, vector<128x4xbf16>,
    return
  }
  func.func @transform_0(%arg0: i32) -> (i32, i32) {
    %c0_i32 = arith.constant 0 : i32
    %c0_i32_0 = arith.constant 0 : i32
    return %arg0, %c0_i32 : i32, i32
  }
  func.func @transform_1(%arg0: i32) -> (i32, i32) {
    %c0_i32 = arith.constant 0 : i32
    %c0_i32_0 = arith.constant 0 : i32
    %c0_i32_1 = arith.constant 0 : i32
    return %c0_i32, %c0_i32_0 : i32, i32
  }
  func.func @transform_2(%arg0: i32) -> (i32, i32) {
    %c0_i32 = arith.constant 0 : i32
    %c0_i32_0 = arith.constant 0 : i32
    %c0_i32_1 = arith.constant 0 : i32
    return %c0_i32, %c0_i32_0 : i32, i32
  }
  func.func @transform_3(%arg0: i32) -> (i32, i32) {
    %c0_i32 = arith.constant 0 : i32
    %c0_i32_0 = arith.constant 0 : i32
    %c0_i32_1 = arith.constant 0 : i32
    return %c0_i32, %c0_i32_0 : i32, i32
  }
  func.func @transform_4(%arg0: i32) -> (i32, i32) {
    %c0_i32 = arith.constant 0 : i32
    %c0_i32_0 = arith.constant 0 : i32
    %c0_i32_1 = arith.constant 0 : i32
    return %c0_i32, %c0_i32_0 : i32, i32
  }
  func.func @transform_5(%arg0: i32) -> (i32, i32) {
    %c0_i32 = arith.constant 0 : i32
    %c0_i32_0 = arith.constant 0 : i32
    return %arg0, %c0_i32 : i32, i32
  }
  func.func @transform_6(%arg0: i32) -> (i32, i32) {
    %c0_i32 = arith.constant 0 : i32
    %c0_i32_0 = arith.constant 0 : i32
    %c0_i32_1 = arith.constant 0 : i32
    return %c0_i32, %c0_i32_0 : i32, i32
  }
  func.func @transform_7(%arg0: i32) -> (i32, i32) {
    %c0_i32 = arith.constant 0 : i32
    %c0_i32_0 = arith.constant 0 : i32
    %c0_i32_1 = arith.constant 0 : i32
    return %c0_i32, %c0_i32_0 : i32, i32
  }
  func.func @transform_8(%arg0: i32) -> (i32, i32) {
    %c0_i32 = arith.constant 0 : i32
    %c0_i32_0 = arith.constant 0 : i32
    return %arg0, %c0_i32 : i32, i32
  }
}

module attributes {stable_mosaic.version = 11 : i64} {
  func.func @kernel(%arg0: i32, %arg1: i32, %arg2: memref<128x36xbf16, #tpu.memory_space<vmem>>, %arg3: memref<36x4xbf16, #tpu.memory_space<vmem>>, %arg4: memref<1x4xf32, #tpu.memory_space<vmem>>, %arg5: memref<128x4xf32, #tpu.memory_space<vmem>>, %arg6: memref<128x4xf32, #tpu.memory_space<vmem>>) attributes {dimension_semantics = [#tpu.dimension_semantics<parallel>, #tpu.dimension_semantics<arbitrary>], iteration_bounds = array<i64: 4, 1>, scalar_prefetch = 0 : i64, scratch_operands = 1 : i64, tpu.core_type = #tpu.core_type<tc>, window_params = [{transform_indices = @transform_0, window_bounds = array<i64: 128, 36>}, {transform_indices = @transform_1, window_bounds = array<i64: 36, 4>}, {pipeline_mode = #tpu.pipeline_mode<synchronous>, transform_indices = @transform_2, window_bounds = array<i64: 1, 4>}, {transform_indices = @transform_3, window_bounds = array<i64: 128, 4>}]} {
    %c0_i32 = arith.constant 0 : i32
    %0 = arith.cmpi eq, %arg1, %c0_i32 : i32
    %1 = arith.extui %0 : i1 to i32
    %c0_i32_0 = arith.constant 0 : i32
    %2 = arith.cmpi ne, %1, %c0_i32_0 : i32
    scf.if %2 {
      %cst_10 = arith.constant 0.000000e+00 : f32
      %12 = vector.broadcast %cst_10 : f32 to vector<128x4xf32>
      %c0_11 = arith.constant 0 : index
      %c0_12 = arith.constant 0 : index
      %13 = vector.load %arg6[%c0_11, %c0_12] : memref<128x4xf32, #tpu.memory_space<vmem>>, vector<128x4xf32>
      tpu.vector_store %arg6[%c0_11, %c0_12], %12 {strides = array<i32>} : memref<128x4xf32, #tpu.memory_space<vmem>>, vector<128x4xf32>,
    } else {
    }
    %c0 = arith.constant 0 : index
    %c0_1 = arith.constant 0 : index
    %3 = vector.load %arg6[%c0, %c0_1] : memref<128x4xf32, #tpu.memory_space<vmem>>, vector<128x4xf32>
    %c0_2 = arith.constant 0 : index
    %c0_3 = arith.constant 0 : index
    %4 = vector.load %arg2[%c0_2, %c0_3] : memref<128x36xbf16, #tpu.memory_space<vmem>>, vector<128x36xbf16>
    %c0_4 = arith.constant 0 : index
    %c0_5 = arith.constant 0 : index
    %5 = vector.load %arg3[%c0_4, %c0_5] : memref<36x4xbf16, #tpu.memory_space<vmem>>, vector<36x4xbf16>
    %cst = arith.constant dense<0.000000e+00> : vector<128x4xf32>
    %6 = tpu.matmul %4, %5, %cst {dimension_numbers = #tpu.dot_dimension_numbers<[1], [0], [0], [1], [0, 0, 1, 1], [], []>} : vector<128x36xbf16>, vector<36x4xbf16>, vector<128x4xf32> -> vector<128x4xf32>
    %7 = arith.addf %3, %6 : vector<128x4xf32>
    %c0_6 = arith.constant 0 : index
    %c0_7 = arith.constant 0 : index
    %8 = vector.load %arg6[%c0_6, %c0_7] : memref<128x4xf32, #tpu.memory_space<vmem>>, vector<128x4xf32>
    tpu.vector_store %arg6[%c0_6, %c0_7], %7 {strides = array<i32>} : memref<128x4xf32, #tpu.memory_space<vmem>>, vector<128x4xf32>,
    %c0_i32_8 = arith.constant 0 : i32
    %9 = arith.cmpi eq, %arg1, %c0_i32_8 : i32
    %10 = arith.extui %9 : i1 to i32
    %c0_i32_9 = arith.constant 0 : i32
    %11 = arith.cmpi ne, %10, %c0_i32_9 : i32
    scf.if %11 {
      %c0_10 = arith.constant 0 : index
      %c0_11 = arith.constant 0 : index
      %12 = vector.load %arg6[%c0_10, %c0_11] : memref<128x4xf32, #tpu.memory_space<vmem>>, vector<128x4xf32>
      %c0_12 = arith.constant 0 : index
      %c0_13 = arith.constant 0 : index
      %13 = vector.load %arg4[%c0_12, %c0_13] : memref<1x4xf32, #tpu.memory_space<vmem>>, vector<1x4xf32>
      %14 = vector.broadcast %13 : vector<1x4xf32> to vector<128x4xf32>
      %15 = arith.addf %12, %14 : vector<128x4xf32>
      %c0_14 = arith.constant 0 : index
      %c0_15 = arith.constant 0 : index
      %16 = vector.load %arg5[%c0_14, %c0_15] : memref<128x4xf32, #tpu.memory_space<vmem>>, vector<128x4xf32>
      tpu.vector_store %arg5[%c0_14, %c0_15], %15 {strides = array<i32>} : memref<128x4xf32, #tpu.memory_space<vmem>>, vector<128x4xf32>,
    } else {
    }
    return
  }
  func.func @transform_0(%arg0: i32, %arg1: i32) -> (i32, i32) {
    %c0_i32 = arith.constant 0 : i32
    return %arg0, %arg1 : i32, i32
  }
  func.func @transform_1(%arg0: i32, %arg1: i32) -> (i32, i32) {
    %c0_i32 = arith.constant 0 : i32
    %c0_i32_0 = arith.constant 0 : i32
    return %arg1, %c0_i32 : i32, i32
  }
  func.func @transform_2(%arg0: i32, %arg1: i32) -> (i32, i32) {
    %c0_i32 = arith.constant 0 : i32
    %c0_i32_0 = arith.constant 0 : i32
    %c0_i32_1 = arith.constant 0 : i32
    return %c0_i32, %c0_i32_0 : i32, i32
  }
  func.func @transform_3(%arg0: i32, %arg1: i32) -> (i32, i32) {
    %c0_i32 = arith.constant 0 : i32
    %c0_i32_0 = arith.constant 0 : i32
    return %arg0, %c0_i32 : i32, i32
  }
}

module attributes {stable_mosaic.version = 11 : i64} {
  func.func @kernel(%arg0: i32, %arg1: i32, %arg2: memref<128x4xbf16, #tpu.memory_space<vmem>>, %arg3: memref<4x8xbf16, #tpu.memory_space<vmem>>, %arg4: memref<1x8xf32, #tpu.memory_space<vmem>>, %arg5: memref<128x8xf32, #tpu.memory_space<vmem>>, %arg6: memref<128x8xf32, #tpu.memory_space<vmem>>) attributes {dimension_semantics = [#tpu.dimension_semantics<parallel>, #tpu.dimension_semantics<arbitrary>], iteration_bounds = array<i64: 4, 1>, scalar_prefetch = 0 : i64, scratch_operands = 1 : i64, tpu.core_type = #tpu.core_type<tc>, window_params = [{transform_indices = @transform_0, window_bounds = array<i64: 128, 4>}, {transform_indices = @transform_1, window_bounds = array<i64: 4, 8>}, {pipeline_mode = #tpu.pipeline_mode<synchronous>, transform_indices = @transform_2, window_bounds = array<i64: 1, 8>}, {transform_indices = @transform_3, window_bounds = array<i64: 128, 8>}]} {
    %c0_i32 = arith.constant 0 : i32
    %0 = arith.cmpi eq, %arg1, %c0_i32 : i32
    %1 = arith.extui %0 : i1 to i32
    %c0_i32_0 = arith.constant 0 : i32
    %2 = arith.cmpi ne, %1, %c0_i32_0 : i32
    scf.if %2 {
      %cst_10 = arith.constant 0.000000e+00 : f32
      %12 = vector.broadcast %cst_10 : f32 to vector<128x8xf32>
      %c0_11 = arith.constant 0 : index
      %c0_12 = arith.constant 0 : index
      %13 = vector.load %arg6[%c0_11, %c0_12] : memref<128x8xf32, #tpu.memory_space<vmem>>, vector<128x8xf32>
      tpu.vector_store %arg6[%c0_11, %c0_12], %12 {strides = array<i32>} : memref<128x8xf32, #tpu.memory_space<vmem>>, vector<128x8xf32>,
    } else {
    }
    %c0 = arith.constant 0 : index
    %c0_1 = arith.constant 0 : index
    %3 = vector.load %arg6[%c0, %c0_1] : memref<128x8xf32, #tpu.memory_space<vmem>>, vector<128x8xf32>
    %c0_2 = arith.constant 0 : index
    %c0_3 = arith.constant 0 : index
    %4 = vector.load %arg2[%c0_2, %c0_3] : memref<128x4xbf16, #tpu.memory_space<vmem>>, vector<128x4xbf16>
    %c0_4 = arith.constant 0 : index
    %c0_5 = arith.constant 0 : index
    %5 = vector.load %arg3[%c0_4, %c0_5] : memref<4x8xbf16, #tpu.memory_space<vmem>>, vector<4x8xbf16>
    %cst = arith.constant dense<0.000000e+00> : vector<128x8xf32>
    %6 = tpu.matmul %4, %5, %cst {dimension_numbers = #tpu.dot_dimension_numbers<[1], [0], [0], [1], [0, 0, 1, 1], [], []>} : vector<128x4xbf16>, vector<4x8xbf16>, vector<128x8xf32> -> vector<128x8xf32>
    %7 = arith.addf %3, %6 : vector<128x8xf32>
    %c0_6 = arith.constant 0 : index
    %c0_7 = arith.constant 0 : index
    %8 = vector.load %arg6[%c0_6, %c0_7] : memref<128x8xf32, #tpu.memory_space<vmem>>, vector<128x8xf32>
    tpu.vector_store %arg6[%c0_6, %c0_7], %7 {strides = array<i32>} : memref<128x8xf32, #tpu.memory_space<vmem>>, vector<128x8xf32>,
    %c0_i32_8 = arith.constant 0 : i32
    %9 = arith.cmpi eq, %arg1, %c0_i32_8 : i32
    %10 = arith.extui %9 : i1 to i32
    %c0_i32_9 = arith.constant 0 : i32
    %11 = arith.cmpi ne, %10, %c0_i32_9 : i32
    scf.if %11 {
      %c0_10 = arith.constant 0 : index
      %c0_11 = arith.constant 0 : index
      %12 = vector.load %arg6[%c0_10, %c0_11] : memref<128x8xf32, #tpu.memory_space<vmem>>, vector<128x8xf32>
      %c0_12 = arith.constant 0 : index
      %c0_13 = arith.constant 0 : index
      %13 = vector.load %arg4[%c0_12, %c0_13] : memref<1x8xf32, #tpu.memory_space<vmem>>, vector<1x8xf32>
      %14 = vector.broadcast %13 : vector<1x8xf32> to vector<128x8xf32>
      %15 = arith.addf %12, %14 : vector<128x8xf32>
      %c0_14 = arith.constant 0 : index
      %c0_15 = arith.constant 0 : index
      %16 = vector.load %arg5[%c0_14, %c0_15] : memref<128x8xf32, #tpu.memory_space<vmem>>, vector<128x8xf32>
      tpu.vector_store %arg5[%c0_14, %c0_15], %15 {strides = array<i32>} : memref<128x8xf32, #tpu.memory_space<vmem>>, vector<128x8xf32>,
    } else {
    }
    return
  }
  func.func @transform_0(%arg0: i32, %arg1: i32) -> (i32, i32) {
    %c0_i32 = arith.constant 0 : i32
    return %arg0, %arg1 : i32, i32
  }
  func.func @transform_1(%arg0: i32, %arg1: i32) -> (i32, i32) {
    %c0_i32 = arith.constant 0 : i32
    %c0_i32_0 = arith.constant 0 : i32
    return %arg1, %c0_i32 : i32, i32
  }
  func.func @transform_2(%arg0: i32, %arg1: i32) -> (i32, i32) {
    %c0_i32 = arith.constant 0 : i32
    %c0_i32_0 = arith.constant 0 : i32
    %c0_i32_1 = arith.constant 0 : i32
    return %c0_i32, %c0_i32_0 : i32, i32
  }
  func.func @transform_3(%arg0: i32, %arg1: i32) -> (i32, i32) {
    %c0_i32 = arith.constant 0 : i32
    %c0_i32_0 = arith.constant 0 : i32
    return %arg0, %c0_i32 : i32, i32
  }
}

module attributes {stable_mosaic.version = 11 : i64} {
  func.func @kernel(%arg0: i32, %arg1: i32, %arg2: memref<128x36xbf16, #tpu.memory_space<vmem>>, %arg3: memref<36x8xbf16, #tpu.memory_space<vmem>>, %arg4: memref<1x8xf32, #tpu.memory_space<vmem>>, %arg5: memref<128x8xf32, #tpu.memory_space<vmem>>, %arg6: memref<128x8xf32, #tpu.memory_space<vmem>>, %arg7: memref<128x8xf32, #tpu.memory_space<vmem>>) attributes {dimension_semantics = [#tpu.dimension_semantics<parallel>, #tpu.dimension_semantics<arbitrary>], iteration_bounds = array<i64: 4, 1>, scalar_prefetch = 0 : i64, scratch_operands = 1 : i64, tpu.core_type = #tpu.core_type<tc>, window_params = [{transform_indices = @transform_0, window_bounds = array<i64: 128, 36>}, {transform_indices = @transform_1, window_bounds = array<i64: 36, 8>}, {pipeline_mode = #tpu.pipeline_mode<synchronous>, transform_indices = @transform_2, window_bounds = array<i64: 1, 8>}, {transform_indices = @transform_3, window_bounds = array<i64: 128, 8>}, {transform_indices = @transform_4, window_bounds = array<i64: 128, 8>}]} {
    %c0_i32 = arith.constant 0 : i32
    %0 = arith.cmpi eq, %arg1, %c0_i32 : i32
    %1 = arith.extui %0 : i1 to i32
    %c0_i32_0 = arith.constant 0 : i32
    %2 = arith.cmpi ne, %1, %c0_i32_0 : i32
    scf.if %2 {
      %cst_10 = arith.constant 0.000000e+00 : f32
      %12 = vector.broadcast %cst_10 : f32 to vector<128x8xf32>
      %c0_11 = arith.constant 0 : index
      %c0_12 = arith.constant 0 : index
      %13 = vector.load %arg7[%c0_11, %c0_12] : memref<128x8xf32, #tpu.memory_space<vmem>>, vector<128x8xf32>
      tpu.vector_store %arg7[%c0_11, %c0_12], %12 {strides = array<i32>} : memref<128x8xf32, #tpu.memory_space<vmem>>, vector<128x8xf32>,
    } else {
    }
    %c0 = arith.constant 0 : index
    %c0_1 = arith.constant 0 : index
    %3 = vector.load %arg7[%c0, %c0_1] : memref<128x8xf32, #tpu.memory_space<vmem>>, vector<128x8xf32>
    %c0_2 = arith.constant 0 : index
    %c0_3 = arith.constant 0 : index
    %4 = vector.load %arg2[%c0_2, %c0_3] : memref<128x36xbf16, #tpu.memory_space<vmem>>, vector<128x36xbf16>
    %c0_4 = arith.constant 0 : index
    %c0_5 = arith.constant 0 : index
    %5 = vector.load %arg3[%c0_4, %c0_5] : memref<36x8xbf16, #tpu.memory_space<vmem>>, vector<36x8xbf16>
    %cst = arith.constant dense<0.000000e+00> : vector<128x8xf32>
    %6 = tpu.matmul %4, %5, %cst {dimension_numbers = #tpu.dot_dimension_numbers<[1], [0], [0], [1], [0, 0, 1, 1], [], []>} : vector<128x36xbf16>, vector<36x8xbf16>, vector<128x8xf32> -> vector<128x8xf32>
    %7 = arith.addf %3, %6 : vector<128x8xf32>
    %c0_6 = arith.constant 0 : index
    %c0_7 = arith.constant 0 : index
    %8 = vector.load %arg7[%c0_6, %c0_7] : memref<128x8xf32, #tpu.memory_space<vmem>>, vector<128x8xf32>
    tpu.vector_store %arg7[%c0_6, %c0_7], %7 {strides = array<i32>} : memref<128x8xf32, #tpu.memory_space<vmem>>, vector<128x8xf32>,
    %c0_i32_8 = arith.constant 0 : i32
    %9 = arith.cmpi eq, %arg1, %c0_i32_8 : i32
    %10 = arith.extui %9 : i1 to i32
    %c0_i32_9 = arith.constant 0 : i32
    %11 = arith.cmpi ne, %10, %c0_i32_9 : i32
    scf.if %11 {
      %c0_10 = arith.constant 0 : index
      %c0_11 = arith.constant 0 : index
      %12 = vector.load %arg7[%c0_10, %c0_11] : memref<128x8xf32, #tpu.memory_space<vmem>>, vector<128x8xf32>
      %c0_12 = arith.constant 0 : index
      %c0_13 = arith.constant 0 : index
      %13 = vector.load %arg4[%c0_12, %c0_13] : memref<1x8xf32, #tpu.memory_space<vmem>>, vector<1x8xf32>
      %14 = vector.broadcast %13 : vector<1x8xf32> to vector<128x8xf32>
      %15 = arith.addf %12, %14 : vector<128x8xf32>
      %c0_14 = arith.constant 0 : index
      %c0_15 = arith.constant 0 : index
      %16 = vector.load %arg5[%c0_14, %c0_15] : memref<128x8xf32, #tpu.memory_space<vmem>>, vector<128x8xf32>
      %17 = arith.addf %15, %16 : vector<128x8xf32>
      %c0_16 = arith.constant 0 : index
      %c0_17 = arith.constant 0 : index
      %18 = vector.load %arg6[%c0_16, %c0_17] : memref<128x8xf32, #tpu.memory_space<vmem>>, vector<128x8xf32>
      tpu.vector_store %arg6[%c0_16, %c0_17], %17 {strides = array<i32>} : memref<128x8xf32, #tpu.memory_space<vmem>>, vector<128x8xf32>,
    } else {
    }
    return
  }
  func.func @transform_0(%arg0: i32, %arg1: i32) -> (i32, i32) {
    %c0_i32 = arith.constant 0 : i32
    return %arg0, %arg1 : i32, i32
  }
  func.func @transform_1(%arg0: i32, %arg1: i32) -> (i32, i32) {
    %c0_i32 = arith.constant 0 : i32
    %c0_i32_0 = arith.constant 0 : i32
    return %arg1, %c0_i32 : i32, i32
  }
  func.func @transform_2(%arg0: i32, %arg1: i32) -> (i32, i32) {
    %c0_i32 = arith.constant 0 : i32
    %c0_i32_0 = arith.constant 0 : i32
    %c0_i32_1 = arith.constant 0 : i32
    return %c0_i32, %c0_i32_0 : i32, i32
  }
  func.func @transform_3(%arg0: i32, %arg1: i32) -> (i32, i32) {
    %c0_i32 = arith.constant 0 : i32
    %c0_i32_0 = arith.constant 0 : i32
    return %arg0, %c0_i32 : i32, i32
  }
  func.func @transform_4(%arg0: i32, %arg1: i32) -> (i32, i32) {
    %c0_i32 = arith.constant 0 : i32
    %c0_i32_0 = arith.constant 0 : i32
    return %arg0, %c0_i32 : i32, i32
  }
}

</mosaic_0001>

<llo_original>
// kernel: adain_resblock_forward.8
$region0: #{adain_resblock_forward.8}
  #allocation0 [shape = 'u32[]', space=smem, size = 0x4, offset = 0x4, fixed_abs, tag = 'smem constant byte address 0x4 - core index']
  #allocation1 [shape = 'u32[144,128]{1,0:T(1,128)}', space=vmem, size = 0x12000, scoped, tag = 'internal scratch']
  %s0 = inlined_call_operand.vmem [shape: f32[512,4], index: 0, kind: input, shape index: {}]
  %s1 = inlined_call_operand.vmem [shape: f32[1,4], index: 1, kind: output, shape index: {0}]
  %s2 = inlined_call_operand.vmem [shape: f32[1,4], index: 2, kind: output, shape index: {1}]
  %3 = xla_tuple %s1, %s2
  %s4 = sld [smem:[#allocation0]]
  $region49: #{adain_resblock_forward.8} parent=0
    _
  %s6 = ssub.s32 1, %s4
  %s7 = scalar_select 0, %s6, %s4
  loop: start=0, step=1, limit=6
  $region2: #{adain_resblock_forward.8} parent=0 // loop_pre_header
    _
  $region3: #{adain_resblock_forward.8} parent=0 // loop_header
    %s9 = sphi 0, %s13
    %p10 = scmp.ge.s32.totalorder %s9, 6
    %s19 = sphi 0, %s21
    %s22 = sphi 0, %s19
    %s23 = sphi 0, %s22
    %s39 = sphi 0, %s23
    %s43 = sphi 0, %s43
    %s45 = sphi 0, %s43
    %s46 = sphi 0, %s45
    %s60 = sphi 0, %s46
    %s64 = sphi 0, %s64
    %s66 = sphi 0, %s64
    %s67 = sphi 0, %s66
    %s81 = sphi 0, %s67
  $region4: #{adain_resblock_forward.8} parent=0 // loop_header_branch
    %12 = sbr.rel (%p10) target = $region8
  $region5: #{adain_resblock_forward.8} parent=0 // loop_body
    %s14 = ssub.s32 %s9, 1
    %s15 = ssub.s32 %s9, 2
    %s16 = sadd.s32 %s9, 1
    %s17 = ssub.s32 %s9, %s16
    %p18 = scmp.eq.s32.totalorder %s17, 0
    %s20 = sadd.s32 %s19, 1
    %s21 = scalar_select %p18, %s19, %s20
    %p24 = pneg %p18
    %p25 = scmp.eq.s32.totalorder %s9, 3
    %p26 = por %p24, %p25
    %p27 = scmp.ne.s32.totalorder %s19, %s22
    %p28 = scmp.eq.s32.totalorder %s9, 0
    %p29 = por %p27, %p28
    %p30 = scmp.ne.s32.totalorder %s19, %s22
    %p31 = scmp.eq.s32.totalorder %s14, 3
    %p32 = por %p30, %p31
    %p33 = scmp.ne.s32.totalorder %s22, %s23
    %p34 = scmp.eq.s32.totalorder %s14, 0
    %p35 = por %p33, %p34
    %p36 = scmp.ne.s32.totalorder %s22, %s23
    %p37 = scmp.eq.s32.totalorder %s15, 3
    %p38 = por %p36, %p37
    %p40 = scmp.ne.s32.totalorder %s23, %s39
    %p41 = scmp.eq.s32.totalorder %s15, 0
    %p42 = por %p40, %p41
    %s44 = sadd.s32 %s43, 1
    %p47 = scmp.eq.s32.totalorder %s9, 3
    %p48 = scmp.ne.s32.totalorder %s43, %s45
    %p49 = scmp.eq.s32.totalorder %s9, 0
    %p50 = por %p48, %p49
    %p51 = scmp.ne.s32.totalorder %s43, %s45
    %p52 = scmp.eq.s32.totalorder %s14, 3
    %p53 = por %p51, %p52
    %p54 = scmp.ne.s32.totalorder %s45, %s46
    %p55 = scmp.eq.s32.totalorder %s14, 0
    %p56 = por %p54, %p55
    %p57 = scmp.ne.s32.totalorder %s45, %s46
    %p58 = scmp.eq.s32.totalorder %s15, 3
    %p59 = por %p57, %p58
    %p61 = scmp.ne.s32.totalorder %s46, %s60
    %p62 = scmp.eq.s32.totalorder %s15, 0
    %p63 = por %p61, %p62
    %s65 = sadd.s32 %s64, 1
    %p68 = scmp.eq.s32.totalorder %s9, 3
    %p69 = scmp.ne.s32.totalorder %s64, %s66
    %p70 = scmp.eq.s32.totalorder %s9, 0
    %p71 = por %p69, %p70
    %p72 = scmp.ne.s32.totalorder %s64, %s66
    %p73 = scmp.eq.s32.totalorder %s14, 3
    %p74 = por %p72, %p73
    %p75 = scmp.ne.s32.totalorder %s66, %s67
    %p76 = scmp.eq.s32.totalorder %s14, 0
    %p77 = por %p75, %p76
    %p78 = scmp.ne.s32.totalorder %s66, %s67
    %p79 = scmp.eq.s32.totalorder %s15, 3
    %p80 = por %p78, %p79
    %p82 = scmp.ne.s32.totalorder %s67, %s81
    %p83 = scmp.eq.s32.totalorder %s15, 0
    %p84 = por %p82, %p83
    %p85 = scmp.le.s32.totalorder 1, %s9
    %p86 = scmp.lt.s32.totalorder %s9, 5
    %p87 = pnand %p85, %p86
    %p88 = pneg %p87
    // Predicated region
    $region9: #{adain_resblock_forward.8} parent=5 // pred_check
      _
    $region10: #{adain_resblock_forward.8} parent=5 // pred_check_branch
      %90 = sbr.rel (%p87) target = $region12
    $region11: #{adain_resblock_forward.8} parent=5 // pred_region
      %s91 = ssub.s32 %s9, 1
    $region12: #{adain_resblock_forward.8} parent=5 // pred_fallthru
      _
    %p92 = scmp.lt.s32.totalorder %s9, 4
    // Predicated region
    $region13: #{adain_resblock_forward.8} parent=5 // pred_check
      %p93 = pneg %p92
    $region14: #{adain_resblock_forward.8} parent=5 // pred_check_branch
      %95 = sbr.rel (%p93) target = $region16
    $region15: #{adain_resblock_forward.8} parent=5 // pred_region
      // Predicated region
      $region17: #{adain_resblock_forward.8} parent=15 // pred_check
        %p96 = pneg %p29
      $region18: #{adain_resblock_forward.8} parent=15 // pred_check_branch
        %98 = sbr.rel (%p96) target = $region20
      $region19: #{adain_resblock_forward.8} parent=15 // pred_region
        %s99 = smul.u32 16, %s9
        %p100 = scmp.lt.s32.totalorder %s99, 63
        %s101 = scalar_select %p100, %s99, 63
        %s102 = smul.addr %s101, 8
        %s103 = scalar_lea.vmem %s0, %s102
        %s104 = smul.u32 16, %s9
      $region20: #{adain_resblock_forward.8} parent=15 // pred_fallthru
        _
    $region16: #{adain_resblock_forward.8} parent=5 // pred_fallthru
      _
    %p105 = scmp.le.s32.totalorder 1, %s9
    %p106 = scmp.lt.s32.totalorder %s9, 5
    %p107 = pnand %p105, %p106
    %p108 = pneg %p107
    // Predicated region
    $region21: #{adain_resblock_forward.8} parent=5 // pred_check
      _
    $region22: #{adain_resblock_forward.8} parent=5 // pred_check_branch
      %110 = sbr.rel (%p107) target = $region24
    $region23: #{adain_resblock_forward.8} parent=5 // pred_region
      %s111 = ssub.s32 %s9, 1
      %s112 = smul.u32 16, %s14
      %p113 = scmp.lt.s32.totalorder %s112, 63
      %s114 = scalar_select %p113, %s112, 63
      %s115 = smul.addr %s114, 8
      %s116 = scalar_lea.vmem %s0, %s115
      %p117 = pneg %p35
      %p118 = pneg %p32
      %p119 = pneg %p56
      %p120 = pneg %p53
      %p121 = pneg %p77
      %p122 = pneg %p74
      %s123 = smul.u32 16, %s14
      %p124 = scmp.lt.s32.totalorder %s123, 63
      %s125 = scalar_select %p124, %s123, 63
      %s126 = smul.addr %s125, 8
      %s127 = scalar_lea.vmem %s0, %s126
      %s128 = smul.u32 16, %s14
      %p129 = scmp.eq.s32.totalorder %s14, 0
      // Predicated region
      $region25: #{adain_resblock_forward.8} parent=23 // pred_check
        %p130 = pneg %p129
      $region26: #{adain_resblock_forward.8} parent=23 // pred_check_branch
        %132 = sbr.rel (%p130) target = $region28
      $region27: #{adain_resblock_forward.8} parent=23 // pred_region
        %vm133 = vcmask 24576
        %134 = vst.msk [vmem:[%s1] sm:$0x1] %vm133, 0.0
        %135 = vst.msk [vmem:[%s2] sm:$0x1] %vm133, 0.0
      $region28: #{adain_resblock_forward.8} parent=23 // pred_fallthru
        _
      %v136 = vld [vmem:[%s127] sm:$0xff]
      %v137 = vld [vmem:[%s127 + $0x8] sm:$0xff]
      %v138 = vld [vmem:[%s127 + $0x10] sm:$0xff]
      %v139 = vld [vmem:[%s127 + $0x18] sm:$0xff]
      %v140 = vld [vmem:[%s127 + $0x20] sm:$0xff]
      %v141 = vld [vmem:[%s127 + $0x28] sm:$0xff]
      %v142 = vld [vmem:[%s127 + $0x30] sm:$0xff]
      %v143 = vld [vmem:[%s127 + $0x38] sm:$0xff]
      %v144 = vld [vmem:[%s127 + $0x40] sm:$0xff]
      %v145 = vld [vmem:[%s127 + $0x48] sm:$0xff]
      %v146 = vld [vmem:[%s127 + $0x50] sm:$0xff]
      %v147 = vld [vmem:[%s127 + $0x58] sm:$0xff]
      %v148 = vld [vmem:[%s127 + $0x60] sm:$0xff]
      %v149 = vld [vmem:[%s127 + $0x68] sm:$0xff]
      %v150 = vld [vmem:[%s127 + $0x70] sm:$0xff]
      %v151 = vld [vmem:[%s127 + $0x78] sm:$0xff]
      %v152 = vld [vmem:[%s1] sm:$0x1]
      %vm153 = vcmask 31744
      %v154 = vsel %vm153, %v136, 0.0
      %v155 = vsel %vm153, %v137, 0.0
      %v156 = vadd.f32 %v154, %v155
      %v157 = vsel %vm153, %v138, 0.0
      %v158 = vadd.f32 %v156, %v157
      %v159 = vsel %vm153, %v139, 0.0
      %v160 = vadd.f32 %v158, %v159
      %v161 = vsel %vm153, %v140, 0.0
      %v162 = vadd.f32 %v160, %v161
      %v163 = vsel %vm153, %v141, 0.0
      %v164 = vadd.f32 %v162, %v163
      %v165 = vsel %vm153, %v142, 0.0
      %v166 = vadd.f32 %v164, %v165
      %v167 = vsel %vm153, %v143, 0.0
      %v168 = vadd.f32 %v166, %v167
      %v169 = vsel %vm153, %v144, 0.0
      %v170 = vadd.f32 %v168, %v169
      %v171 = vsel %vm153, %v145, 0.0
      %v172 = vadd.f32 %v170, %v171
      %v173 = vsel %vm153, %v146, 0.0
      %v174 = vadd.f32 %v172, %v173
      %v175 = vsel %vm153, %v147, 0.0
      %v176 = vadd.f32 %v174, %v175
      %v177 = vsel %vm153, %v148, 0.0
      %v178 = vadd.f32 %v176, %v177
      %v179 = vsel %vm153, %v149, 0.0
      %v180 = vadd.f32 %v178, %v179
      %v181 = vsel %vm153, %v150, 0.0
      %v182 = vadd.f32 %v180, %v181
      %v183 = vsel %vm153, %v151, 0.0
      %v184 = vadd.f32 %v182, %v183
      %v185 = vrot.slane %v184, 4
      %v186 = vadd.f32 %v184, %v185
      %v187 = vrot.slane %v186, 2
      %v188 = vadd.f32 %v186, %v187
      %v189 = vrot.slane %v188, 1
      %v190 = vadd.f32 %v188, %v189
      %v191 = vadd.f32 %v152, %v190
      %vm192 = vcmask 24576
      %193 = vst.msk [vmem:[%s1] sm:$0x1] %vm192, %v191
      %v194 = vld [vmem:[%s2] sm:$0x1]
      %v195 = vmul.f32 %v136, %v136
      %v196 = vmul.f32 %v137, %v137
      %v197 = vmul.f32 %v138, %v138
      %v198 = vmul.f32 %v139, %v139
      %v199 = vmul.f32 %v140, %v140
      %v200 = vmul.f32 %v141, %v141
      %v201 = vmul.f32 %v142, %v142
      %v202 = vmul.f32 %v143, %v143
      %v203 = vmul.f32 %v144, %v144
      %v204 = vmul.f32 %v145, %v145
      %v205 = vmul.f32 %v146, %v146
      %v206 = vmul.f32 %v147, %v147
      %v207 = vmul.f32 %v148, %v148
      %v208 = vmul.f32 %v149, %v149
      %v209 = vmul.f32 %v150, %v150
      %v210 = vmul.f32 %v151, %v151
      %v211 = vsel %vm153, %v195, 0.0
      %v212 = vsel %vm153, %v196, 0.0
      %v213 = vadd.f32 %v211, %v212
      %v214 = vsel %vm153, %v197, 0.0
      %v215 = vadd.f32 %v213, %v214
      %v216 = vsel %vm153, %v198, 0.0
      %v217 = vadd.f32 %v215, %v216
      %v218 = vsel %vm153, %v199, 0.0
      %v219 = vadd.f32 %v217, %v218
      %v220 = vsel %vm153, %v200, 0.0
      %v221 = vadd.f32 %v219, %v220
      %v222 = vsel %vm153, %v201, 0.0
      %v223 = vadd.f32 %v221, %v222
      %v224 = vsel %vm153, %v202, 0.0
      %v225 = vadd.f32 %v223, %v224
      %v226 = vsel %vm153, %v203, 0.0
      %v227 = vadd.f32 %v225, %v226
      %v228 = vsel %vm153, %v204, 0.0
      %v229 = vadd.f32 %v227, %v228
      %v230 = vsel %vm153, %v205, 0.0
      %v231 = vadd.f32 %v229, %v230
      %v232 = vsel %vm153, %v206, 0.0
      %v233 = vadd.f32 %v231, %v232
      %v234 = vsel %vm153, %v207, 0.0
      %v235 = vadd.f32 %v233, %v234
      %v236 = vsel %vm153, %v208, 0.0
      %v237 = vadd.f32 %v235, %v236
      %v238 = vsel %vm153, %v209, 0.0
      %v239 = vadd.f32 %v237, %v238
      %v240 = vsel %vm153, %v210, 0.0
      %v241 = vadd.f32 %v239, %v240
      %v242 = vrot.slane %v241, 4
      %v243 = vadd.f32 %v241, %v242
      %v244 = vrot.slane %v243, 2
      %v245 = vadd.f32 %v243, %v244
      %v246 = vrot.slane %v245, 1
      %v247 = vadd.f32 %v245, %v246
      %v248 = vadd.f32 %v194, %v247
      %249 = vst.msk [vmem:[%s2] sm:$0x1] %vm192, %v248
      // Predicated region
      $region29: #{adain_resblock_forward.8} parent=23 // pred_check
        %p250 = pneg %p53
      $region30: #{adain_resblock_forward.8} parent=23 // pred_check_branch
        %252 = sbr.rel (%p250) target = $region32
      $region31: #{adain_resblock_forward.8} parent=23 // pred_region
        _
      $region32: #{adain_resblock_forward.8} parent=23 // pred_fallthru
        _
      // Predicated region
      $region33: #{adain_resblock_forward.8} parent=23 // pred_check
        %p253 = pneg %p74
      $region34: #{adain_resblock_forward.8} parent=23 // pred_check_branch
        %255 = sbr.rel (%p253) target = $region36
      $region35: #{adain_resblock_forward.8} parent=23 // pred_region
        _
      $region36: #{adain_resblock_forward.8} parent=23 // pred_fallthru
        _
      // Predicated region
      $region37: #{adain_resblock_forward.8} parent=23 // pred_check
        %p256 = pneg %p53
      $region38: #{adain_resblock_forward.8} parent=23 // pred_check_branch
        %258 = sbr.rel (%p256) target = $region40
      $region39: #{adain_resblock_forward.8} parent=23 // pred_region
        _
      $region40: #{adain_resblock_forward.8} parent=23 // pred_fallthru
        _
      // Predicated region
      $region41: #{adain_resblock_forward.8} parent=23 // pred_check
        %p259 = pneg %p74
      $region42: #{adain_resblock_forward.8} parent=23 // pred_check_branch
        %261 = sbr.rel (%p259) target = $region44
      $region43: #{adain_resblock_forward.8} parent=23 // pred_region
        _
      $region44: #{adain_resblock_forward.8} parent=23 // pred_fallthru
        _
    $region24: #{adain_resblock_forward.8} parent=5 // pred_fallthru
      _
    %p262 = scmp.le.s32.totalorder 2, %s9
    // Predicated region
    $region45: #{adain_resblock_forward.8} parent=5 // pred_check
      %p263 = pneg %p262
    $region46: #{adain_resblock_forward.8} parent=5 // pred_check_branch
      %265 = sbr.rel (%p263) target = $region48
    $region47: #{adain_resblock_forward.8} parent=5 // pred_region
      %s266 = ssub.s32 %s9, 2
    $region48: #{adain_resblock_forward.8} parent=5 // pred_fallthru
      _
  $region6: #{adain_resblock_forward.8} parent=0 // loop_footer
    %s13 = sadd.s32 1, %s9
  $region7: #{adain_resblock_forward.8} parent=0 // loop_footer_branch
    %8 = sbr.rel target = $region3
  $region8: #{adain_resblock_forward.8} parent=0 // loop_exit
    _

// kernel: adain_resblock_forward.9
$region0: #{adain_resblock_forward.9}
  #allocation0 [shape = 'u32[]', space=smem, size = 0x4, offset = 0x4, fixed_abs, tag = 'smem constant byte address 0x4 - core index']
  #allocation1 [shape = 'u32[144,128]{1,0:T(1,128)}', space=vmem, size = 0x12000, scoped, tag = 'internal scratch']
  %s0 = inlined_call_operand.vmem [shape: bf16[512,36], index: 0, kind: input, shape index: {}]
  %s1 = inlined_call_operand.vmem [shape: bf16[36,4], index: 1, kind: input, shape index: {}]
  %s2 = inlined_call_operand.vmem [shape: bf16[36,4], index: 2, kind: input, shape index: {}]
  %s3 = inlined_call_operand.vmem [shape: f32[1,4], index: 3, kind: input, shape index: {}]
  %s4 = inlined_call_operand.vmem [shape: f32[1,4], index: 4, kind: input, shape index: {}]
  %s5 = inlined_call_operand.vmem [shape: f32[512,4], index: 5, kind: input, shape index: {}]
  %s6 = inlined_call_operand.vmem [shape: f32[1,4], index: 6, kind: input, shape index: {}]
  %s7 = inlined_call_operand.vmem [shape: f32[1,4], index: 7, kind: input, shape index: {}]
  %s8 = inlined_call_operand.vmem [shape: bf16[512,4], index: 8, kind: output, shape index: {}]
  %s9 = sld [smem:[#allocation0]]
  $region65: #{adain_resblock_forward.9} parent=0
    _
  %s11 = ssub.s32 1, %s9
  %s12 = scalar_select 0, %s11, %s9
  loop: start=0, step=1, limit=6
  $region2: #{adain_resblock_forward.9} parent=0 // loop_pre_header
    _
  $region3: #{adain_resblock_forward.9} parent=0 // loop_header
    %s14 = sphi 0, %s18
    %p15 = scmp.ge.s32.totalorder %s14, 6
    %s24 = sphi 0, %s26
    %s27 = sphi 0, %s24
    %s28 = sphi 0, %s27
    %s44 = sphi 0, %s28
    %s48 = sphi 0, %s48
    %s50 = sphi 0, %s48
    %s51 = sphi 0, %s50
    %s65 = sphi 0, %s51
    %s69 = sphi 0, %s69
    %s71 = sphi 0, %s69
    %s72 = sphi 0, %s71
    %s86 = sphi 0, %s72
    %s90 = sphi 0, %s90
    %s92 = sphi 0, %s90
    %s93 = sphi 0, %s92
    %s107 = sphi 0, %s93
    %s111 = sphi 0, %s111
    %s113 = sphi 0, %s111
    %s114 = sphi 0, %s113
    %s128 = sphi 0, %s114
    %s134 = sphi 0, %s136
    %s137 = sphi 0, %s134
    %s138 = sphi 0, %s137
    %s154 = sphi 0, %s138
    %s158 = sphi 0, %s158
    %s160 = sphi 0, %s158
    %s161 = sphi 0, %s160
    %s175 = sphi 0, %s161
    %s179 = sphi 0, %s179
    %s181 = sphi 0, %s179
    %s182 = sphi 0, %s181
    %s196 = sphi 0, %s182
    %s202 = sphi 0, %s204
    %s205 = sphi 0, %s202
    %s206 = sphi 0, %s205
    %s222 = sphi 0, %s206
  $region4: #{adain_resblock_forward.9} parent=0 // loop_header_branch
    %17 = sbr.rel (%p15) target = $region8
  $region5: #{adain_resblock_forward.9} parent=0 // loop_body
    %s19 = ssub.s32 %s14, 1
    %s20 = ssub.s32 %s14, 2
    %s21 = sadd.s32 %s14, 1
    %s22 = ssub.s32 %s14, %s21
    %p23 = scmp.eq.s32.totalorder %s22, 0
    %s25 = sadd.s32 %s24, 1
    %s26 = scalar_select %p23, %s24, %s25
    %p29 = pneg %p23
    %p30 = scmp.eq.s32.totalorder %s14, 3
    %p31 = por %p29, %p30
    %p32 = scmp.ne.s32.totalorder %s24, %s27
    %p33 = scmp.eq.s32.totalorder %s14, 0
    %p34 = por %p32, %p33
    %p35 = scmp.ne.s32.totalorder %s24, %s27
    %p36 = scmp.eq.s32.totalorder %s19, 3
    %p37 = por %p35, %p36
    %p38 = scmp.ne.s32.totalorder %s27, %s28
    %p39 = scmp.eq.s32.totalorder %s19, 0
    %p40 = por %p38, %p39
    %p41 = scmp.ne.s32.totalorder %s27, %s28
    %p42 = scmp.eq.s32.totalorder %s20, 3
    %p43 = por %p41, %p42
    %p45 = scmp.ne.s32.totalorder %s28, %s44
    %p46 = scmp.eq.s32.totalorder %s20, 0
    %p47 = por %p45, %p46
    %s49 = sadd.s32 %s48, 1
    %p52 = scmp.eq.s32.totalorder %s14, 3
    %p53 = scmp.ne.s32.totalorder %s48, %s50
    %p54 = scmp.eq.s32.totalorder %s14, 0
    %p55 = por %p53, %p54
    %p56 = scmp.ne.s32.totalorder %s48, %s50
    %p57 = scmp.eq.s32.totalorder %s19, 3
    %p58 = por %p56, %p57
    %p59 = scmp.ne.s32.totalorder %s50, %s51
    %p60 = scmp.eq.s32.totalorder %s19, 0
    %p61 = por %p59, %p60
    %p62 = scmp.ne.s32.totalorder %s50, %s51
    %p63 = scmp.eq.s32.totalorder %s20, 3
    %p64 = por %p62, %p63
    %p66 = scmp.ne.s32.totalorder %s51, %s65
    %p67 = scmp.eq.s32.totalorder %s20, 0
    %p68 = por %p66, %p67
    %s70 = sadd.s32 %s69, 1
    %p73 = scmp.eq.s32.totalorder %s14, 3
    %p74 = scmp.ne.s32.totalorder %s69, %s71
    %p75 = scmp.eq.s32.totalorder %s14, 0
    %p76 = por %p74, %p75
    %p77 = scmp.ne.s32.totalorder %s69, %s71
    %p78 = scmp.eq.s32.totalorder %s19, 3
    %p79 = por %p77, %p78
    %p80 = scmp.ne.s32.totalorder %s71, %s72
    %p81 = scmp.eq.s32.totalorder %s19, 0
    %p82 = por %p80, %p81
    %p83 = scmp.ne.s32.totalorder %s71, %s72
    %p84 = scmp.eq.s32.totalorder %s20, 3
    %p85 = por %p83, %p84
    %p87 = scmp.ne.s32.totalorder %s72, %s86
    %p88 = scmp.eq.s32.totalorder %s20, 0
    %p89 = por %p87, %p88
    %s91 = sadd.s32 %s90, 1
    %p94 = scmp.eq.s32.totalorder %s14, 3
    %p95 = scmp.ne.s32.totalorder %s90, %s92
    %p96 = scmp.eq.s32.totalorder %s14, 0
    %p97 = por %p95, %p96
    %p98 = scmp.ne.s32.totalorder %s90, %s92
    %p99 = scmp.eq.s32.totalorder %s19, 3
    %p100 = por %p98, %p99
    %p101 = scmp.ne.s32.totalorder %s92, %s93
    %p102 = scmp.eq.s32.totalorder %s19, 0
    %p103 = por %p101, %p102
    %p104 = scmp.ne.s32.totalorder %s92, %s93
    %p105 = scmp.eq.s32.totalorder %s20, 3
    %p106 = por %p104, %p105
    %p108 = scmp.ne.s32.totalorder %s93, %s107
    %p109 = scmp.eq.s32.totalorder %s20, 0
    %p110 = por %p108, %p109
    %s112 = sadd.s32 %s111, 1
    %p115 = scmp.eq.s32.totalorder %s14, 3
    %p116 = scmp.ne.s32.totalorder %s111, %s113
    %p117 = scmp.eq.s32.totalorder %s14, 0
    %p118 = por %p116, %p117
    %p119 = scmp.ne.s32.totalorder %s111, %s113
    %p120 = scmp.eq.s32.totalorder %s19, 3
    %p121 = por %p119, %p120
    %p122 = scmp.ne.s32.totalorder %s113, %s114
    %p123 = scmp.eq.s32.totalorder %s19, 0
    %p124 = por %p122, %p123
    %p125 = scmp.ne.s32.totalorder %s113, %s114
    %p126 = scmp.eq.s32.totalorder %s20, 3
    %p127 = por %p125, %p126
    %p129 = scmp.ne.s32.totalorder %s114, %s128
    %p130 = scmp.eq.s32.totalorder %s20, 0
    %p131 = por %p129, %p130
    %s132 = ssub.s32 %s14, %s21
    %p133 = scmp.eq.s32.totalorder %s132, 0
    %s135 = sadd.s32 %s134, 1
    %s136 = scalar_select %p133, %s134, %s135
    %p139 = pneg %p133
    %p140 = scmp.eq.s32.totalorder %s14, 3
    %p141 = por %p139, %p140
    %p142 = scmp.ne.s32.totalorder %s134, %s137
    %p143 = scmp.eq.s32.totalorder %s14, 0
    %p144 = por %p142, %p143
    %p145 = scmp.ne.s32.totalorder %s134, %s137
    %p146 = scmp.eq.s32.totalorder %s19, 3
    %p147 = por %p145, %p146
    %p148 = scmp.ne.s32.totalorder %s137, %s138
    %p149 = scmp.eq.s32.totalorder %s19, 0
    %p150 = por %p148, %p149
    %p151 = scmp.ne.s32.totalorder %s137, %s138
    %p152 = scmp.eq.s32.totalorder %s20, 3
    %p153 = por %p151, %p152
    %p155 = scmp.ne.s32.totalorder %s138, %s154
    %p156 = scmp.eq.s32.totalorder %s20, 0
    %p157 = por %p155, %p156
    %s159 = sadd.s32 %s158, 1
    %p162 = scmp.eq.s32.totalorder %s14, 3
    %p163 = scmp.ne.s32.totalorder %s158, %s160
    %p164 = scmp.eq.s32.totalorder %s14, 0
    %p165 = por %p163, %p164
    %p166 = scmp.ne.s32.totalorder %s158, %s160
    %p167 = scmp.eq.s32.totalorder %s19, 3
    %p168 = por %p166, %p167
    %p169 = scmp.ne.s32.totalorder %s160, %s161
    %p170 = scmp.eq.s32.totalorder %s19, 0
    %p171 = por %p169, %p170
    %p172 = scmp.ne.s32.totalorder %s160, %s161
    %p173 = scmp.eq.s32.totalorder %s20, 3
    %p174 = por %p172, %p173
    %p176 = scmp.ne.s32.totalorder %s161, %s175
    %p177 = scmp.eq.s32.totalorder %s20, 0
    %p178 = por %p176, %p177
    %s180 = sadd.s32 %s179, 1
    %p183 = scmp.eq.s32.totalorder %s14, 3
    %p184 = scmp.ne.s32.totalorder %s179, %s181
    %p185 = scmp.eq.s32.totalorder %s14, 0
    %p186 = por %p184, %p185
    %p187 = scmp.ne.s32.totalorder %s179, %s181
    %p188 = scmp.eq.s32.totalorder %s19, 3
    %p189 = por %p187, %p188
    %p190 = scmp.ne.s32.totalorder %s181, %s182
    %p191 = scmp.eq.s32.totalorder %s19, 0
    %p192 = por %p190, %p191
    %p193 = scmp.ne.s32.totalorder %s181, %s182
    %p194 = scmp.eq.s32.totalorder %s20, 3
    %p195 = por %p193, %p194
    %p197 = scmp.ne.s32.totalorder %s182, %s196
    %p198 = scmp.eq.s32.totalorder %s20, 0
    %p199 = por %p197, %p198
    %s200 = ssub.s32 %s14, %s21
    %p201 = scmp.eq.s32.totalorder %s200, 0
    %s203 = sadd.s32 %s202, 1
    %s204 = scalar_select %p201, %s202, %s203
    %p207 = pneg %p201
    %p208 = scmp.eq.s32.totalorder %s14, 3
    %p209 = por %p207, %p208
    %p210 = scmp.ne.s32.totalorder %s202, %s205
    %p211 = scmp.eq.s32.totalorder %s14, 0
    %p212 = por %p210, %p211
    %p213 = scmp.ne.s32.totalorder %s202, %s205
    %p214 = scmp.eq.s32.totalorder %s19, 3
    %p215 = por %p213, %p214
    %p216 = scmp.ne.s32.totalorder %s205, %s206
    %p217 = scmp.eq.s32.totalorder %s19, 0
    %p218 = por %p216, %p217
    %p219 = scmp.ne.s32.totalorder %s205, %s206
    %p220 = scmp.eq.s32.totalorder %s20, 3
    %p221 = por %p219, %p220
    %p223 = scmp.ne.s32.totalorder %s206, %s222
    %p224 = scmp.eq.s32.totalorder %s20, 0
    %p225 = por %p223, %p224
    %p226 = scmp.le.s32.totalorder 1, %s14
    %p227 = scmp.lt.s32.totalorder %s14, 5
    %p228 = pnand %p226, %p227
    %p229 = pneg %p228
    // Predicated region
    $region9: #{adain_resblock_forward.9} parent=5 // pred_check
      _
    $region10: #{adain_resblock_forward.9} parent=5 // pred_check_branch
      %231 = sbr.rel (%p228) target = $region12
    $region11: #{adain_resblock_forward.9} parent=5 // pred_region
      %s232 = ssub.s32 %s14, 1
      // Predicated region
      $region13: #{adain_resblock_forward.9} parent=11 // pred_check
        %p233 = pneg %p61
      $region14: #{adain_resblock_forward.9} parent=11 // pred_check_branch
        %235 = sbr.rel (%p233) target = $region16
      $region15: #{adain_resblock_forward.9} parent=11 // pred_region
        _
      $region16: #{adain_resblock_forward.9} parent=11 // pred_fallthru
        _
      // Predicated region
      $region17: #{adain_resblock_forward.9} parent=11 // pred_check
        %p236 = pneg %p82
      $region18: #{adain_resblock_forward.9} parent=11 // pred_check_branch
        %238 = sbr.rel (%p236) target = $region20
      $region19: #{adain_resblock_forward.9} parent=11 // pred_region
        _
      $region20: #{adain_resblock_forward.9} parent=11 // pred_fallthru
        _
      // Predicated region
      $region21: #{adain_resblock_forward.9} parent=11 // pred_check
        %p239 = pneg %p103
      $region22: #{adain_resblock_forward.9} parent=11 // pred_check_branch
        %241 = sbr.rel (%p239) target = $region24
      $region23: #{adain_resblock_forward.9} parent=11 // pred_region
        _
      $region24: #{adain_resblock_forward.9} parent=11 // pred_fallthru
        _
      // Predicated region
      $region25: #{adain_resblock_forward.9} parent=11 // pred_check
        %p242 = pneg %p124
      $region26: #{adain_resblock_forward.9} parent=11 // pred_check_branch
        %244 = sbr.rel (%p242) target = $region28
      $region27: #{adain_resblock_forward.9} parent=11 // pred_region
        _
      $region28: #{adain_resblock_forward.9} parent=11 // pred_fallthru
        _
      // Predicated region
      $region29: #{adain_resblock_forward.9} parent=11 // pred_check
        %p245 = pneg %p171
      $region30: #{adain_resblock_forward.9} parent=11 // pred_check_branch
        %247 = sbr.rel (%p245) target = $region32
      $region31: #{adain_resblock_forward.9} parent=11 // pred_region
        _
      $region32: #{adain_resblock_forward.9} parent=11 // pred_fallthru
        _
      // Predicated region
      $region33: #{adain_resblock_forward.9} parent=11 // pred_check
        %p248 = pneg %p192
      $region34: #{adain_resblock_forward.9} parent=11 // pred_check_branch
        %250 = sbr.rel (%p248) target = $region36
      $region35: #{adain_resblock_forward.9} parent=11 // pred_region
        _
      $region36: #{adain_resblock_forward.9} parent=11 // pred_fallthru
        _
    $region12: #{adain_resblock_forward.9} parent=5 // pred_fallthru
      _
    %p251 = scmp.lt.s32.totalorder %s14, 4
    // Predicated region
    $region37: #{adain_resblock_forward.9} parent=5 // pred_check
      %p252 = pneg %p251
    $region38: #{adain_resblock_forward.9} parent=5 // pred_check_branch
      %254 = sbr.rel (%p252) target = $region40
    $region39: #{adain_resblock_forward.9} parent=5 // pred_region
      // Predicated region
      $region41: #{adain_resblock_forward.9} parent=39 // pred_check
        %p255 = pneg %p34
      $region42: #{adain_resblock_forward.9} parent=39 // pred_check_branch
        %257 = sbr.rel (%p255) target = $region44
      $region43: #{adain_resblock_forward.9} parent=39 // pred_region
        %s258 = smul.u32 16, %s14
        %p259 = scmp.lt.s32.totalorder %s258, 63
        %s260 = scalar_select %p259, %s258, 63
        %s261 = smul.addr %s260, 4
        %s262 = scalar_lea.vmem %s0, %s261
        %s263 = smul.u32 16, %s14
      $region44: #{adain_resblock_forward.9} parent=39 // pred_fallthru
        _
      // Predicated region
      $region45: #{adain_resblock_forward.9} parent=39 // pred_check
        %p264 = pneg %p144
      $region46: #{adain_resblock_forward.9} parent=39 // pred_check_branch
        %266 = sbr.rel (%p264) target = $region48
      $region47: #{adain_resblock_forward.9} parent=39 // pred_region
        %s267 = smul.u32 16, %s14
        %p268 = scmp.lt.s32.totalorder %s267, 63
        %s269 = scalar_select %p268, %s267, 63
        %s270 = smul.addr %s269, 8
        %s271 = scalar_lea.vmem %s5, %s270
        %s272 = smul.u32 16, %s14
      $region48: #{adain_resblock_forward.9} parent=39 // pred_fallthru
        _
    $region40: #{adain_resblock_forward.9} parent=5 // pred_fallthru
      _
    %p273 = scmp.le.s32.totalorder 1, %s14
    %p274 = scmp.lt.s32.totalorder %s14, 5
    %p275 = pnand %p273, %p274
    %p276 = pneg %p275
    // Predicated region
    $region49: #{adain_resblock_forward.9} parent=5 // pred_check
      _
    $region50: #{adain_resblock_forward.9} parent=5 // pred_check_branch
      %278 = sbr.rel (%p275) target = $region52
    $region51: #{adain_resblock_forward.9} parent=5 // pred_region
      %s279 = ssub.s32 %s14, 1
      %s280 = smul.u32 16, %s19
      %p281 = scmp.lt.s32.totalorder %s280, 63
      %s282 = scalar_select %p281, %s280, 63
      %s283 = smul.addr %s282, 4
      %s284 = scalar_lea.vmem %s0, %s283
      %p285 = pneg %p40
      %p286 = pneg %p37
      %p287 = pneg %p61
      %p288 = pneg %p58
      %p289 = pneg %p82
      %p290 = pneg %p79
      %p291 = pneg %p103
      %p292 = pneg %p100
      %p293 = pneg %p124
      %p294 = pneg %p121
      %s295 = smul.u32 16, %s19
      %p296 = scmp.lt.s32.totalorder %s295, 63
      %s297 = scalar_select %p296, %s295, 63
      %s298 = smul.addr %s297, 8
      %s299 = scalar_lea.vmem %s5, %s298
      %p300 = pneg %p150
      %p301 = pneg %p147
      %p302 = pneg %p171
      %p303 = pneg %p168
      %p304 = pneg %p192
      %p305 = pneg %p189
      %p306 = pneg %p218
      %p307 = pneg %p215
      %s308 = smul.u32 16, %s19
      %p309 = scmp.lt.s32.totalorder %s308, 63
      %s310 = scalar_select %p309, %s308, 63
      %s311 = smul.addr %s310, 4
      %s312 = scalar_lea.vmem %s8, %s311
      %s313 = smul.u32 16, %s19
      %p314 = scmp.lt.s32.totalorder %s313, 63
      %s315 = scalar_select %p314, %s313, 63
      %s316 = smul.addr %s315, 4
      %s317 = scalar_lea.vmem %s0, %s316
      %s318 = smul.u32 16, %s19
      %s319 = smul.u32 16, %s19
      %p320 = scmp.lt.s32.totalorder %s319, 63
      %s321 = scalar_select %p320, %s319, 63
      %s322 = smul.addr %s321, 8
      %s323 = scalar_lea.vmem %s5, %s322
      %s324 = smul.u32 16, %s19
      %s325 = smul.u32 16, %s19
      %p326 = scmp.lt.s32.totalorder %s325, 63
      %s327 = scalar_select %p326, %s325, 63
      %s328 = smul.addr %s327, 4
      %s329 = scalar_lea.vmem %s8, %s328
      %s330 = smul.u32 16, %s19
      %v332 = vld [vmem:[%s317] sm:$0xf]
      %v333 = vld [vmem:[%s317 + $0x4] sm:$0xf]
      %v334 = vld [vmem:[%s317 + $0x8] sm:$0xf]
      %v335 = vld [vmem:[%s317 + $0xc] sm:$0xf]
      %v336 = vld [vmem:[%s317 + $0x10] sm:$0xf]
      %v337 = vld [vmem:[%s317 + $0x14] sm:$0xf]
      %v338 = vld [vmem:[%s317 + $0x18] sm:$0xf]
      %v339 = vld [vmem:[%s317 + $0x1c] sm:$0xf]
      %v340 = vld [vmem:[%s317 + $0x20] sm:$0xf]
      %v341 = vld [vmem:[%s317 + $0x24] sm:$0xf]
      %v342 = vld [vmem:[%s317 + $0x28] sm:$0xf]
      %v343 = vld [vmem:[%s317 + $0x2c] sm:$0xf]
      %v344 = vld [vmem:[%s317 + $0x30] sm:$0xf]
      %v345 = vld [vmem:[%s317 + $0x34] sm:$0xf]
      %v346 = vld [vmem:[%s317 + $0x38] sm:$0xf]
      %v347 = vld [vmem:[%s317 + $0x3c] sm:$0xf]
      %v348 = vld [vmem:[%s1] sm:$0xf]
      %v349 = vld [vmem:[%s1 + $0x4] sm:$0xf]
      %v350 = vld [vmem:[%s1 + $0x8] sm:$0xf]
      %v351 = vld [vmem:[%s1 + $0xc] sm:$0xf]
      %v352 = vld [vmem:[%s1 + $0x10] sm:$0x3]
      %v353 = vld [vmem:[%s3] sm:$0x1]
      %v355 = vlaneseq
      %v356 = vshrl.u32 %v355, 7
      %v357 = vsub.s32 0, %v356
      %v358 = vrot.slane %v353, %v357
      %v376 = vunpack.c.l.b16 %v332
      %v377 = vunpack.c.l.b16 %v333
      %v378 = vunpack.c.l.b16 %v334
      %v379 = vunpack.c.l.b16 %v335
      %v380 = vunpack.c.l.b16 %v336
      %v381 = vunpack.c.l.b16 %v337
      %v382 = vunpack.c.l.b16 %v338
      %v383 = vunpack.c.l.b16 %v339
      %v384 = vunpack.c.l.b16 %v340
      %v385 = vunpack.c.l.b16 %v341
      %v386 = vunpack.c.l.b16 %v342
      %v387 = vunpack.c.l.b16 %v343
      %v388 = vunpack.c.l.b16 %v344
      %v389 = vunpack.c.l.b16 %v345
      %v390 = vunpack.c.l.b16 %v346
      %v391 = vunpack.c.l.b16 %v347
      %v392 = vpack.c.b16 %v377, %v376
      %v393 = vpack.c.b16 %v379, %v378
      %v394 = vpack.c.b16 %v381, %v380
      %v395 = vpack.c.b16 %v383, %v382
      %v396 = vpack.c.b16 %v385, %v384
      %v397 = vpack.c.b16 %v387, %v386
      %v398 = vpack.c.b16 %v389, %v388
      %v399 = vpack.c.b16 %v391, %v390
      %v405 = vunpack.c.l.b16 %v348
      %v406 = vunpack.c.l.b16 %v349
      %v407 = vunpack.c.l.b16 %v350
      %v408 = vunpack.c.l.b16 %v351
      %v409 = vunpack.c.l.b16 %v352
      %v410 = vpack.c.b16 %v406, %v405
      %v411 = vpack.c.b16 %v408, %v407
      %v412 = vpack.c.b16 %v409, %v409
      %vm415 = vcmask 293888
      %v417 = vsel %vm415, %v392, 0
      %v420 = vsel %vm415, %v393, 0
      %v423 = vsel %vm415, %v394, 0
      %v426 = vsel %vm415, %v395, 0
      %v429 = vsel %vm415, %v396, 0
      %v432 = vsel %vm415, %v397, 0
      %v435 = vsel %vm415, %v398, 0
      %v438 = vsel %vm415, %v399, 0
      %vm440 = vcmask 1041408
      %v442 = vsel %vm440, %v412, 0
      %444 = vmatprep.subr.bf16.mxu0 0
      %445 = vmatpush1.bf16.msra.mxu0 %v410
      %446 = vmatprep.subr.bf16.mxu0 0
      %447 = vmatpush1.bf16.msra.mxu0 %v411
      %448 = vmatprep.subr.bf16.mxu0 0
      %449 = vmatpush1.bf16.msra.mxu0 %v442
      %450 = vmatprep.subr.bf16.mxu0 0
      %451 = vmatpush1.bf16.msra.mxu0 0
      %452 = vmatprep.subr.bf16.mxu0 0
      %453 = vmatpush1.bf16.msra.mxu0 0
      %454 = vmatprep.subr.bf16.mxu0 0
      %455 = vmatpush1.bf16.msra.mxu0 0
      %456 = vmatprep.subr.bf16.mxu0 0
      %457 = vmatpush1.bf16.msra.mxu0 0
      %458 = vmatprep.subr.bf16.mxu0 0
      %459 = vmatpush1.bf16.msra.mxu0 0
      %460 = vmatprep.subr.bf16.mxu0 0
      %461 = vmatpush1.bf16.msra.mxu0 0
      %462 = vmatprep.subr.bf16.mxu0 0
      %463 = vmatpush1.bf16.msra.mxu0 0
      %464 = vmatprep.subr.bf16.mxu0 0
      %465 = vmatpush1.bf16.msra.mxu0 0
      %466 = vmatprep.subr.bf16.mxu0 0
      %467 = vmatpush1.bf16.msra.mxu0 0
      %468 = vmatprep.subr.bf16.mxu0 0
      %469 = vmatpush1.bf16.msra.mxu0 0
      %470 = vmatprep.subr.bf16.mxu0 0
      %471 = vmatpush1.bf16.msra.mxu0 0
      %472 = vmatprep.subr.bf16.mxu0 0
      %473 = vmatpush1.bf16.msra.mxu0 0
      %474 = vmatprep.subr.bf16.mxu0 0
      %475 = vmatpush1.bf16.msra.mxu0 0
      %476 = vmatprep.mubr.bf16.mxu0 0
      %477 = vmatmul.mubr.bf16.gmra.mrb[0].mxu0 %v417
      %v478 = vpop.f32.mrb[0].mxu0
      %v479 = vadd.f32 %v358, %v478
      %v480 = vpop.f32.mrb[0].mxu0
      %v481 = vpop.f32.mrb[0].mxu0
      %v482 = vadd.f32 %v358, %v481
      %v483 = vpop.f32.mrb[0].mxu0
      %484 = vmatprep.mubr.bf16.mxu0 0
      %485 = vmatmul.mubr.bf16.gmra.mrb[0].mxu0 %v420
      %v486 = vpop.f32.mrb[0].mxu0
      %v487 = vadd.f32 %v358, %v486
      %v488 = vpop.f32.mrb[0].mxu0
      %v489 = vpop.f32.mrb[0].mxu0
      %v490 = vadd.f32 %v358, %v489
      %v491 = vpop.f32.mrb[0].mxu0
      %492 = vmatprep.mubr.bf16.mxu0 0
      %493 = vmatmul.mubr.bf16.gmra.mrb[0].mxu0 %v423
      %v494 = vpop.f32.mrb[0].mxu0
      %v495 = vadd.f32 %v358, %v494
      %v496 = vpop.f32.mrb[0].mxu0
      %v497 = vpop.f32.mrb[0].mxu0
      %v498 = vadd.f32 %v358, %v497
      %v499 = vpop.f32.mrb[0].mxu0
      %500 = vmatprep.mubr.bf16.mxu0 0
      %501 = vmatmul.mubr.bf16.gmra.mrb[0].mxu0 %v426
      %v502 = vpop.f32.mrb[0].mxu0
      %v503 = vadd.f32 %v358, %v502
      %v504 = vpop.f32.mrb[0].mxu0
      %v505 = vpop.f32.mrb[0].mxu0
      %v506 = vadd.f32 %v358, %v505
      %v507 = vpop.f32.mrb[0].mxu0
      %508 = vmatprep.mubr.bf16.mxu0 0
      %509 = vmatmul.mubr.bf16.gmra.mrb[0].mxu0 %v429
      %v510 = vpop.f32.mrb[0].mxu0
      %v511 = vadd.f32 %v358, %v510
      %v512 = vpop.f32.mrb[0].mxu0
      %v513 = vpop.f32.mrb[0].mxu0
      %v514 = vadd.f32 %v358, %v513
      %v515 = vpop.f32.mrb[0].mxu0
      %516 = vmatprep.mubr.bf16.mxu0 0
      %517 = vmatmul.mubr.bf16.gmra.mrb[0].mxu0 %v432
      %v518 = vpop.f32.mrb[0].mxu0
      %v519 = vadd.f32 %v358, %v518
      %v520 = vpop.f32.mrb[0].mxu0
      %v521 = vpop.f32.mrb[0].mxu0
      %v522 = vadd.f32 %v358, %v521
      %v523 = vpop.f32.mrb[0].mxu0
      %524 = vmatprep.mubr.bf16.mxu0 0
      %525 = vmatmul.mubr.bf16.gmra.mrb[0].mxu0 %v435
      %v526 = vpop.f32.mrb[0].mxu0
      %v527 = vadd.f32 %v358, %v526
      %v528 = vpop.f32.mrb[0].mxu0
      %v529 = vpop.f32.mrb[0].mxu0
      %v530 = vadd.f32 %v358, %v529
      %v531 = vpop.f32.mrb[0].mxu0
      %532 = vmatprep.mubr.bf16.mxu0 0
      %533 = vmatmul.mubr.bf16.gmra.mrb[0].mxu0 %v438
      %v534 = vpop.f32.mrb[0].mxu0
      %v535 = vadd.f32 %v358, %v534
      %v536 = vpop.f32.mrb[0].mxu0
      %v537 = vpop.f32.mrb[0].mxu0
      %v538 = vadd.f32 %v358, %v537
      %v539 = vpop.f32.mrb[0].mxu0
      %540 = vdwg.mxu0
      %v541 = vld [vmem:[%s2] sm:$0xf]
      %v542 = vld [vmem:[%s2 + $0x4] sm:$0xf]
      %v543 = vld [vmem:[%s2 + $0x8] sm:$0xf]
      %v544 = vld [vmem:[%s2 + $0xc] sm:$0xf]
      %v545 = vld [vmem:[%s2 + $0x10] sm:$0x3]
      %v546 = vld [vmem:[%s4] sm:$0x1]
      %v548 = vlaneseq
      %v549 = vshrl.u32 %v548, 7
      %v550 = vsub.s32 0, %v549
      %v551 = vrot.slane %v546, %v550
      %v558 = vunpack.c.l.b16 %v541
      %v559 = vunpack.c.l.b16 %v542
      %v560 = vunpack.c.l.b16 %v543
      %v561 = vunpack.c.l.b16 %v544
      %v562 = vunpack.c.l.b16 %v545
      %v563 = vpack.c.b16 %v559, %v558
      %v564 = vpack.c.b16 %v561, %v560
      %v565 = vpack.c.b16 %v562, %v562
      %v569 = vsel %vm440, %v565, 0
      %571 = vmatprep.subr.bf16.mxu0 0
      %572 = vmatpush1.bf16.msra.mxu0 %v563
      %573 = vmatprep.subr.bf16.mxu0 0
      %574 = vmatpush1.bf16.msra.mxu0 %v564
      %575 = vmatprep.subr.bf16.mxu0 0
      %576 = vmatpush1.bf16.msra.mxu0 %v569
      %577 = vmatprep.subr.bf16.mxu0 0
      %578 = vmatpush1.bf16.msra.mxu0 0
      %579 = vmatprep.subr.bf16.mxu0 0
      %580 = vmatpush1.bf16.msra.mxu0 0
      %581 = vmatprep.subr.bf16.mxu0 0
      %582 = vmatpush1.bf16.msra.mxu0 0
      %583 = vmatprep.subr.bf16.mxu0 0
      %584 = vmatpush1.bf16.msra.mxu0 0
      %585 = vmatprep.subr.bf16.mxu0 0
      %586 = vmatpush1.bf16.msra.mxu0 0
      %587 = vmatprep.subr.bf16.mxu0 0
      %588 = vmatpush1.bf16.msra.mxu0 0
      %589 = vmatprep.subr.bf16.mxu0 0
      %590 = vmatpush1.bf16.msra.mxu0 0
      %591 = vmatprep.subr.bf16.mxu0 0
      %592 = vmatpush1.bf16.msra.mxu0 0
      %593 = vmatprep.subr.bf16.mxu0 0
      %594 = vmatpush1.bf16.msra.mxu0 0
      %595 = vmatprep.subr.bf16.mxu0 0
      %596 = vmatpush1.bf16.msra.mxu0 0
      %597 = vmatprep.subr.bf16.mxu0 0
      %598 = vmatpush1.bf16.msra.mxu0 0
      %599 = vmatprep.subr.bf16.mxu0 0
      %600 = vmatpush1.bf16.msra.mxu0 0
      %601 = vmatprep.subr.bf16.mxu0 0
      %602 = vmatpush1.bf16.msra.mxu0 0
      %603 = vmatprep.mubr.bf16.mxu0 0
      %604 = vmatmul.mubr.bf16.gmra.mrb[0].mxu0 %v417
      %v605 = vpop.f32.mrb[0].mxu0
      %v606 = vadd.f32 %v551, %v605
      %v607 = vpop.f32.mrb[0].mxu0
      %v608 = vpop.f32.mrb[0].mxu0
      %v609 = vadd.f32 %v551, %v608
      %v610 = vpop.f32.mrb[0].mxu0
      %611 = vmatprep.mubr.bf16.mxu0 0
      %612 = vmatmul.mubr.bf16.gmra.mrb[0].mxu0 %v420
      %v613 = vpop.f32.mrb[0].mxu0
      %v614 = vadd.f32 %v551, %v613
      %v615 = vpop.f32.mrb[0].mxu0
      %v616 = vpop.f32.mrb[0].mxu0
      %v617 = vadd.f32 %v551, %v616
      %v618 = vpop.f32.mrb[0].mxu0
      %619 = vmatprep.mubr.bf16.mxu0 0
      %620 = vmatmul.mubr.bf16.gmra.mrb[0].mxu0 %v423
      %v621 = vpop.f32.mrb[0].mxu0
      %v622 = vadd.f32 %v551, %v621
      %v623 = vpop.f32.mrb[0].mxu0
      %v624 = vpop.f32.mrb[0].mxu0
      %v625 = vadd.f32 %v551, %v624
      %v626 = vpop.f32.mrb[0].mxu0
      %627 = vmatprep.mubr.bf16.mxu0 0
      %628 = vmatmul.mubr.bf16.gmra.mrb[0].mxu0 %v426
      %v629 = vpop.f32.mrb[0].mxu0
      %v630 = vadd.f32 %v551, %v629
      %v631 = vpop.f32.mrb[0].mxu0
      %v632 = vpop.f32.mrb[0].mxu0
      %v633 = vadd.f32 %v551, %v632
      %v634 = vpop.f32.mrb[0].mxu0
      %635 = vmatprep.mubr.bf16.mxu0 0
      %636 = vmatmul.mubr.bf16.gmra.mrb[0].mxu0 %v429
      %v637 = vpop.f32.mrb[0].mxu0
      %v638 = vadd.f32 %v551, %v637
      %v639 = vpop.f32.mrb[0].mxu0
      %v640 = vpop.f32.mrb[0].mxu0
      %v641 = vadd.f32 %v551, %v640
      %v642 = vpop.f32.mrb[0].mxu0
      %643 = vmatprep.mubr.bf16.mxu0 0
      %644 = vmatmul.mubr.bf16.gmra.mrb[0].mxu0 %v432
      %v645 = vpop.f32.mrb[0].mxu0
      %v646 = vadd.f32 %v551, %v645
      %v647 = vpop.f32.mrb[0].mxu0
      %v648 = vpop.f32.mrb[0].mxu0
      %v649 = vadd.f32 %v551, %v648
      %v650 = vpop.f32.mrb[0].mxu0
      %651 = vmatprep.mubr.bf16.mxu0 0
      %652 = vmatmul.mubr.bf16.gmra.mrb[0].mxu0 %v435
      %v653 = vpop.f32.mrb[0].mxu0
      %v654 = vadd.f32 %v551, %v653
      %v655 = vpop.f32.mrb[0].mxu0
      %v656 = vpop.f32.mrb[0].mxu0
      %v657 = vadd.f32 %v551, %v656
      %v658 = vpop.f32.mrb[0].mxu0
      %659 = vmatprep.mubr.bf16.mxu0 0
      %660 = vmatmul.mubr.bf16.gmra.mrb[0].mxu0 %v438
      %v661 = vpop.f32.mrb[0].mxu0
      %v662 = vadd.f32 %v551, %v661
      %v663 = vpop.f32.mrb[0].mxu0
      %v664 = vpop.f32.mrb[0].mxu0
      %v665 = vadd.f32 %v551, %v664
      %v666 = vpop.f32.mrb[0].mxu0
      %667 = vdwg.mxu0
      %v668 = vld [vmem:[%s323] sm:$0xff]
      %v669 = vld [vmem:[%s323 + $0x8] sm:$0xff]
      %v670 = vld [vmem:[%s323 + $0x10] sm:$0xff]
      %v671 = vld [vmem:[%s323 + $0x18] sm:$0xff]
      %v672 = vld [vmem:[%s323 + $0x20] sm:$0xff]
      %v673 = vld [vmem:[%s323 + $0x28] sm:$0xff]
      %v674 = vld [vmem:[%s323 + $0x30] sm:$0xff]
      %v675 = vld [vmem:[%s323 + $0x38] sm:$0xff]
      %v676 = vld [vmem:[%s323 + $0x40] sm:$0xff]
      %v677 = vld [vmem:[%s323 + $0x48] sm:$0xff]
      %v678 = vld [vmem:[%s323 + $0x50] sm:$0xff]
      %v679 = vld [vmem:[%s323 + $0x58] sm:$0xff]
      %v680 = vld [vmem:[%s323 + $0x60] sm:$0xff]
      %v681 = vld [vmem:[%s323 + $0x68] sm:$0xff]
      %v682 = vld [vmem:[%s323 + $0x70] sm:$0xff]
      %v683 = vld [vmem:[%s323 + $0x78] sm:$0xff]
      %v684 = vld [vmem:[%s6] sm:$0x1]
      %v686 = vlaneseq
      %v687 = vshrl.u32 %v686, 7
      %v688 = vsub.s32 0, %v687
      %v689 = vrot.slane %v684, %v688
      %v691 = vsub.f32 %v668, %v689
      %v692 = vsub.f32 %v669, %v689
      %v693 = vsub.f32 %v670, %v689
      %v694 = vsub.f32 %v671, %v689
      %v695 = vsub.f32 %v672, %v689
      %v696 = vsub.f32 %v673, %v689
      %v697 = vsub.f32 %v674, %v689
      %v698 = vsub.f32 %v675, %v689
      %v699 = vsub.f32 %v676, %v689
      %v700 = vsub.f32 %v677, %v689
      %v701 = vsub.f32 %v678, %v689
      %v702 = vsub.f32 %v679, %v689
      %v703 = vsub.f32 %v680, %v689
      %v704 = vsub.f32 %v681, %v689
      %v705 = vsub.f32 %v682, %v689
      %v706 = vsub.f32 %v683, %v689
      %v707 = vld [vmem:[%s7] sm:$0x1]
      %v709 = vlaneseq
      %v710 = vshrl.u32 %v709, 7
      %v711 = vsub.s32 0, %v710
      %v712 = vrot.slane %v707, %v711
      %v714 = vmul.f32 %v691, %v712
      %v715 = vmul.f32 %v692, %v712
      %v716 = vmul.f32 %v693, %v712
      %v717 = vmul.f32 %v694, %v712
      %v718 = vmul.f32 %v695, %v712
      %v719 = vmul.f32 %v696, %v712
      %v720 = vmul.f32 %v697, %v712
      %v721 = vmul.f32 %v698, %v712
      %v722 = vmul.f32 %v699, %v712
      %v723 = vmul.f32 %v700, %v712
      %v724 = vmul.f32 %v701, %v712
      %v725 = vmul.f32 %v702, %v712
      %v726 = vmul.f32 %v703, %v712
      %v727 = vmul.f32 %v704, %v712
      %v728 = vmul.f32 %v705, %v712
      %v729 = vmul.f32 %v706, %v712
      %v730 = vmul.f32 %v479, %v714
      %v731 = vmul.f32 %v482, %v715
      %v732 = vmul.f32 %v487, %v716
      %v733 = vmul.f32 %v490, %v717
      %v734 = vmul.f32 %v495, %v718
      %v735 = vmul.f32 %v498, %v719
      %v736 = vmul.f32 %v503, %v720
      %v737 = vmul.f32 %v506, %v721
      %v738 = vmul.f32 %v511, %v722
      %v739 = vmul.f32 %v514, %v723
      %v740 = vmul.f32 %v519, %v724
      %v741 = vmul.f32 %v522, %v725
      %v742 = vmul.f32 %v527, %v726
      %v743 = vmul.f32 %v530, %v727
      %v744 = vmul.f32 %v535, %v728
      %v745 = vmul.f32 %v538, %v729
      %v746 = vadd.f32 %v730, %v606
      %v747 = vadd.f32 %v731, %v609
      %v748 = vadd.f32 %v732, %v614
      %v749 = vadd.f32 %v733, %v617
      %v750 = vadd.f32 %v734, %v622
      %v751 = vadd.f32 %v735, %v625
      %v752 = vadd.f32 %v736, %v630
      %v753 = vadd.f32 %v737, %v633
      %v754 = vadd.f32 %v738, %v638
      %v755 = vadd.f32 %v739, %v641
      %v756 = vadd.f32 %v740, %v646
      %v757 = vadd.f32 %v741, %v649
      %v758 = vadd.f32 %v742, %v654
      %v759 = vadd.f32 %v743, %v657
      %v760 = vadd.f32 %v744, %v662
      %v761 = vadd.f32 %v745, %v665
      %v762 = vmax.f32 %v746, 0.0
      %v763 = vmax.f32 %v747, 0.0
      %v764 = vmax.f32 %v748, 0.0
      %v765 = vmax.f32 %v749, 0.0
      %v766 = vmax.f32 %v750, 0.0
      %v767 = vmax.f32 %v751, 0.0
      %v768 = vmax.f32 %v752, 0.0
      %v769 = vmax.f32 %v753, 0.0
      %v770 = vmax.f32 %v754, 0.0
      %v771 = vmax.f32 %v755, 0.0
      %v772 = vmax.f32 %v756, 0.0
      %v773 = vmax.f32 %v757, 0.0
      %v774 = vmax.f32 %v758, 0.0
      %v775 = vmax.f32 %v759, 0.0
      %v776 = vmax.f32 %v760, 0.0
      %v777 = vmax.f32 %v761, 0.0
      %v778 = vpack.c.bf16 %v763, %v762
      %v779 = vpack.c.bf16 %v765, %v764
      %v780 = vpack.c.bf16 %v767, %v766
      %v781 = vpack.c.bf16 %v769, %v768
      %v782 = vpack.c.bf16 %v771, %v770
      %v783 = vpack.c.bf16 %v773, %v772
      %v784 = vpack.c.bf16 %v775, %v774
      %v785 = vpack.c.bf16 %v777, %v776
      %v794 = vunpack.c.l.b16 %v778
      %v795 = vunpack.c.h.b16 %v778
      %v796 = vunpack.c.l.b16 %v779
      %v797 = vunpack.c.h.b16 %v779
      %v798 = vunpack.c.l.b16 %v780
      %v799 = vunpack.c.h.b16 %v780
      %v800 = vunpack.c.l.b16 %v781
      %v801 = vunpack.c.h.b16 %v781
      %v802 = vunpack.c.l.b16 %v782
      %v803 = vunpack.c.h.b16 %v782
      %v804 = vunpack.c.l.b16 %v783
      %v805 = vunpack.c.h.b16 %v783
      %v806 = vunpack.c.l.b16 %v784
      %v807 = vunpack.c.h.b16 %v784
      %v808 = vunpack.c.l.b16 %v785
      %v809 = vunpack.c.h.b16 %v785
      %v810 = vpack.c.b16 %v794, %v794
      %v811 = vpack.c.b16 %v795, %v795
      %v812 = vpack.c.b16 %v796, %v796
      %v813 = vpack.c.b16 %v797, %v797
      %v814 = vpack.c.b16 %v798, %v798
      %v815 = vpack.c.b16 %v799, %v799
      %v816 = vpack.c.b16 %v800, %v800
      %v817 = vpack.c.b16 %v801, %v801
      %v818 = vpack.c.b16 %v802, %v802
      %v819 = vpack.c.b16 %v803, %v803
      %v820 = vpack.c.b16 %v804, %v804
      %v821 = vpack.c.b16 %v805, %v805
      %v822 = vpack.c.b16 %v806, %v806
      %v823 = vpack.c.b16 %v807, %v807
      %v824 = vpack.c.b16 %v808, %v808
      %v825 = vpack.c.b16 %v809, %v809
      %vm842 = vcmask 27648
      %843 = vst.msk [vmem:[%s329] sm:$0xf] %vm842, %v810
      %844 = vst.msk [vmem:[%s329 + $0x4] sm:$0xf] %vm842, %v811
      %845 = vst.msk [vmem:[%s329 + $0x8] sm:$0xf] %vm842, %v812
      %846 = vst.msk [vmem:[%s329 + $0xc] sm:$0xf] %vm842, %v813
      %847 = vst.msk [vmem:[%s329 + $0x10] sm:$0xf] %vm842, %v814
      %848 = vst.msk [vmem:[%s329 + $0x14] sm:$0xf] %vm842, %v815
      %849 = vst.msk [vmem:[%s329 + $0x18] sm:$0xf] %vm842, %v816
      %850 = vst.msk [vmem:[%s329 + $0x1c] sm:$0xf] %vm842, %v817
      %851 = vst.msk [vmem:[%s329 + $0x20] sm:$0xf] %vm842, %v818
      %852 = vst.msk [vmem:[%s329 + $0x24] sm:$0xf] %vm842, %v819
      %853 = vst.msk [vmem:[%s329 + $0x28] sm:$0xf] %vm842, %v820
      %854 = vst.msk [vmem:[%s329 + $0x2c] sm:$0xf] %vm842, %v821
      %855 = vst.msk [vmem:[%s329 + $0x30] sm:$0xf] %vm842, %v822
      %856 = vst.msk [vmem:[%s329 + $0x34] sm:$0xf] %vm842, %v823
      %857 = vst.msk [vmem:[%s329 + $0x38] sm:$0xf] %vm842, %v824
      %858 = vst.msk [vmem:[%s329 + $0x3c] sm:$0xf] %vm842, %v825
      %s859 = smul.u32 16, %s19
      %p860 = scmp.lt.s32.totalorder %s859, 63
      %s861 = scalar_select %p860, %s859, 63
      %s862 = smul.addr %s861, 4
      %s863 = scalar_lea.vmem %s8, %s862
      // Predicated region
      $region53: #{adain_resblock_forward.9} parent=51 // pred_check
        %p864 = pneg %p215
      $region54: #{adain_resblock_forward.9} parent=51 // pred_check_branch
        %866 = sbr.rel (%p864) target = $region56
      $region55: #{adain_resblock_forward.9} parent=51 // pred_region
        %s867 = smul.u32 16, %s19
      $region56: #{adain_resblock_forward.9} parent=51 // pred_fallthru
        _
    $region52: #{adain_resblock_forward.9} parent=5 // pred_fallthru
      _
    %p868 = scmp.le.s32.totalorder 2, %s14
    // Predicated region
    $region57: #{adain_resblock_forward.9} parent=5 // pred_check
      %p869 = pneg %p868
    $region58: #{adain_resblock_forward.9} parent=5 // pred_check_branch
      %871 = sbr.rel (%p869) target = $region60
    $region59: #{adain_resblock_forward.9} parent=5 // pred_region
      %s872 = ssub.s32 %s14, 2
      // Predicated region
      $region61: #{adain_resblock_forward.9} parent=59 // pred_check
        %p873 = pneg %p221
      $region62: #{adain_resblock_forward.9} parent=59 // pred_check_branch
        %875 = sbr.rel (%p873) target = $region64
      $region63: #{adain_resblock_forward.9} parent=59 // pred_region
        %s876 = smul.u32 16, %s20
        %p877 = scmp.lt.s32.totalorder %s876, 63
        %s878 = scalar_select %p877, %s876, 63
        %s879 = smul.addr %s878, 4
        %s880 = scalar_lea.vmem %s8, %s879
      $region64: #{adain_resblock_forward.9} parent=59 // pred_fallthru
        _
    $region60: #{adain_resblock_forward.9} parent=5 // pred_fallthru
      _
  $region6: #{adain_resblock_forward.9} parent=0 // loop_footer
    %s18 = sadd.s32 1, %s14
  $region7: #{adain_resblock_forward.9} parent=0 // loop_footer_branch
    %13 = sbr.rel target = $region3
  $region8: #{adain_resblock_forward.9} parent=0 // loop_exit
    _

// kernel: adain_resblock_forward.10
$region0: #{adain_resblock_forward.10}
  #allocation0 [shape = 'u32[]', space=smem, size = 0x4, offset = 0x4, fixed_abs, tag = 'smem constant byte address 0x4 - core index']
  #allocation1 [shape = 'u32[144,128]{1,0:T(1,128)}', space=vmem, size = 0x12000, scoped, tag = 'internal scratch']
  #allocation2 [shape = 'f32[128,4]{1,0:T(8,128)}', space=vmem, size = 0x10000, scoped, tag = 'scratch operand']
  %s0 = inlined_call_operand.vmem [shape: bf16[512,36], index: 0, kind: input, shape index: {}]
  %s1 = inlined_call_operand.vmem [shape: bf16[36,4], index: 1, kind: input, shape index: {}]
  %s2 = inlined_call_operand.vmem [shape: f32[1,4], index: 2, kind: input, shape index: {}]
  %s3 = inlined_call_operand.vmem [shape: f32[512,4], index: 3, kind: output, shape index: {}]
  %s4 = sld [smem:[#allocation0]]
  $region53: #{adain_resblock_forward.10} parent=0
    _
  %s6 = ssub.s32 1, %s4
  %s7 = scalar_select 0, %s6, %s4
  loop: start=0, step=1, limit=6
  $region2: #{adain_resblock_forward.10} parent=0 // loop_pre_header
    _
  $region3: #{adain_resblock_forward.10} parent=0 // loop_header
    %s9 = sphi 0, %s13
    %p10 = scmp.ge.s32.totalorder %s9, 6
    %s16 = sphi 0, %s28
    %s17 = sphi 0, %s24
    %s18 = sphi 0, %s16
    %s19 = sphi 0, %s17
    %s20 = sphi 0, %s18
    %s21 = sphi 0, %s19
    %s33 = sphi 0, %s35
    %s36 = sphi 0, %s33
    %s37 = sphi 0, %s36
    %s53 = sphi 0, %s37
    %s59 = sphi 0, %s61
    %s62 = sphi 0, %s59
    %s63 = sphi 0, %s62
    %s79 = sphi 0, %s63
    %s83 = sphi 0, %s83
    %s85 = sphi 0, %s83
    %s86 = sphi 0, %s85
    %s100 = sphi 0, %s86
    %s106 = sphi 0, %s108
    %s109 = sphi 0, %s106
    %s110 = sphi 0, %s109
    %s126 = sphi 0, %s110
  $region4: #{adain_resblock_forward.10} parent=0 // loop_header_branch
    %12 = sbr.rel (%p10) target = $region8
  $region5: #{adain_resblock_forward.10} parent=0 // loop_body
    %s14 = ssub.s32 %s9, 1
    %s15 = ssub.s32 %s9, 2
    %s22 = sadd.s32 1, %s17
    %p23 = scmp.ge.s32.totalorder %s22, 1
    %s24 = scalar_select %p23, 0, %s22
    %s25 = sadd.s32 1, %s16
    %s26 = scalar_select %p23, %s25, %s16
    %p27 = scmp.ge.s32.totalorder %s26, 4
    %s28 = scalar_select %p27, 0, %s26
    %s29 = ssub.s32 %s16, %s28
    %s30 = ssub.s32 %s17, %s24
    %s31 = sor.u32 %s29, %s30
    %p32 = scmp.eq.s32.totalorder %s31, 0
    %s34 = sadd.s32 %s33, 1
    %s35 = scalar_select %p32, %s33, %s34
    %p38 = pneg %p32
    %p39 = scmp.eq.s32.totalorder %s9, 3
    %p40 = por %p38, %p39
    %p41 = scmp.ne.s32.totalorder %s33, %s36
    %p42 = scmp.eq.s32.totalorder %s9, 0
    %p43 = por %p41, %p42
    %p44 = scmp.ne.s32.totalorder %s33, %s36
    %p45 = scmp.eq.s32.totalorder %s14, 3
    %p46 = por %p44, %p45
    %p47 = scmp.ne.s32.totalorder %s36, %s37
    %p48 = scmp.eq.s32.totalorder %s14, 0
    %p49 = por %p47, %p48
    %p50 = scmp.ne.s32.totalorder %s36, %s37
    %p51 = scmp.eq.s32.totalorder %s15, 3
    %p52 = por %p50, %p51
    %p54 = scmp.ne.s32.totalorder %s37, %s53
    %p55 = scmp.eq.s32.totalorder %s15, 0
    %p56 = por %p54, %p55
    %s57 = ssub.s32 %s17, %s24
    %p58 = scmp.eq.s32.totalorder %s57, 0
    %s60 = sadd.s32 %s59, 1
    %s61 = scalar_select %p58, %s59, %s60
    %p64 = pneg %p58
    %p65 = scmp.eq.s32.totalorder %s9, 3
    %p66 = por %p64, %p65
    %p67 = scmp.ne.s32.totalorder %s59, %s62
    %p68 = scmp.eq.s32.totalorder %s9, 0
    %p69 = por %p67, %p68
    %p70 = scmp.ne.s32.totalorder %s59, %s62
    %p71 = scmp.eq.s32.totalorder %s14, 3
    %p72 = por %p70, %p71
    %p73 = scmp.ne.s32.totalorder %s62, %s63
    %p74 = scmp.eq.s32.totalorder %s14, 0
    %p75 = por %p73, %p74
    %p76 = scmp.ne.s32.totalorder %s62, %s63
    %p77 = scmp.eq.s32.totalorder %s15, 3
    %p78 = por %p76, %p77
    %p80 = scmp.ne.s32.totalorder %s63, %s79
    %p81 = scmp.eq.s32.totalorder %s15, 0
    %p82 = por %p80, %p81
    %s84 = sadd.s32 %s83, 1
    %p87 = scmp.eq.s32.totalorder %s9, 3
    %p88 = scmp.ne.s32.totalorder %s83, %s85
    %p89 = scmp.eq.s32.totalorder %s9, 0
    %p90 = por %p88, %p89
    %p91 = scmp.ne.s32.totalorder %s83, %s85
    %p92 = scmp.eq.s32.totalorder %s14, 3
    %p93 = por %p91, %p92
    %p94 = scmp.ne.s32.totalorder %s85, %s86
    %p95 = scmp.eq.s32.totalorder %s14, 0
    %p96 = por %p94, %p95
    %p97 = scmp.ne.s32.totalorder %s85, %s86
    %p98 = scmp.eq.s32.totalorder %s15, 3
    %p99 = por %p97, %p98
    %p101 = scmp.ne.s32.totalorder %s86, %s100
    %p102 = scmp.eq.s32.totalorder %s15, 0
    %p103 = por %p101, %p102
    %s104 = ssub.s32 %s16, %s28
    %p105 = scmp.eq.s32.totalorder %s104, 0
    %s107 = sadd.s32 %s106, 1
    %s108 = scalar_select %p105, %s106, %s107
    %p111 = pneg %p105
    %p112 = scmp.eq.s32.totalorder %s9, 3
    %p113 = por %p111, %p112
    %p114 = scmp.ne.s32.totalorder %s106, %s109
    %p115 = scmp.eq.s32.totalorder %s9, 0
    %p116 = por %p114, %p115
    %p117 = scmp.ne.s32.totalorder %s106, %s109
    %p118 = scmp.eq.s32.totalorder %s14, 3
    %p119 = por %p117, %p118
    %p120 = scmp.ne.s32.totalorder %s109, %s110
    %p121 = scmp.eq.s32.totalorder %s14, 0
    %p122 = por %p120, %p121
    %p123 = scmp.ne.s32.totalorder %s109, %s110
    %p124 = scmp.eq.s32.totalorder %s15, 3
    %p125 = por %p123, %p124
    %p127 = scmp.ne.s32.totalorder %s110, %s126
    %p128 = scmp.eq.s32.totalorder %s15, 0
    %p129 = por %p127, %p128
    %p130 = scmp.le.s32.totalorder 1, %s9
    %p131 = scmp.lt.s32.totalorder %s9, 5
    %p132 = pnand %p130, %p131
    %p133 = pneg %p132
    // Predicated region
    $region9: #{adain_resblock_forward.10} parent=5 // pred_check
      _
    $region10: #{adain_resblock_forward.10} parent=5 // pred_check_branch
      %135 = sbr.rel (%p132) target = $region12
    $region11: #{adain_resblock_forward.10} parent=5 // pred_region
      %s136 = ssub.s32 %s9, 1
      // Predicated region
      $region13: #{adain_resblock_forward.10} parent=11 // pred_check
        %p137 = pneg %p75
      $region14: #{adain_resblock_forward.10} parent=11 // pred_check_branch
        %139 = sbr.rel (%p137) target = $region16
      $region15: #{adain_resblock_forward.10} parent=11 // pred_region
        %s140 = smul.u32 5, %s19
        %p141 = scmp.lt.s32.totalorder %s140, 4
        %s142 = scalar_select %p141, %s140, 4
        %s143 = smul.addr %s142, 4
        %s144 = scalar_lea.vmem %s1, %s143
        %s145 = smul.u32 5, %s19
      $region16: #{adain_resblock_forward.10} parent=11 // pred_fallthru
        _
      // Predicated region
      $region17: #{adain_resblock_forward.10} parent=11 // pred_check
        %p146 = pneg %p96
      $region18: #{adain_resblock_forward.10} parent=11 // pred_check_branch
        %148 = sbr.rel (%p146) target = $region20
      $region19: #{adain_resblock_forward.10} parent=11 // pred_region
        _
      $region20: #{adain_resblock_forward.10} parent=11 // pred_fallthru
        _
    $region12: #{adain_resblock_forward.10} parent=5 // pred_fallthru
      _
    %p149 = scmp.lt.s32.totalorder %s9, 4
    // Predicated region
    $region21: #{adain_resblock_forward.10} parent=5 // pred_check
      %p150 = pneg %p149
    $region22: #{adain_resblock_forward.10} parent=5 // pred_check_branch
      %152 = sbr.rel (%p150) target = $region24
    $region23: #{adain_resblock_forward.10} parent=5 // pred_region
      // Predicated region
      $region25: #{adain_resblock_forward.10} parent=23 // pred_check
        %p153 = pneg %p43
      $region26: #{adain_resblock_forward.10} parent=23 // pred_check_branch
        %155 = sbr.rel (%p153) target = $region28
      $region27: #{adain_resblock_forward.10} parent=23 // pred_region
        %s156 = smul.u32 16, %s16
        %p157 = scmp.lt.s32.totalorder %s156, 63
        %s158 = scalar_select %p157, %s156, 63
        %p159 = scmp.lt.s32.totalorder %s17, 0
        %s160 = scalar_select %p159, %s17, 0
        %s161 = sadd.s32 %s160, %s158
        %s162 = smul.addr %s161, 4
        %s163 = scalar_lea.vmem %s0, %s162
        %s164 = smul.u32 16, %s16
      $region28: #{adain_resblock_forward.10} parent=23 // pred_fallthru
        _
    $region24: #{adain_resblock_forward.10} parent=5 // pred_fallthru
      _
    %p165 = scmp.le.s32.totalorder 1, %s9
    %p166 = scmp.lt.s32.totalorder %s9, 5
    %p167 = pnand %p165, %p166
    %p168 = pneg %p167
    // Predicated region
    $region29: #{adain_resblock_forward.10} parent=5 // pred_check
      _
    $region30: #{adain_resblock_forward.10} parent=5 // pred_check_branch
      %170 = sbr.rel (%p167) target = $region32
    $region31: #{adain_resblock_forward.10} parent=5 // pred_region
      %s171 = ssub.s32 %s9, 1
      %s172 = smul.u32 16, %s18
      %p173 = scmp.lt.s32.totalorder %s172, 63
      %s174 = scalar_select %p173, %s172, 63
      %p175 = scmp.lt.s32.totalorder %s19, 0
      %s176 = scalar_select %p175, %s19, 0
      %s177 = sadd.s32 %s176, %s174
      %s178 = smul.addr %s177, 4
      %s179 = scalar_lea.vmem %s0, %s178
      %p180 = pneg %p49
      %p181 = pneg %p46
      %s182 = smul.u32 5, %s19
      %p183 = scmp.lt.s32.totalorder %s182, 4
      %s184 = scalar_select %p183, %s182, 4
      %s185 = smul.addr %s184, 4
      %s186 = scalar_lea.vmem %s1, %s185
      %p187 = pneg %p75
      %p188 = pneg %p72
      %p189 = pneg %p96
      %p190 = pneg %p93
      %p191 = pneg %p122
      %p192 = pneg %p119
      %s193 = smul.u32 16, %s18
      %p194 = scmp.lt.s32.totalorder %s193, 63
      %s195 = scalar_select %p194, %s193, 63
      %s196 = smul.addr %s195, 8
      %s197 = scalar_lea.vmem %s3, %s196
      %s198 = smul.u32 16, %s18
      %p199 = scmp.lt.s32.totalorder %s198, 63
      %s200 = scalar_select %p199, %s198, 63
      %p201 = scmp.lt.s32.totalorder %s19, 0
      %s202 = scalar_select %p201, %s19, 0
      %s203 = sadd.s32 %s202, %s200
      %s204 = smul.addr %s203, 4
      %s205 = scalar_lea.vmem %s0, %s204
      %s206 = smul.u32 16, %s18
      %s207 = smul.u32 5, %s19
      %p208 = scmp.lt.s32.totalorder %s207, 4
      %s209 = scalar_select %p208, %s207, 4
      %s210 = smul.addr %s209, 4
      %s211 = scalar_lea.vmem %s1, %s210
      %s212 = smul.u32 5, %s19
      %s213 = smul.u32 16, %s18
      %p214 = scmp.lt.s32.totalorder %s213, 63
      %s215 = scalar_select %p214, %s213, 63
      %s216 = smul.addr %s215, 8
      %s217 = scalar_lea.vmem %s3, %s216
      %s218 = smul.u32 16, %s18
      %p220 = scmp.eq.s32.totalorder %s19, 0
      // Predicated region
      $region33: #{adain_resblock_forward.10} parent=31 // pred_check
        %p221 = pneg %p220
      $region34: #{adain_resblock_forward.10} parent=31 // pred_check_branch
        %223 = sbr.rel (%p221) target = $region36
      $region35: #{adain_resblock_forward.10} parent=31 // pred_region
        %vm224 = vcmask 31744
        %225 = vst.msk [vmem:[#allocation2] sm:$0xff] %vm224, 0.0
        %226 = vst.msk [vmem:[#allocation2 + $0x8] sm:$0xff] %vm224, 0.0
        %227 = vst.msk [vmem:[#allocation2 + $0x10] sm:$0xff] %vm224, 0.0
        %228 = vst.msk [vmem:[#allocation2 + $0x18] sm:$0xff] %vm224, 0.0
        %229 = vst.msk [vmem:[#allocation2 + $0x20] sm:$0xff] %vm224, 0.0
        %230 = vst.msk [vmem:[#allocation2 + $0x28] sm:$0xff] %vm224, 0.0
        %231 = vst.msk [vmem:[#allocation2 + $0x30] sm:$0xff] %vm224, 0.0
        %232 = vst.msk [vmem:[#allocation2 + $0x38] sm:$0xff] %vm224, 0.0
        %233 = vst.msk [vmem:[#allocation2 + $0x40] sm:$0xff] %vm224, 0.0
        %234 = vst.msk [vmem:[#allocation2 + $0x48] sm:$0xff] %vm224, 0.0
        %235 = vst.msk [vmem:[#allocation2 + $0x50] sm:$0xff] %vm224, 0.0
        %236 = vst.msk [vmem:[#allocation2 + $0x58] sm:$0xff] %vm224, 0.0
        %237 = vst.msk [vmem:[#allocation2 + $0x60] sm:$0xff] %vm224, 0.0
        %238 = vst.msk [vmem:[#allocation2 + $0x68] sm:$0xff] %vm224, 0.0
        %239 = vst.msk [vmem:[#allocation2 + $0x70] sm:$0xff] %vm224, 0.0
        %240 = vst.msk [vmem:[#allocation2 + $0x78] sm:$0xff] %vm224, 0.0
      $region36: #{adain_resblock_forward.10} parent=31 // pred_fallthru
        _
      %v241 = vld [vmem:[#allocation2] sm:$0xff]
      %v242 = vld [vmem:[#allocation2 + $0x8] sm:$0xff]
      %v243 = vld [vmem:[#allocation2 + $0x10] sm:$0xff]
      %v244 = vld [vmem:[#allocation2 + $0x18] sm:$0xff]
      %v245 = vld [vmem:[#allocation2 + $0x20] sm:$0xff]
      %v246 = vld [vmem:[#allocation2 + $0x28] sm:$0xff]
      %v247 = vld [vmem:[#allocation2 + $0x30] sm:$0xff]
      %v248 = vld [vmem:[#allocation2 + $0x38] sm:$0xff]
      %v249 = vld [vmem:[#allocation2 + $0x40] sm:$0xff]
      %v250 = vld [vmem:[#allocation2 + $0x48] sm:$0xff]
      %v251 = vld [vmem:[#allocation2 + $0x50] sm:$0xff]
      %v252 = vld [vmem:[#allocation2 + $0x58] sm:$0xff]
      %v253 = vld [vmem:[#allocation2 + $0x60] sm:$0xff]
      %v254 = vld [vmem:[#allocation2 + $0x68] sm:$0xff]
      %v255 = vld [vmem:[#allocation2 + $0x70] sm:$0xff]
      %v256 = vld [vmem:[#allocation2 + $0x78] sm:$0xff]
      %v257 = vld [vmem:[%s205] sm:$0xf]
      %v258 = vld [vmem:[%s205 + $0x4] sm:$0xf]
      %v259 = vld [vmem:[%s205 + $0x8] sm:$0xf]
      %v260 = vld [vmem:[%s205 + $0xc] sm:$0xf]
      %v261 = vld [vmem:[%s205 + $0x10] sm:$0xf]
      %v262 = vld [vmem:[%s205 + $0x14] sm:$0xf]
      %v263 = vld [vmem:[%s205 + $0x18] sm:$0xf]
      %v264 = vld [vmem:[%s205 + $0x1c] sm:$0xf]
      %v265 = vld [vmem:[%s205 + $0x20] sm:$0xf]
      %v266 = vld [vmem:[%s205 + $0x24] sm:$0xf]
      %v267 = vld [vmem:[%s205 + $0x28] sm:$0xf]
      %v268 = vld [vmem:[%s205 + $0x2c] sm:$0xf]
      %v269 = vld [vmem:[%s205 + $0x30] sm:$0xf]
      %v270 = vld [vmem:[%s205 + $0x34] sm:$0xf]
      %v271 = vld [vmem:[%s205 + $0x38] sm:$0xf]
      %v272 = vld [vmem:[%s205 + $0x3c] sm:$0xf]
      %v273 = vld [vmem:[%s211] sm:$0xf]
      %v274 = vld [vmem:[%s211 + $0x4] sm:$0xf]
      %v275 = vld [vmem:[%s211 + $0x8] sm:$0xf]
      %v276 = vld [vmem:[%s211 + $0xc] sm:$0xf]
      %v277 = vld [vmem:[%s211 + $0x10] sm:$0x3]
      %v294 = vunpack.c.l.b16 %v257
      %v295 = vunpack.c.l.b16 %v258
      %v296 = vunpack.c.l.b16 %v259
      %v297 = vunpack.c.l.b16 %v260
      %v298 = vunpack.c.l.b16 %v261
      %v299 = vunpack.c.l.b16 %v262
      %v300 = vunpack.c.l.b16 %v263
      %v301 = vunpack.c.l.b16 %v264
      %v302 = vunpack.c.l.b16 %v265
      %v303 = vunpack.c.l.b16 %v266
      %v304 = vunpack.c.l.b16 %v267
      %v305 = vunpack.c.l.b16 %v268
      %v306 = vunpack.c.l.b16 %v269
      %v307 = vunpack.c.l.b16 %v270
      %v308 = vunpack.c.l.b16 %v271
      %v309 = vunpack.c.l.b16 %v272
      %v310 = vpack.c.b16 %v295, %v294
      %v311 = vpack.c.b16 %v297, %v296
      %v312 = vpack.c.b16 %v299, %v298
      %v313 = vpack.c.b16 %v301, %v300
      %v314 = vpack.c.b16 %v303, %v302
      %v315 = vpack.c.b16 %v305, %v304
      %v316 = vpack.c.b16 %v307, %v306
      %v317 = vpack.c.b16 %v309, %v308
      %v323 = vunpack.c.l.b16 %v273
      %v324 = vunpack.c.l.b16 %v274
      %v325 = vunpack.c.l.b16 %v275
      %v326 = vunpack.c.l.b16 %v276
      %v327 = vunpack.c.l.b16 %v277
      %v328 = vpack.c.b16 %v324, %v323
      %v329 = vpack.c.b16 %v326, %v325
      %v330 = vpack.c.b16 %v327, %v327
      %vm333 = vcmask 293888
      %v335 = vsel %vm333, %v310, 0
      %v338 = vsel %vm333, %v311, 0
      %v341 = vsel %vm333, %v312, 0
      %v344 = vsel %vm333, %v313, 0
      %v347 = vsel %vm333, %v314, 0
      %v350 = vsel %vm333, %v315, 0
      %v353 = vsel %vm333, %v316, 0
      %v356 = vsel %vm333, %v317, 0
      %vm358 = vcmask 1041408
      %v360 = vsel %vm358, %v330, 0
      %362 = vmatprep.subr.bf16.mxu0 0
      %363 = vmatpush1.bf16.msra.mxu0 %v328
      %364 = vmatprep.subr.bf16.mxu0 0
      %365 = vmatpush1.bf16.msra.mxu0 %v329
      %366 = vmatprep.subr.bf16.mxu0 0
      %367 = vmatpush1.bf16.msra.mxu0 %v360
      %368 = vmatprep.subr.bf16.mxu0 0
      %369 = vmatpush1.bf16.msra.mxu0 0
      %370 = vmatprep.subr.bf16.mxu0 0
      %371 = vmatpush1.bf16.msra.mxu0 0
      %372 = vmatprep.subr.bf16.mxu0 0
      %373 = vmatpush1.bf16.msra.mxu0 0
      %374 = vmatprep.subr.bf16.mxu0 0
      %375 = vmatpush1.bf16.msra.mxu0 0
      %376 = vmatprep.subr.bf16.mxu0 0
      %377 = vmatpush1.bf16.msra.mxu0 0
      %378 = vmatprep.subr.bf16.mxu0 0
      %379 = vmatpush1.bf16.msra.mxu0 0
      %380 = vmatprep.subr.bf16.mxu0 0
      %381 = vmatpush1.bf16.msra.mxu0 0
      %382 = vmatprep.subr.bf16.mxu0 0
      %383 = vmatpush1.bf16.msra.mxu0 0
      %384 = vmatprep.subr.bf16.mxu0 0
      %385 = vmatpush1.bf16.msra.mxu0 0
      %386 = vmatprep.subr.bf16.mxu0 0
      %387 = vmatpush1.bf16.msra.mxu0 0
      %388 = vmatprep.subr.bf16.mxu0 0
      %389 = vmatpush1.bf16.msra.mxu0 0
      %390 = vmatprep.subr.bf16.mxu0 0
      %391 = vmatpush1.bf16.msra.mxu0 0
      %392 = vmatprep.subr.bf16.mxu0 0
      %393 = vmatpush1.bf16.msra.mxu0 0
      %394 = vmatprep.mubr.bf16.mxu0 0
      %395 = vmatmul.mubr.bf16.gmra.mrb[0].mxu0 %v335
      %v396 = vpop.f32.mrb[0].mxu0
      %v397 = vadd.f32 0.0, %v396
      %v398 = vpop.f32.mrb[0].mxu0
      %v399 = vpop.f32.mrb[0].mxu0
      %v400 = vadd.f32 0.0, %v399
      %v401 = vpop.f32.mrb[0].mxu0
      %402 = vmatprep.mubr.bf16.mxu0 0
      %403 = vmatmul.mubr.bf16.gmra.mrb[0].mxu0 %v338
      %v404 = vpop.f32.mrb[0].mxu0
      %v405 = vadd.f32 0.0, %v404
      %v406 = vpop.f32.mrb[0].mxu0
      %v407 = vpop.f32.mrb[0].mxu0
      %v408 = vadd.f32 0.0, %v407
      %v409 = vpop.f32.mrb[0].mxu0
      %410 = vmatprep.mubr.bf16.mxu0 0
      %411 = vmatmul.mubr.bf16.gmra.mrb[0].mxu0 %v341
      %v412 = vpop.f32.mrb[0].mxu0
      %v413 = vadd.f32 0.0, %v412
      %v414 = vpop.f32.mrb[0].mxu0
      %v415 = vpop.f32.mrb[0].mxu0
      %v416 = vadd.f32 0.0, %v415
      %v417 = vpop.f32.mrb[0].mxu0
      %418 = vmatprep.mubr.bf16.mxu0 0
      %419 = vmatmul.mubr.bf16.gmra.mrb[0].mxu0 %v344
      %v420 = vpop.f32.mrb[0].mxu0
      %v421 = vadd.f32 0.0, %v420
      %v422 = vpop.f32.mrb[0].mxu0
      %v423 = vpop.f32.mrb[0].mxu0
      %v424 = vadd.f32 0.0, %v423
      %v425 = vpop.f32.mrb[0].mxu0
      %426 = vmatprep.mubr.bf16.mxu0 0
      %427 = vmatmul.mubr.bf16.gmra.mrb[0].mxu0 %v347
      %v428 = vpop.f32.mrb[0].mxu0
      %v429 = vadd.f32 0.0, %v428
      %v430 = vpop.f32.mrb[0].mxu0
      %v431 = vpop.f32.mrb[0].mxu0
      %v432 = vadd.f32 0.0, %v431
      %v433 = vpop.f32.mrb[0].mxu0
      %434 = vmatprep.mubr.bf16.mxu0 0
      %435 = vmatmul.mubr.bf16.gmra.mrb[0].mxu0 %v350
      %v436 = vpop.f32.mrb[0].mxu0
      %v437 = vadd.f32 0.0, %v436
      %v438 = vpop.f32.mrb[0].mxu0
      %v439 = vpop.f32.mrb[0].mxu0
      %v440 = vadd.f32 0.0, %v439
      %v441 = vpop.f32.mrb[0].mxu0
      %442 = vmatprep.mubr.bf16.mxu0 0
      %443 = vmatmul.mubr.bf16.gmra.mrb[0].mxu0 %v353
      %v444 = vpop.f32.mrb[0].mxu0
      %v445 = vadd.f32 0.0, %v444
      %v446 = vpop.f32.mrb[0].mxu0
      %v447 = vpop.f32.mrb[0].mxu0
      %v448 = vadd.f32 0.0, %v447
      %v449 = vpop.f32.mrb[0].mxu0
      %450 = vmatprep.mubr.bf16.mxu0 0
      %451 = vmatmul.mubr.bf16.gmra.mrb[0].mxu0 %v356
      %v452 = vpop.f32.mrb[0].mxu0
      %v453 = vadd.f32 0.0, %v452
      %v454 = vpop.f32.mrb[0].mxu0
      %v455 = vpop.f32.mrb[0].mxu0
      %v456 = vadd.f32 0.0, %v455
      %v457 = vpop.f32.mrb[0].mxu0
      %458 = vdwg.mxu0
      %v459 = vadd.f32 %v241, %v397
      %v460 = vadd.f32 %v242, %v400
      %v461 = vadd.f32 %v243, %v405
      %v462 = vadd.f32 %v244, %v408
      %v463 = vadd.f32 %v245, %v413
      %v464 = vadd.f32 %v246, %v416
      %v465 = vadd.f32 %v247, %v421
      %v466 = vadd.f32 %v248, %v424
      %v467 = vadd.f32 %v249, %v429
      %v468 = vadd.f32 %v250, %v432
      %v469 = vadd.f32 %v251, %v437
      %v470 = vadd.f32 %v252, %v440
      %v471 = vadd.f32 %v253, %v445
      %v472 = vadd.f32 %v254, %v448
      %v473 = vadd.f32 %v255, %v453
      %v474 = vadd.f32 %v256, %v456
      %vm475 = vcmask 31744
      %476 = vst.msk [vmem:[#allocation2] sm:$0xff] %vm475, %v459
      %477 = vst.msk [vmem:[#allocation2 + $0x8] sm:$0xff] %vm475, %v460
      %478 = vst.msk [vmem:[#allocation2 + $0x10] sm:$0xff] %vm475, %v461
      %479 = vst.msk [vmem:[#allocation2 + $0x18] sm:$0xff] %vm475, %v462
      %480 = vst.msk [vmem:[#allocation2 + $0x20] sm:$0xff] %vm475, %v463
      %481 = vst.msk [vmem:[#allocation2 + $0x28] sm:$0xff] %vm475, %v464
      %482 = vst.msk [vmem:[#allocation2 + $0x30] sm:$0xff] %vm475, %v465
      %483 = vst.msk [vmem:[#allocation2 + $0x38] sm:$0xff] %vm475, %v466
      %484 = vst.msk [vmem:[#allocation2 + $0x40] sm:$0xff] %vm475, %v467
      %485 = vst.msk [vmem:[#allocation2 + $0x48] sm:$0xff] %vm475, %v468
      %486 = vst.msk [vmem:[#allocation2 + $0x50] sm:$0xff] %vm475, %v469
      %487 = vst.msk [vmem:[#allocation2 + $0x58] sm:$0xff] %vm475, %v470
      %488 = vst.msk [vmem:[#allocation2 + $0x60] sm:$0xff] %vm475, %v471
      %489 = vst.msk [vmem:[#allocation2 + $0x68] sm:$0xff] %vm475, %v472
      %490 = vst.msk [vmem:[#allocation2 + $0x70] sm:$0xff] %vm475, %v473
      %491 = vst.msk [vmem:[#allocation2 + $0x78] sm:$0xff] %vm475, %v474
      // Predicated region
      $region37: #{adain_resblock_forward.10} parent=31 // pred_check
        %p492 = pneg %p220
      $region38: #{adain_resblock_forward.10} parent=31 // pred_check_branch
        %494 = sbr.rel (%p492) target = $region40
      $region39: #{adain_resblock_forward.10} parent=31 // pred_region
        %v495 = vld [vmem:[#allocation2] sm:$0xff]
        %v496 = vld [vmem:[#allocation2 + $0x8] sm:$0xff]
        %v497 = vld [vmem:[#allocation2 + $0x10] sm:$0xff]
        %v498 = vld [vmem:[#allocation2 + $0x18] sm:$0xff]
        %v499 = vld [vmem:[#allocation2 + $0x20] sm:$0xff]
        %v500 = vld [vmem:[#allocation2 + $0x28] sm:$0xff]
        %v501 = vld [vmem:[#allocation2 + $0x30] sm:$0xff]
        %v502 = vld [vmem:[#allocation2 + $0x38] sm:$0xff]
        %v503 = vld [vmem:[#allocation2 + $0x40] sm:$0xff]
        %v504 = vld [vmem:[#allocation2 + $0x48] sm:$0xff]
        %v505 = vld [vmem:[#allocation2 + $0x50] sm:$0xff]
        %v506 = vld [vmem:[#allocation2 + $0x58] sm:$0xff]
        %v507 = vld [vmem:[#allocation2 + $0x60] sm:$0xff]
        %v508 = vld [vmem:[#allocation2 + $0x68] sm:$0xff]
        %v509 = vld [vmem:[#allocation2 + $0x70] sm:$0xff]
        %v510 = vld [vmem:[#allocation2 + $0x78] sm:$0xff]
        %v511 = vld [vmem:[%s2] sm:$0x1]
        %v513 = vlaneseq
        %v514 = vshrl.u32 %v513, 7
        %v515 = vsub.s32 0, %v514
        %v516 = vrot.slane %v511, %v515
        %v518 = vadd.f32 %v495, %v516
        %v519 = vadd.f32 %v496, %v516
        %v520 = vadd.f32 %v497, %v516
        %v521 = vadd.f32 %v498, %v516
        %v522 = vadd.f32 %v499, %v516
        %v523 = vadd.f32 %v500, %v516
        %v524 = vadd.f32 %v501, %v516
        %v525 = vadd.f32 %v502, %v516
        %v526 = vadd.f32 %v503, %v516
        %v527 = vadd.f32 %v504, %v516
        %v528 = vadd.f32 %v505, %v516
        %v529 = vadd.f32 %v506, %v516
        %v530 = vadd.f32 %v507, %v516
        %v531 = vadd.f32 %v508, %v516
        %v532 = vadd.f32 %v509, %v516
        %v533 = vadd.f32 %v510, %v516
        %534 = vst.msk [vmem:[%s217] sm:$0xff] %vm475, %v518
        %535 = vst.msk [vmem:[%s217 + $0x8] sm:$0xff] %vm475, %v519
        %536 = vst.msk [vmem:[%s217 + $0x10] sm:$0xff] %vm475, %v520
        %537 = vst.msk [vmem:[%s217 + $0x18] sm:$0xff] %vm475, %v521
        %538 = vst.msk [vmem:[%s217 + $0x20] sm:$0xff] %vm475, %v522
        %539 = vst.msk [vmem:[%s217 + $0x28] sm:$0xff] %vm475, %v523
        %540 = vst.msk [vmem:[%s217 + $0x30] sm:$0xff] %vm475, %v524
        %541 = vst.msk [vmem:[%s217 + $0x38] sm:$0xff] %vm475, %v525
        %542 = vst.msk [vmem:[%s217 + $0x40] sm:$0xff] %vm475, %v526
        %543 = vst.msk [vmem:[%s217 + $0x48] sm:$0xff] %vm475, %v527
        %544 = vst.msk [vmem:[%s217 + $0x50] sm:$0xff] %vm475, %v528
        %545 = vst.msk [vmem:[%s217 + $0x58] sm:$0xff] %vm475, %v529
        %546 = vst.msk [vmem:[%s217 + $0x60] sm:$0xff] %vm475, %v530
        %547 = vst.msk [vmem:[%s217 + $0x68] sm:$0xff] %vm475, %v531
        %548 = vst.msk [vmem:[%s217 + $0x70] sm:$0xff] %vm475, %v532
        %549 = vst.msk [vmem:[%s217 + $0x78] sm:$0xff] %vm475, %v533
      $region40: #{adain_resblock_forward.10} parent=31 // pred_fallthru
        _
      %s550 = smul.u32 16, %s18
      %p551 = scmp.lt.s32.totalorder %s550, 63
      %s552 = scalar_select %p551, %s550, 63
      %s553 = smul.addr %s552, 8
      %s554 = scalar_lea.vmem %s3, %s553
      // Predicated region
      $region41: #{adain_resblock_forward.10} parent=31 // pred_check
        %p555 = pneg %p119
      $region42: #{adain_resblock_forward.10} parent=31 // pred_check_branch
        %557 = sbr.rel (%p555) target = $region44
      $region43: #{adain_resblock_forward.10} parent=31 // pred_region
        %s558 = smul.u32 16, %s18
      $region44: #{adain_resblock_forward.10} parent=31 // pred_fallthru
        _
    $region32: #{adain_resblock_forward.10} parent=5 // pred_fallthru
      _
    %p559 = scmp.le.s32.totalorder 2, %s9
    // Predicated region
    $region45: #{adain_resblock_forward.10} parent=5 // pred_check
      %p560 = pneg %p559
    $region46: #{adain_resblock_forward.10} parent=5 // pred_check_branch
      %562 = sbr.rel (%p560) target = $region48
    $region47: #{adain_resblock_forward.10} parent=5 // pred_region
      %s563 = ssub.s32 %s9, 2
      // Predicated region
      $region49: #{adain_resblock_forward.10} parent=47 // pred_check
        %p564 = pneg %p125
      $region50: #{adain_resblock_forward.10} parent=47 // pred_check_branch
        %566 = sbr.rel (%p564) target = $region52
      $region51: #{adain_resblock_forward.10} parent=47 // pred_region
        %s567 = smul.u32 16, %s20
        %p568 = scmp.lt.s32.totalorder %s567, 63
        %s569 = scalar_select %p568, %s567, 63
        %s570 = smul.addr %s569, 8
        %s571 = scalar_lea.vmem %s3, %s570
      $region52: #{adain_resblock_forward.10} parent=47 // pred_fallthru
        _
    $region48: #{adain_resblock_forward.10} parent=5 // pred_fallthru
      _
  $region6: #{adain_resblock_forward.10} parent=0 // loop_footer
    %s13 = sadd.s32 1, %s9
  $region7: #{adain_resblock_forward.10} parent=0 // loop_footer_branch
    %8 = sbr.rel target = $region3
  $region8: #{adain_resblock_forward.10} parent=0 // loop_exit
    _

// kernel: adain_resblock_forward.14
$region0: #{adain_resblock_forward.14}
  #allocation0 [shape = 'u32[]', space=smem, size = 0x4, offset = 0x4, fixed_abs, tag = 'smem constant byte address 0x4 - core index']
  #allocation1 [shape = 'u32[144,128]{1,0:T(1,128)}', space=vmem, size = 0x12000, scoped, tag = 'internal scratch']
  #allocation2 [shape = 'f32[128,8]{1,0:T(8,128)}', space=vmem, size = 0x10000, scoped, tag = 'scratch operand']
  %s0 = inlined_call_operand.vmem [shape: bf16[512,4], index: 0, kind: input, shape index: {}]
  %s1 = inlined_call_operand.vmem [shape: bf16[4,8], index: 1, kind: input, shape index: {}]
  %s2 = inlined_call_operand.vmem [shape: f32[1,8], index: 2, kind: input, shape index: {}]
  %s3 = inlined_call_operand.vmem [shape: f32[512,8], index: 3, kind: output, shape index: {}]
  %s4 = sld [smem:[#allocation0]]
  $region53: #{adain_resblock_forward.14} parent=0
    _
  %s6 = ssub.s32 1, %s4
  %s7 = scalar_select 0, %s6, %s4
  loop: start=0, step=1, limit=6
  $region2: #{adain_resblock_forward.14} parent=0 // loop_pre_header
    _
  $region3: #{adain_resblock_forward.14} parent=0 // loop_header
    %s9 = sphi 0, %s13
    %p10 = scmp.ge.s32.totalorder %s9, 6
    %s16 = sphi 0, %s28
    %s17 = sphi 0, %s24
    %s18 = sphi 0, %s16
    %s19 = sphi 0, %s17
    %s20 = sphi 0, %s18
    %s21 = sphi 0, %s19
    %s33 = sphi 0, %s35
    %s36 = sphi 0, %s33
    %s37 = sphi 0, %s36
    %s53 = sphi 0, %s37
    %s59 = sphi 0, %s61
    %s62 = sphi 0, %s59
    %s63 = sphi 0, %s62
    %s79 = sphi 0, %s63
    %s83 = sphi 0, %s83
    %s85 = sphi 0, %s83
    %s86 = sphi 0, %s85
    %s100 = sphi 0, %s86
    %s106 = sphi 0, %s108
    %s109 = sphi 0, %s106
    %s110 = sphi 0, %s109
    %s126 = sphi 0, %s110
  $region4: #{adain_resblock_forward.14} parent=0 // loop_header_branch
    %12 = sbr.rel (%p10) target = $region8
  $region5: #{adain_resblock_forward.14} parent=0 // loop_body
    %s14 = ssub.s32 %s9, 1
    %s15 = ssub.s32 %s9, 2
    %s22 = sadd.s32 1, %s17
    %p23 = scmp.ge.s32.totalorder %s22, 1
    %s24 = scalar_select %p23, 0, %s22
    %s25 = sadd.s32 1, %s16
    %s26 = scalar_select %p23, %s25, %s16
    %p27 = scmp.ge.s32.totalorder %s26, 4
    %s28 = scalar_select %p27, 0, %s26
    %s29 = ssub.s32 %s16, %s28
    %s30 = ssub.s32 %s17, %s24
    %s31 = sor.u32 %s29, %s30
    %p32 = scmp.eq.s32.totalorder %s31, 0
    %s34 = sadd.s32 %s33, 1
    %s35 = scalar_select %p32, %s33, %s34
    %p38 = pneg %p32
    %p39 = scmp.eq.s32.totalorder %s9, 3
    %p40 = por %p38, %p39
    %p41 = scmp.ne.s32.totalorder %s33, %s36
    %p42 = scmp.eq.s32.totalorder %s9, 0
    %p43 = por %p41, %p42
    %p44 = scmp.ne.s32.totalorder %s33, %s36
    %p45 = scmp.eq.s32.totalorder %s14, 3
    %p46 = por %p44, %p45
    %p47 = scmp.ne.s32.totalorder %s36, %s37
    %p48 = scmp.eq.s32.totalorder %s14, 0
    %p49 = por %p47, %p48
    %p50 = scmp.ne.s32.totalorder %s36, %s37
    %p51 = scmp.eq.s32.totalorder %s15, 3
    %p52 = por %p50, %p51
    %p54 = scmp.ne.s32.totalorder %s37, %s53
    %p55 = scmp.eq.s32.totalorder %s15, 0
    %p56 = por %p54, %p55
    %s57 = ssub.s32 %s17, %s24
    %p58 = scmp.eq.s32.totalorder %s57, 0
    %s60 = sadd.s32 %s59, 1
    %s61 = scalar_select %p58, %s59, %s60
    %p64 = pneg %p58
    %p65 = scmp.eq.s32.totalorder %s9, 3
    %p66 = por %p64, %p65
    %p67 = scmp.ne.s32.totalorder %s59, %s62
    %p68 = scmp.eq.s32.totalorder %s9, 0
    %p69 = por %p67, %p68
    %p70 = scmp.ne.s32.totalorder %s59, %s62
    %p71 = scmp.eq.s32.totalorder %s14, 3
    %p72 = por %p70, %p71
    %p73 = scmp.ne.s32.totalorder %s62, %s63
    %p74 = scmp.eq.s32.totalorder %s14, 0
    %p75 = por %p73, %p74
    %p76 = scmp.ne.s32.totalorder %s62, %s63
    %p77 = scmp.eq.s32.totalorder %s15, 3
    %p78 = por %p76, %p77
    %p80 = scmp.ne.s32.totalorder %s63, %s79
    %p81 = scmp.eq.s32.totalorder %s15, 0
    %p82 = por %p80, %p81
    %s84 = sadd.s32 %s83, 1
    %p87 = scmp.eq.s32.totalorder %s9, 3
    %p88 = scmp.ne.s32.totalorder %s83, %s85
    %p89 = scmp.eq.s32.totalorder %s9, 0
    %p90 = por %p88, %p89
    %p91 = scmp.ne.s32.totalorder %s83, %s85
    %p92 = scmp.eq.s32.totalorder %s14, 3
    %p93 = por %p91, %p92
    %p94 = scmp.ne.s32.totalorder %s85, %s86
    %p95 = scmp.eq.s32.totalorder %s14, 0
    %p96 = por %p94, %p95
    %p97 = scmp.ne.s32.totalorder %s85, %s86
    %p98 = scmp.eq.s32.totalorder %s15, 3
    %p99 = por %p97, %p98
    %p101 = scmp.ne.s32.totalorder %s86, %s100
    %p102 = scmp.eq.s32.totalorder %s15, 0
    %p103 = por %p101, %p102
    %s104 = ssub.s32 %s16, %s28
    %p105 = scmp.eq.s32.totalorder %s104, 0
    %s107 = sadd.s32 %s106, 1
    %s108 = scalar_select %p105, %s106, %s107
    %p111 = pneg %p105
    %p112 = scmp.eq.s32.totalorder %s9, 3
    %p113 = por %p111, %p112
    %p114 = scmp.ne.s32.totalorder %s106, %s109
    %p115 = scmp.eq.s32.totalorder %s9, 0
    %p116 = por %p114, %p115
    %p117 = scmp.ne.s32.totalorder %s106, %s109
    %p118 = scmp.eq.s32.totalorder %s14, 3
    %p119 = por %p117, %p118
    %p120 = scmp.ne.s32.totalorder %s109, %s110
    %p121 = scmp.eq.s32.totalorder %s14, 0
    %p122 = por %p120, %p121
    %p123 = scmp.ne.s32.totalorder %s109, %s110
    %p124 = scmp.eq.s32.totalorder %s15, 3
    %p125 = por %p123, %p124
    %p127 = scmp.ne.s32.totalorder %s110, %s126
    %p128 = scmp.eq.s32.totalorder %s15, 0
    %p129 = por %p127, %p128
    %p130 = scmp.le.s32.totalorder 1, %s9
    %p131 = scmp.lt.s32.totalorder %s9, 5
    %p132 = pnand %p130, %p131
    %p133 = pneg %p132
    // Predicated region
    $region9: #{adain_resblock_forward.14} parent=5 // pred_check
      _
    $region10: #{adain_resblock_forward.14} parent=5 // pred_check_branch
      %135 = sbr.rel (%p132) target = $region12
    $region11: #{adain_resblock_forward.14} parent=5 // pred_region
      %s136 = ssub.s32 %s9, 1
      // Predicated region
      $region13: #{adain_resblock_forward.14} parent=11 // pred_check
        %p137 = pneg %p75
      $region14: #{adain_resblock_forward.14} parent=11 // pred_check_branch
        %139 = sbr.rel (%p137) target = $region16
      $region15: #{adain_resblock_forward.14} parent=11 // pred_region
        %p140 = scmp.lt.s32.totalorder %s19, 0
        %s141 = scalar_select %p140, %s19, 0
        %s142 = smul.addr %s141, 2
        %s143 = scalar_lea.vmem %s1, %s142
      $region16: #{adain_resblock_forward.14} parent=11 // pred_fallthru
        _
      // Predicated region
      $region17: #{adain_resblock_forward.14} parent=11 // pred_check
        %p144 = pneg %p96
      $region18: #{adain_resblock_forward.14} parent=11 // pred_check_branch
        %146 = sbr.rel (%p144) target = $region20
      $region19: #{adain_resblock_forward.14} parent=11 // pred_region
        _
      $region20: #{adain_resblock_forward.14} parent=11 // pred_fallthru
        _
    $region12: #{adain_resblock_forward.14} parent=5 // pred_fallthru
      _
    %p147 = scmp.lt.s32.totalorder %s9, 4
    // Predicated region
    $region21: #{adain_resblock_forward.14} parent=5 // pred_check
      %p148 = pneg %p147
    $region22: #{adain_resblock_forward.14} parent=5 // pred_check_branch
      %150 = sbr.rel (%p148) target = $region24
    $region23: #{adain_resblock_forward.14} parent=5 // pred_region
      // Predicated region
      $region25: #{adain_resblock_forward.14} parent=23 // pred_check
        %p151 = pneg %p43
      $region26: #{adain_resblock_forward.14} parent=23 // pred_check_branch
        %153 = sbr.rel (%p151) target = $region28
      $region27: #{adain_resblock_forward.14} parent=23 // pred_region
        %s154 = smul.u32 16, %s16
        %p155 = scmp.lt.s32.totalorder %s154, 63
        %s156 = scalar_select %p155, %s154, 63
        %p157 = scmp.lt.s32.totalorder %s17, 0
        %s158 = scalar_select %p157, %s17, 0
        %s159 = sadd.s32 %s158, %s156
        %s160 = smul.addr %s159, 4
        %s161 = scalar_lea.vmem %s0, %s160
        %s162 = smul.u32 16, %s16
      $region28: #{adain_resblock_forward.14} parent=23 // pred_fallthru
        _
    $region24: #{adain_resblock_forward.14} parent=5 // pred_fallthru
      _
    %p163 = scmp.le.s32.totalorder 1, %s9
    %p164 = scmp.lt.s32.totalorder %s9, 5
    %p165 = pnand %p163, %p164
    %p166 = pneg %p165
    // Predicated region
    $region29: #{adain_resblock_forward.14} parent=5 // pred_check
      _
    $region30: #{adain_resblock_forward.14} parent=5 // pred_check_branch
      %168 = sbr.rel (%p165) target = $region32
    $region31: #{adain_resblock_forward.14} parent=5 // pred_region
      %s169 = ssub.s32 %s9, 1
      %s170 = smul.u32 16, %s18
      %p171 = scmp.lt.s32.totalorder %s170, 63
      %s172 = scalar_select %p171, %s170, 63
      %p173 = scmp.lt.s32.totalorder %s19, 0
      %s174 = scalar_select %p173, %s19, 0
      %s175 = sadd.s32 %s174, %s172
      %s176 = smul.addr %s175, 4
      %s177 = scalar_lea.vmem %s0, %s176
      %p178 = pneg %p49
      %p179 = pneg %p46
      %p180 = scmp.lt.s32.totalorder %s19, 0
      %s181 = scalar_select %p180, %s19, 0
      %s182 = smul.addr %s181, 2
      %s183 = scalar_lea.vmem %s1, %s182
      %p184 = pneg %p75
      %p185 = pneg %p72
      %p186 = pneg %p96
      %p187 = pneg %p93
      %p188 = pneg %p122
      %p189 = pneg %p119
      %s190 = smul.u32 16, %s18
      %p191 = scmp.lt.s32.totalorder %s190, 63
      %s192 = scalar_select %p191, %s190, 63
      %s193 = smul.addr %s192, 8
      %s194 = scalar_lea.vmem %s3, %s193
      %s195 = smul.u32 16, %s18
      %p196 = scmp.lt.s32.totalorder %s195, 63
      %s197 = scalar_select %p196, %s195, 63
      %p198 = scmp.lt.s32.totalorder %s19, 0
      %s199 = scalar_select %p198, %s19, 0
      %s200 = sadd.s32 %s199, %s197
      %s201 = smul.addr %s200, 4
      %s202 = scalar_lea.vmem %s0, %s201
      %s203 = smul.u32 16, %s18
      %p204 = scmp.lt.s32.totalorder %s19, 0
      %s205 = scalar_select %p204, %s19, 0
      %s206 = smul.addr %s205, 2
      %s207 = scalar_lea.vmem %s1, %s206
      %s208 = smul.u32 16, %s18
      %p209 = scmp.lt.s32.totalorder %s208, 63
      %s210 = scalar_select %p209, %s208, 63
      %s211 = smul.addr %s210, 8
      %s212 = scalar_lea.vmem %s3, %s211
      %s213 = smul.u32 16, %s18
      %p215 = scmp.eq.s32.totalorder %s19, 0
      // Predicated region
      $region33: #{adain_resblock_forward.14} parent=31 // pred_check
        %p216 = pneg %p215
      $region34: #{adain_resblock_forward.14} parent=31 // pred_check_branch
        %218 = sbr.rel (%p216) target = $region36
      $region35: #{adain_resblock_forward.14} parent=31 // pred_region
        %vm219 = vcmask 64512
        %220 = vst.msk [vmem:[#allocation2] sm:$0xff] %vm219, 0.0
        %221 = vst.msk [vmem:[#allocation2 + $0x8] sm:$0xff] %vm219, 0.0
        %222 = vst.msk [vmem:[#allocation2 + $0x10] sm:$0xff] %vm219, 0.0
        %223 = vst.msk [vmem:[#allocation2 + $0x18] sm:$0xff] %vm219, 0.0
        %224 = vst.msk [vmem:[#allocation2 + $0x20] sm:$0xff] %vm219, 0.0
        %225 = vst.msk [vmem:[#allocation2 + $0x28] sm:$0xff] %vm219, 0.0
        %226 = vst.msk [vmem:[#allocation2 + $0x30] sm:$0xff] %vm219, 0.0
        %227 = vst.msk [vmem:[#allocation2 + $0x38] sm:$0xff] %vm219, 0.0
        %228 = vst.msk [vmem:[#allocation2 + $0x40] sm:$0xff] %vm219, 0.0
        %229 = vst.msk [vmem:[#allocation2 + $0x48] sm:$0xff] %vm219, 0.0
        %230 = vst.msk [vmem:[#allocation2 + $0x50] sm:$0xff] %vm219, 0.0
        %231 = vst.msk [vmem:[#allocation2 + $0x58] sm:$0xff] %vm219, 0.0
        %232 = vst.msk [vmem:[#allocation2 + $0x60] sm:$0xff] %vm219, 0.0
        %233 = vst.msk [vmem:[#allocation2 + $0x68] sm:$0xff] %vm219, 0.0
        %234 = vst.msk [vmem:[#allocation2 + $0x70] sm:$0xff] %vm219, 0.0
        %235 = vst.msk [vmem:[#allocation2 + $0x78] sm:$0xff] %vm219, 0.0
      $region36: #{adain_resblock_forward.14} parent=31 // pred_fallthru
        _
      %v236 = vld [vmem:[#allocation2] sm:$0xff]
      %v237 = vld [vmem:[#allocation2 + $0x8] sm:$0xff]
      %v238 = vld [vmem:[#allocation2 + $0x10] sm:$0xff]
      %v239 = vld [vmem:[#allocation2 + $0x18] sm:$0xff]
      %v240 = vld [vmem:[#allocation2 + $0x20] sm:$0xff]
      %v241 = vld [vmem:[#allocation2 + $0x28] sm:$0xff]
      %v242 = vld [vmem:[#allocation2 + $0x30] sm:$0xff]
      %v243 = vld [vmem:[#allocation2 + $0x38] sm:$0xff]
      %v244 = vld [vmem:[#allocation2 + $0x40] sm:$0xff]
      %v245 = vld [vmem:[#allocation2 + $0x48] sm:$0xff]
      %v246 = vld [vmem:[#allocation2 + $0x50] sm:$0xff]
      %v247 = vld [vmem:[#allocation2 + $0x58] sm:$0xff]
      %v248 = vld [vmem:[#allocation2 + $0x60] sm:$0xff]
      %v249 = vld [vmem:[#allocation2 + $0x68] sm:$0xff]
      %v250 = vld [vmem:[#allocation2 + $0x70] sm:$0xff]
      %v251 = vld [vmem:[#allocation2 + $0x78] sm:$0xff]
      %v252 = vld [vmem:[%s202] sm:$0xf]
      %v253 = vld [vmem:[%s202 + $0x4] sm:$0xf]
      %v254 = vld [vmem:[%s202 + $0x8] sm:$0xf]
      %v255 = vld [vmem:[%s202 + $0xc] sm:$0xf]
      %v256 = vld [vmem:[%s202 + $0x10] sm:$0xf]
      %v257 = vld [vmem:[%s202 + $0x14] sm:$0xf]
      %v258 = vld [vmem:[%s202 + $0x18] sm:$0xf]
      %v259 = vld [vmem:[%s202 + $0x1c] sm:$0xf]
      %v260 = vld [vmem:[%s202 + $0x20] sm:$0xf]
      %v261 = vld [vmem:[%s202 + $0x24] sm:$0xf]
      %v262 = vld [vmem:[%s202 + $0x28] sm:$0xf]
      %v263 = vld [vmem:[%s202 + $0x2c] sm:$0xf]
      %v264 = vld [vmem:[%s202 + $0x30] sm:$0xf]
      %v265 = vld [vmem:[%s202 + $0x34] sm:$0xf]
      %v266 = vld [vmem:[%s202 + $0x38] sm:$0xf]
      %v267 = vld [vmem:[%s202 + $0x3c] sm:$0xf]
      %v268 = vld [vmem:[%s207] sm:$0x3]
      %v285 = vunpack.c.l.b16 %v252
      %v286 = vunpack.c.l.b16 %v253
      %v287 = vunpack.c.l.b16 %v254
      %v288 = vunpack.c.l.b16 %v255
      %v289 = vunpack.c.l.b16 %v256
      %v290 = vunpack.c.l.b16 %v257
      %v291 = vunpack.c.l.b16 %v258
      %v292 = vunpack.c.l.b16 %v259
      %v293 = vunpack.c.l.b16 %v260
      %v294 = vunpack.c.l.b16 %v261
      %v295 = vunpack.c.l.b16 %v262
      %v296 = vunpack.c.l.b16 %v263
      %v297 = vunpack.c.l.b16 %v264
      %v298 = vunpack.c.l.b16 %v265
      %v299 = vunpack.c.l.b16 %v266
      %v300 = vunpack.c.l.b16 %v267
      %v301 = vpack.c.b16 %v286, %v285
      %v302 = vpack.c.b16 %v288, %v287
      %v303 = vpack.c.b16 %v290, %v289
      %v304 = vpack.c.b16 %v292, %v291
      %v305 = vpack.c.b16 %v294, %v293
      %v306 = vpack.c.b16 %v296, %v295
      %v307 = vpack.c.b16 %v298, %v297
      %v308 = vpack.c.b16 %v300, %v299
      %vm309 = vcmask 31744
      %v311 = vsel %vm309, %v301, 0
      %v314 = vsel %vm309, %v302, 0
      %v317 = vsel %vm309, %v303, 0
      %v320 = vsel %vm309, %v304, 0
      %v323 = vsel %vm309, %v305, 0
      %v326 = vsel %vm309, %v306, 0
      %v329 = vsel %vm309, %v307, 0
      %v332 = vsel %vm309, %v308, 0
      %vm334 = vcmask 1041408
      %v336 = vsel %vm334, %v268, 0
      %338 = vmatprep.subr.bf16.mxu0 0
      %339 = vmatpush1.bf16.msra.mxu0 %v336
      %340 = vmatprep.subr.bf16.mxu0 0
      %341 = vmatpush1.bf16.msra.mxu0 0
      %342 = vmatprep.subr.bf16.mxu0 0
      %343 = vmatpush1.bf16.msra.mxu0 0
      %344 = vmatprep.subr.bf16.mxu0 0
      %345 = vmatpush1.bf16.msra.mxu0 0
      %346 = vmatprep.subr.bf16.mxu0 0
      %347 = vmatpush1.bf16.msra.mxu0 0
      %348 = vmatprep.subr.bf16.mxu0 0
      %349 = vmatpush1.bf16.msra.mxu0 0
      %350 = vmatprep.subr.bf16.mxu0 0
      %351 = vmatpush1.bf16.msra.mxu0 0
      %352 = vmatprep.subr.bf16.mxu0 0
      %353 = vmatpush1.bf16.msra.mxu0 0
      %354 = vmatprep.subr.bf16.mxu0 0
      %355 = vmatpush1.bf16.msra.mxu0 0
      %356 = vmatprep.subr.bf16.mxu0 0
      %357 = vmatpush1.bf16.msra.mxu0 0
      %358 = vmatprep.subr.bf16.mxu0 0
      %359 = vmatpush1.bf16.msra.mxu0 0
      %360 = vmatprep.subr.bf16.mxu0 0
      %361 = vmatpush1.bf16.msra.mxu0 0
      %362 = vmatprep.subr.bf16.mxu0 0
      %363 = vmatpush1.bf16.msra.mxu0 0
      %364 = vmatprep.subr.bf16.mxu0 0
      %365 = vmatpush1.bf16.msra.mxu0 0
      %366 = vmatprep.subr.bf16.mxu0 0
      %367 = vmatpush1.bf16.msra.mxu0 0
      %368 = vmatprep.subr.bf16.mxu0 0
      %369 = vmatpush1.bf16.msra.mxu0 0
      %370 = vmatprep.mubr.bf16.mxu0 0
      %371 = vmatmul.mubr.bf16.gmra.mrb[0].mxu0 %v311
      %v372 = vpop.f32.mrb[0].mxu0
      %v373 = vadd.f32 0.0, %v372
      %v374 = vpop.f32.mrb[0].mxu0
      %v375 = vpop.f32.mrb[0].mxu0
      %v376 = vadd.f32 0.0, %v375
      %v377 = vpop.f32.mrb[0].mxu0
      %378 = vmatprep.mubr.bf16.mxu0 0
      %379 = vmatmul.mubr.bf16.gmra.mrb[0].mxu0 %v314
      %v380 = vpop.f32.mrb[0].mxu0
      %v381 = vadd.f32 0.0, %v380
      %v382 = vpop.f32.mrb[0].mxu0
      %v383 = vpop.f32.mrb[0].mxu0
      %v384 = vadd.f32 0.0, %v383
      %v385 = vpop.f32.mrb[0].mxu0
      %386 = vmatprep.mubr.bf16.mxu0 0
      %387 = vmatmul.mubr.bf16.gmra.mrb[0].mxu0 %v317
      %v388 = vpop.f32.mrb[0].mxu0
      %v389 = vadd.f32 0.0, %v388
      %v390 = vpop.f32.mrb[0].mxu0
      %v391 = vpop.f32.mrb[0].mxu0
      %v392 = vadd.f32 0.0, %v391
      %v393 = vpop.f32.mrb[0].mxu0
      %394 = vmatprep.mubr.bf16.mxu0 0
      %395 = vmatmul.mubr.bf16.gmra.mrb[0].mxu0 %v320
      %v396 = vpop.f32.mrb[0].mxu0
      %v397 = vadd.f32 0.0, %v396
      %v398 = vpop.f32.mrb[0].mxu0
      %v399 = vpop.f32.mrb[0].mxu0
      %v400 = vadd.f32 0.0, %v399
      %v401 = vpop.f32.mrb[0].mxu0
      %402 = vmatprep.mubr.bf16.mxu0 0
      %403 = vmatmul.mubr.bf16.gmra.mrb[0].mxu0 %v323
      %v404 = vpop.f32.mrb[0].mxu0
      %v405 = vadd.f32 0.0, %v404
      %v406 = vpop.f32.mrb[0].mxu0
      %v407 = vpop.f32.mrb[0].mxu0
      %v408 = vadd.f32 0.0, %v407
      %v409 = vpop.f32.mrb[0].mxu0
      %410 = vmatprep.mubr.bf16.mxu0 0
      %411 = vmatmul.mubr.bf16.gmra.mrb[0].mxu0 %v326
      %v412 = vpop.f32.mrb[0].mxu0
      %v413 = vadd.f32 0.0, %v412
      %v414 = vpop.f32.mrb[0].mxu0
      %v415 = vpop.f32.mrb[0].mxu0
      %v416 = vadd.f32 0.0, %v415
      %v417 = vpop.f32.mrb[0].mxu0
      %418 = vmatprep.mubr.bf16.mxu0 0
      %419 = vmatmul.mubr.bf16.gmra.mrb[0].mxu0 %v329
      %v420 = vpop.f32.mrb[0].mxu0
      %v421 = vadd.f32 0.0, %v420
      %v422 = vpop.f32.mrb[0].mxu0
      %v423 = vpop.f32.mrb[0].mxu0
      %v424 = vadd.f32 0.0, %v423
      %v425 = vpop.f32.mrb[0].mxu0
      %426 = vmatprep.mubr.bf16.mxu0 0
      %427 = vmatmul.mubr.bf16.gmra.mrb[0].mxu0 %v332
      %v428 = vpop.f32.mrb[0].mxu0
      %v429 = vadd.f32 0.0, %v428
      %v430 = vpop.f32.mrb[0].mxu0
      %v431 = vpop.f32.mrb[0].mxu0
      %v432 = vadd.f32 0.0, %v431
      %v433 = vpop.f32.mrb[0].mxu0
      %434 = vdwg.mxu0
      %v435 = vadd.f32 %v236, %v373
      %v436 = vadd.f32 %v237, %v376
      %v437 = vadd.f32 %v238, %v381
      %v438 = vadd.f32 %v239, %v384
      %v439 = vadd.f32 %v240, %v389
      %v440 = vadd.f32 %v241, %v392
      %v441 = vadd.f32 %v242, %v397
      %v442 = vadd.f32 %v243, %v400
      %v443 = vadd.f32 %v244, %v405
      %v444 = vadd.f32 %v245, %v408
      %v445 = vadd.f32 %v246, %v413
      %v446 = vadd.f32 %v247, %v416
      %v447 = vadd.f32 %v248, %v421
      %v448 = vadd.f32 %v249, %v424
      %v449 = vadd.f32 %v250, %v429
      %v450 = vadd.f32 %v251, %v432
      %vm451 = vcmask 64512
      %452 = vst.msk [vmem:[#allocation2] sm:$0xff] %vm451, %v435
      %453 = vst.msk [vmem:[#allocation2 + $0x8] sm:$0xff] %vm451, %v436
      %454 = vst.msk [vmem:[#allocation2 + $0x10] sm:$0xff] %vm451, %v437
      %455 = vst.msk [vmem:[#allocation2 + $0x18] sm:$0xff] %vm451, %v438
      %456 = vst.msk [vmem:[#allocation2 + $0x20] sm:$0xff] %vm451, %v439
      %457 = vst.msk [vmem:[#allocation2 + $0x28] sm:$0xff] %vm451, %v440
      %458 = vst.msk [vmem:[#allocation2 + $0x30] sm:$0xff] %vm451, %v441
      %459 = vst.msk [vmem:[#allocation2 + $0x38] sm:$0xff] %vm451, %v442
      %460 = vst.msk [vmem:[#allocation2 + $0x40] sm:$0xff] %vm451, %v443
      %461 = vst.msk [vmem:[#allocation2 + $0x48] sm:$0xff] %vm451, %v444
      %462 = vst.msk [vmem:[#allocation2 + $0x50] sm:$0xff] %vm451, %v445
      %463 = vst.msk [vmem:[#allocation2 + $0x58] sm:$0xff] %vm451, %v446
      %464 = vst.msk [vmem:[#allocation2 + $0x60] sm:$0xff] %vm451, %v447
      %465 = vst.msk [vmem:[#allocation2 + $0x68] sm:$0xff] %vm451, %v448
      %466 = vst.msk [vmem:[#allocation2 + $0x70] sm:$0xff] %vm451, %v449
      %467 = vst.msk [vmem:[#allocation2 + $0x78] sm:$0xff] %vm451, %v450
      // Predicated region
      $region37: #{adain_resblock_forward.14} parent=31 // pred_check
        %p468 = pneg %p215
      $region38: #{adain_resblock_forward.14} parent=31 // pred_check_branch
        %470 = sbr.rel (%p468) target = $region40
      $region39: #{adain_resblock_forward.14} parent=31 // pred_region
        %v471 = vld [vmem:[#allocation2] sm:$0xff]
        %v472 = vld [vmem:[#allocation2 + $0x8] sm:$0xff]
        %v473 = vld [vmem:[#allocation2 + $0x10] sm:$0xff]
        %v474 = vld [vmem:[#allocation2 + $0x18] sm:$0xff]
        %v475 = vld [vmem:[#allocation2 + $0x20] sm:$0xff]
        %v476 = vld [vmem:[#allocation2 + $0x28] sm:$0xff]
        %v477 = vld [vmem:[#allocation2 + $0x30] sm:$0xff]
        %v478 = vld [vmem:[#allocation2 + $0x38] sm:$0xff]
        %v479 = vld [vmem:[#allocation2 + $0x40] sm:$0xff]
        %v480 = vld [vmem:[#allocation2 + $0x48] sm:$0xff]
        %v481 = vld [vmem:[#allocation2 + $0x50] sm:$0xff]
        %v482 = vld [vmem:[#allocation2 + $0x58] sm:$0xff]
        %v483 = vld [vmem:[#allocation2 + $0x60] sm:$0xff]
        %v484 = vld [vmem:[#allocation2 + $0x68] sm:$0xff]
        %v485 = vld [vmem:[#allocation2 + $0x70] sm:$0xff]
        %v486 = vld [vmem:[#allocation2 + $0x78] sm:$0xff]
        %v487 = vld [vmem:[%s2] sm:$0x1]
        %v489 = vlaneseq
        %v490 = vshrl.u32 %v489, 7
        %v491 = vsub.s32 0, %v490
        %v492 = vrot.slane %v487, %v491
        %v494 = vadd.f32 %v471, %v492
        %v495 = vadd.f32 %v472, %v492
        %v496 = vadd.f32 %v473, %v492
        %v497 = vadd.f32 %v474, %v492
        %v498 = vadd.f32 %v475, %v492
        %v499 = vadd.f32 %v476, %v492
        %v500 = vadd.f32 %v477, %v492
        %v501 = vadd.f32 %v478, %v492
        %v502 = vadd.f32 %v479, %v492
        %v503 = vadd.f32 %v480, %v492
        %v504 = vadd.f32 %v481, %v492
        %v505 = vadd.f32 %v482, %v492
        %v506 = vadd.f32 %v483, %v492
        %v507 = vadd.f32 %v484, %v492
        %v508 = vadd.f32 %v485, %v492
        %v509 = vadd.f32 %v486, %v492
        %510 = vst.msk [vmem:[%s212] sm:$0xff] %vm451, %v494
        %511 = vst.msk [vmem:[%s212 + $0x8] sm:$0xff] %vm451, %v495
        %512 = vst.msk [vmem:[%s212 + $0x10] sm:$0xff] %vm451, %v496
        %513 = vst.msk [vmem:[%s212 + $0x18] sm:$0xff] %vm451, %v497
        %514 = vst.msk [vmem:[%s212 + $0x20] sm:$0xff] %vm451, %v498
        %515 = vst.msk [vmem:[%s212 + $0x28] sm:$0xff] %vm451, %v499
        %516 = vst.msk [vmem:[%s212 + $0x30] sm:$0xff] %vm451, %v500
        %517 = vst.msk [vmem:[%s212 + $0x38] sm:$0xff] %vm451, %v501
        %518 = vst.msk [vmem:[%s212 + $0x40] sm:$0xff] %vm451, %v502
        %519 = vst.msk [vmem:[%s212 + $0x48] sm:$0xff] %vm451, %v503
        %520 = vst.msk [vmem:[%s212 + $0x50] sm:$0xff] %vm451, %v504
        %521 = vst.msk [vmem:[%s212 + $0x58] sm:$0xff] %vm451, %v505
        %522 = vst.msk [vmem:[%s212 + $0x60] sm:$0xff] %vm451, %v506
        %523 = vst.msk [vmem:[%s212 + $0x68] sm:$0xff] %vm451, %v507
        %524 = vst.msk [vmem:[%s212 + $0x70] sm:$0xff] %vm451, %v508
        %525 = vst.msk [vmem:[%s212 + $0x78] sm:$0xff] %vm451, %v509
      $region40: #{adain_resblock_forward.14} parent=31 // pred_fallthru
        _
      %s526 = smul.u32 16, %s18
      %p527 = scmp.lt.s32.totalorder %s526, 63
      %s528 = scalar_select %p527, %s526, 63
      %s529 = smul.addr %s528, 8
      %s530 = scalar_lea.vmem %s3, %s529
      // Predicated region
      $region41: #{adain_resblock_forward.14} parent=31 // pred_check
        %p531 = pneg %p119
      $region42: #{adain_resblock_forward.14} parent=31 // pred_check_branch
        %533 = sbr.rel (%p531) target = $region44
      $region43: #{adain_resblock_forward.14} parent=31 // pred_region
        %s534 = smul.u32 16, %s18
      $region44: #{adain_resblock_forward.14} parent=31 // pred_fallthru
        _
    $region32: #{adain_resblock_forward.14} parent=5 // pred_fallthru
      _
    %p535 = scmp.le.s32.totalorder 2, %s9
    // Predicated region
    $region45: #{adain_resblock_forward.14} parent=5 // pred_check
      %p536 = pneg %p535
    $region46: #{adain_resblock_forward.14} parent=5 // pred_check_branch
      %538 = sbr.rel (%p536) target = $region48
    $region47: #{adain_resblock_forward.14} parent=5 // pred_region
      %s539 = ssub.s32 %s9, 2
      // Predicated region
      $region49: #{adain_resblock_forward.14} parent=47 // pred_check
        %p540 = pneg %p125
      $region50: #{adain_resblock_forward.14} parent=47 // pred_check_branch
        %542 = sbr.rel (%p540) target = $region52
      $region51: #{adain_resblock_forward.14} parent=47 // pred_region
        %s543 = smul.u32 16, %s20
        %p544 = scmp.lt.s32.totalorder %s543, 63
        %s545 = scalar_select %p544, %s543, 63
        %s546 = smul.addr %s545, 8
        %s547 = scalar_lea.vmem %s3, %s546
      $region52: #{adain_resblock_forward.14} parent=47 // pred_fallthru
        _
    $region48: #{adain_resblock_forward.14} parent=5 // pred_fallthru
      _
  $region6: #{adain_resblock_forward.14} parent=0 // loop_footer
    %s13 = sadd.s32 1, %s9
  $region7: #{adain_resblock_forward.14} parent=0 // loop_footer_branch
    %8 = sbr.rel target = $region3
  $region8: #{adain_resblock_forward.14} parent=0 // loop_exit
    _

// kernel: adain_resblock_forward.15
$region0: #{adain_resblock_forward.15}
  #allocation0 [shape = 'u32[]', space=smem, size = 0x4, offset = 0x4, fixed_abs, tag = 'smem constant byte address 0x4 - core index']
  #allocation1 [shape = 'u32[144,128]{1,0:T(1,128)}', space=vmem, size = 0x12000, scoped, tag = 'internal scratch']
  #allocation2 [shape = 'f32[128,8]{1,0:T(8,128)}', space=vmem, size = 0x10000, scoped, tag = 'scratch operand']
  %s0 = inlined_call_operand.vmem [shape: bf16[512,36], index: 0, kind: input, shape index: {}]
  %s1 = inlined_call_operand.vmem [shape: bf16[36,8], index: 1, kind: input, shape index: {}]
  %s2 = inlined_call_operand.vmem [shape: f32[1,8], index: 2, kind: input, shape index: {}]
  %s3 = inlined_call_operand.vmem [shape: f32[512,8], index: 3, kind: input, shape index: {}]
  %s4 = inlined_call_operand.vmem [shape: f32[512,8], index: 4, kind: output, shape index: {}]
  %s5 = sld [smem:[#allocation0]]
  $region57: #{adain_resblock_forward.15} parent=0
    _
  %s7 = ssub.s32 1, %s5
  %s8 = scalar_select 0, %s7, %s5
  loop: start=0, step=1, limit=6
  $region2: #{adain_resblock_forward.15} parent=0 // loop_pre_header
    _
  $region3: #{adain_resblock_forward.15} parent=0 // loop_header
    %s10 = sphi 0, %s14
    %p11 = scmp.ge.s32.totalorder %s10, 6
    %s17 = sphi 0, %s29
    %s18 = sphi 0, %s25
    %s19 = sphi 0, %s17
    %s20 = sphi 0, %s18
    %s21 = sphi 0, %s19
    %s22 = sphi 0, %s20
    %s34 = sphi 0, %s36
    %s37 = sphi 0, %s34
    %s38 = sphi 0, %s37
    %s54 = sphi 0, %s38
    %s60 = sphi 0, %s62
    %s63 = sphi 0, %s60
    %s64 = sphi 0, %s63
    %s80 = sphi 0, %s64
    %s84 = sphi 0, %s84
    %s86 = sphi 0, %s84
    %s87 = sphi 0, %s86
    %s101 = sphi 0, %s87
    %s107 = sphi 0, %s109
    %s110 = sphi 0, %s107
    %s111 = sphi 0, %s110
    %s127 = sphi 0, %s111
    %s133 = sphi 0, %s135
    %s136 = sphi 0, %s133
    %s137 = sphi 0, %s136
    %s153 = sphi 0, %s137
  $region4: #{adain_resblock_forward.15} parent=0 // loop_header_branch
    %13 = sbr.rel (%p11) target = $region8
  $region5: #{adain_resblock_forward.15} parent=0 // loop_body
    %s15 = ssub.s32 %s10, 1
    %s16 = ssub.s32 %s10, 2
    %s23 = sadd.s32 1, %s18
    %p24 = scmp.ge.s32.totalorder %s23, 1
    %s25 = scalar_select %p24, 0, %s23
    %s26 = sadd.s32 1, %s17
    %s27 = scalar_select %p24, %s26, %s17
    %p28 = scmp.ge.s32.totalorder %s27, 4
    %s29 = scalar_select %p28, 0, %s27
    %s30 = ssub.s32 %s17, %s29
    %s31 = ssub.s32 %s18, %s25
    %s32 = sor.u32 %s30, %s31
    %p33 = scmp.eq.s32.totalorder %s32, 0
    %s35 = sadd.s32 %s34, 1
    %s36 = scalar_select %p33, %s34, %s35
    %p39 = pneg %p33
    %p40 = scmp.eq.s32.totalorder %s10, 3
    %p41 = por %p39, %p40
    %p42 = scmp.ne.s32.totalorder %s34, %s37
    %p43 = scmp.eq.s32.totalorder %s10, 0
    %p44 = por %p42, %p43
    %p45 = scmp.ne.s32.totalorder %s34, %s37
    %p46 = scmp.eq.s32.totalorder %s15, 3
    %p47 = por %p45, %p46
    %p48 = scmp.ne.s32.totalorder %s37, %s38
    %p49 = scmp.eq.s32.totalorder %s15, 0
    %p50 = por %p48, %p49
    %p51 = scmp.ne.s32.totalorder %s37, %s38
    %p52 = scmp.eq.s32.totalorder %s16, 3
    %p53 = por %p51, %p52
    %p55 = scmp.ne.s32.totalorder %s38, %s54
    %p56 = scmp.eq.s32.totalorder %s16, 0
    %p57 = por %p55, %p56
    %s58 = ssub.s32 %s18, %s25
    %p59 = scmp.eq.s32.totalorder %s58, 0
    %s61 = sadd.s32 %s60, 1
    %s62 = scalar_select %p59, %s60, %s61
    %p65 = pneg %p59
    %p66 = scmp.eq.s32.totalorder %s10, 3
    %p67 = por %p65, %p66
    %p68 = scmp.ne.s32.totalorder %s60, %s63
    %p69 = scmp.eq.s32.totalorder %s10, 0
    %p70 = por %p68, %p69
    %p71 = scmp.ne.s32.totalorder %s60, %s63
    %p72 = scmp.eq.s32.totalorder %s15, 3
    %p73 = por %p71, %p72
    %p74 = scmp.ne.s32.totalorder %s63, %s64
    %p75 = scmp.eq.s32.totalorder %s15, 0
    %p76 = por %p74, %p75
    %p77 = scmp.ne.s32.totalorder %s63, %s64
    %p78 = scmp.eq.s32.totalorder %s16, 3
    %p79 = por %p77, %p78
    %p81 = scmp.ne.s32.totalorder %s64, %s80
    %p82 = scmp.eq.s32.totalorder %s16, 0
    %p83 = por %p81, %p82
    %s85 = sadd.s32 %s84, 1
    %p88 = scmp.eq.s32.totalorder %s10, 3
    %p89 = scmp.ne.s32.totalorder %s84, %s86
    %p90 = scmp.eq.s32.totalorder %s10, 0
    %p91 = por %p89, %p90
    %p92 = scmp.ne.s32.totalorder %s84, %s86
    %p93 = scmp.eq.s32.totalorder %s15, 3
    %p94 = por %p92, %p93
    %p95 = scmp.ne.s32.totalorder %s86, %s87
    %p96 = scmp.eq.s32.totalorder %s15, 0
    %p97 = por %p95, %p96
    %p98 = scmp.ne.s32.totalorder %s86, %s87
    %p99 = scmp.eq.s32.totalorder %s16, 3
    %p100 = por %p98, %p99
    %p102 = scmp.ne.s32.totalorder %s87, %s101
    %p103 = scmp.eq.s32.totalorder %s16, 0
    %p104 = por %p102, %p103
    %s105 = ssub.s32 %s17, %s29
    %p106 = scmp.eq.s32.totalorder %s105, 0
    %s108 = sadd.s32 %s107, 1
    %s109 = scalar_select %p106, %s107, %s108
    %p112 = pneg %p106
    %p113 = scmp.eq.s32.totalorder %s10, 3
    %p114 = por %p112, %p113
    %p115 = scmp.ne.s32.totalorder %s107, %s110
    %p116 = scmp.eq.s32.totalorder %s10, 0
    %p117 = por %p115, %p116
    %p118 = scmp.ne.s32.totalorder %s107, %s110
    %p119 = scmp.eq.s32.totalorder %s15, 3
    %p120 = por %p118, %p119
    %p121 = scmp.ne.s32.totalorder %s110, %s111
    %p122 = scmp.eq.s32.totalorder %s15, 0
    %p123 = por %p121, %p122
    %p124 = scmp.ne.s32.totalorder %s110, %s111
    %p125 = scmp.eq.s32.totalorder %s16, 3
    %p126 = por %p124, %p125
    %p128 = scmp.ne.s32.totalorder %s111, %s127
    %p129 = scmp.eq.s32.totalorder %s16, 0
    %p130 = por %p128, %p129
    %s131 = ssub.s32 %s17, %s29
    %p132 = scmp.eq.s32.totalorder %s131, 0
    %s134 = sadd.s32 %s133, 1
    %s135 = scalar_select %p132, %s133, %s134
    %p138 = pneg %p132
    %p139 = scmp.eq.s32.totalorder %s10, 3
    %p140 = por %p138, %p139
    %p141 = scmp.ne.s32.totalorder %s133, %s136
    %p142 = scmp.eq.s32.totalorder %s10, 0
    %p143 = por %p141, %p142
    %p144 = scmp.ne.s32.totalorder %s133, %s136
    %p145 = scmp.eq.s32.totalorder %s15, 3
    %p146 = por %p144, %p145
    %p147 = scmp.ne.s32.totalorder %s136, %s137
    %p148 = scmp.eq.s32.totalorder %s15, 0
    %p149 = por %p147, %p148
    %p150 = scmp.ne.s32.totalorder %s136, %s137
    %p151 = scmp.eq.s32.totalorder %s16, 3
    %p152 = por %p150, %p151
    %p154 = scmp.ne.s32.totalorder %s137, %s153
    %p155 = scmp.eq.s32.totalorder %s16, 0
    %p156 = por %p154, %p155
    %p157 = scmp.le.s32.totalorder 1, %s10
    %p158 = scmp.lt.s32.totalorder %s10, 5
    %p159 = pnand %p157, %p158
    %p160 = pneg %p159
    // Predicated region
    $region9: #{adain_resblock_forward.15} parent=5 // pred_check
      _
    $region10: #{adain_resblock_forward.15} parent=5 // pred_check_branch
      %162 = sbr.rel (%p159) target = $region12
    $region11: #{adain_resblock_forward.15} parent=5 // pred_region
      %s163 = ssub.s32 %s10, 1
      // Predicated region
      $region13: #{adain_resblock_forward.15} parent=11 // pred_check
        %p164 = pneg %p76
      $region14: #{adain_resblock_forward.15} parent=11 // pred_check_branch
        %166 = sbr.rel (%p164) target = $region16
      $region15: #{adain_resblock_forward.15} parent=11 // pred_region
        %s167 = smul.u32 5, %s20
        %p168 = scmp.lt.s32.totalorder %s167, 4
        %s169 = scalar_select %p168, %s167, 4
        %s170 = smul.addr %s169, 4
        %s171 = scalar_lea.vmem %s1, %s170
        %s172 = smul.u32 5, %s20
      $region16: #{adain_resblock_forward.15} parent=11 // pred_fallthru
        _
      // Predicated region
      $region17: #{adain_resblock_forward.15} parent=11 // pred_check
        %p173 = pneg %p97
      $region18: #{adain_resblock_forward.15} parent=11 // pred_check_branch
        %175 = sbr.rel (%p173) target = $region20
      $region19: #{adain_resblock_forward.15} parent=11 // pred_region
        _
      $region20: #{adain_resblock_forward.15} parent=11 // pred_fallthru
        _
    $region12: #{adain_resblock_forward.15} parent=5 // pred_fallthru
      _
    %p176 = scmp.lt.s32.totalorder %s10, 4
    // Predicated region
    $region21: #{adain_resblock_forward.15} parent=5 // pred_check
      %p177 = pneg %p176
    $region22: #{adain_resblock_forward.15} parent=5 // pred_check_branch
      %179 = sbr.rel (%p177) target = $region24
    $region23: #{adain_resblock_forward.15} parent=5 // pred_region
      // Predicated region
      $region25: #{adain_resblock_forward.15} parent=23 // pred_check
        %p180 = pneg %p44
      $region26: #{adain_resblock_forward.15} parent=23 // pred_check_branch
        %182 = sbr.rel (%p180) target = $region28
      $region27: #{adain_resblock_forward.15} parent=23 // pred_region
        %s183 = smul.u32 16, %s17
        %p184 = scmp.lt.s32.totalorder %s183, 63
        %s185 = scalar_select %p184, %s183, 63
        %p186 = scmp.lt.s32.totalorder %s18, 0
        %s187 = scalar_select %p186, %s18, 0
        %s188 = sadd.s32 %s187, %s185
        %s189 = smul.addr %s188, 4
        %s190 = scalar_lea.vmem %s0, %s189
        %s191 = smul.u32 16, %s17
      $region28: #{adain_resblock_forward.15} parent=23 // pred_fallthru
        _
      // Predicated region
      $region29: #{adain_resblock_forward.15} parent=23 // pred_check
        %p192 = pneg %p117
      $region30: #{adain_resblock_forward.15} parent=23 // pred_check_branch
        %194 = sbr.rel (%p192) target = $region32
      $region31: #{adain_resblock_forward.15} parent=23 // pred_region
        %s195 = smul.u32 16, %s17
        %p196 = scmp.lt.s32.totalorder %s195, 63
        %s197 = scalar_select %p196, %s195, 63
        %s198 = smul.addr %s197, 8
        %s199 = scalar_lea.vmem %s3, %s198
        %s200 = smul.u32 16, %s17
      $region32: #{adain_resblock_forward.15} parent=23 // pred_fallthru
        _
    $region24: #{adain_resblock_forward.15} parent=5 // pred_fallthru
      _
    %p201 = scmp.le.s32.totalorder 1, %s10
    %p202 = scmp.lt.s32.totalorder %s10, 5
    %p203 = pnand %p201, %p202
    %p204 = pneg %p203
    // Predicated region
    $region33: #{adain_resblock_forward.15} parent=5 // pred_check
      _
    $region34: #{adain_resblock_forward.15} parent=5 // pred_check_branch
      %206 = sbr.rel (%p203) target = $region36
    $region35: #{adain_resblock_forward.15} parent=5 // pred_region
      %s207 = ssub.s32 %s10, 1
      %s208 = smul.u32 16, %s19
      %p209 = scmp.lt.s32.totalorder %s208, 63
      %s210 = scalar_select %p209, %s208, 63
      %p211 = scmp.lt.s32.totalorder %s20, 0
      %s212 = scalar_select %p211, %s20, 0
      %s213 = sadd.s32 %s212, %s210
      %s214 = smul.addr %s213, 4
      %s215 = scalar_lea.vmem %s0, %s214
      %p216 = pneg %p50
      %p217 = pneg %p47
      %s218 = smul.u32 5, %s20
      %p219 = scmp.lt.s32.totalorder %s218, 4
      %s220 = scalar_select %p219, %s218, 4
      %s221 = smul.addr %s220, 4
      %s222 = scalar_lea.vmem %s1, %s221
      %p223 = pneg %p76
      %p224 = pneg %p73
      %p225 = pneg %p97
      %p226 = pneg %p94
      %s227 = smul.u32 16, %s19
      %p228 = scmp.lt.s32.totalorder %s227, 63
      %s229 = scalar_select %p228, %s227, 63
      %s230 = smul.addr %s229, 8
      %s231 = scalar_lea.vmem %s3, %s230
      %p232 = pneg %p123
      %p233 = pneg %p120
      %p234 = pneg %p149
      %p235 = pneg %p146
      %s236 = smul.u32 16, %s19
      %p237 = scmp.lt.s32.totalorder %s236, 63
      %s238 = scalar_select %p237, %s236, 63
      %s239 = smul.addr %s238, 8
      %s240 = scalar_lea.vmem %s4, %s239
      %s241 = smul.u32 16, %s19
      %p242 = scmp.lt.s32.totalorder %s241, 63
      %s243 = scalar_select %p242, %s241, 63
      %p244 = scmp.lt.s32.totalorder %s20, 0
      %s245 = scalar_select %p244, %s20, 0
      %s246 = sadd.s32 %s245, %s243
      %s247 = smul.addr %s246, 4
      %s248 = scalar_lea.vmem %s0, %s247
      %s249 = smul.u32 16, %s19
      %s250 = smul.u32 5, %s20
      %p251 = scmp.lt.s32.totalorder %s250, 4
      %s252 = scalar_select %p251, %s250, 4
      %s253 = smul.addr %s252, 4
      %s254 = scalar_lea.vmem %s1, %s253
      %s255 = smul.u32 5, %s20
      %s256 = smul.u32 16, %s19
      %p257 = scmp.lt.s32.totalorder %s256, 63
      %s258 = scalar_select %p257, %s256, 63
      %s259 = smul.addr %s258, 8
      %s260 = scalar_lea.vmem %s3, %s259
      %s261 = smul.u32 16, %s19
      %s262 = smul.u32 16, %s19
      %p263 = scmp.lt.s32.totalorder %s262, 63
      %s264 = scalar_select %p263, %s262, 63
      %s265 = smul.addr %s264, 8
      %s266 = scalar_lea.vmem %s4, %s265
      %s267 = smul.u32 16, %s19
      %p269 = scmp.eq.s32.totalorder %s20, 0
      // Predicated region
      $region37: #{adain_resblock_forward.15} parent=35 // pred_check
        %p270 = pneg %p269
      $region38: #{adain_resblock_forward.15} parent=35 // pred_check_branch
        %272 = sbr.rel (%p270) target = $region40
      $region39: #{adain_resblock_forward.15} parent=35 // pred_region
        %vm273 = vcmask 64512
        %274 = vst.msk [vmem:[#allocation2] sm:$0xff] %vm273, 0.0
        %275 = vst.msk [vmem:[#allocation2 + $0x8] sm:$0xff] %vm273, 0.0
        %276 = vst.msk [vmem:[#allocation2 + $0x10] sm:$0xff] %vm273, 0.0
        %277 = vst.msk [vmem:[#allocation2 + $0x18] sm:$0xff] %vm273, 0.0
        %278 = vst.msk [vmem:[#allocation2 + $0x20] sm:$0xff] %vm273, 0.0
        %279 = vst.msk [vmem:[#allocation2 + $0x28] sm:$0xff] %vm273, 0.0
        %280 = vst.msk [vmem:[#allocation2 + $0x30] sm:$0xff] %vm273, 0.0
        %281 = vst.msk [vmem:[#allocation2 + $0x38] sm:$0xff] %vm273, 0.0
        %282 = vst.msk [vmem:[#allocation2 + $0x40] sm:$0xff] %vm273, 0.0
        %283 = vst.msk [vmem:[#allocation2 + $0x48] sm:$0xff] %vm273, 0.0
        %284 = vst.msk [vmem:[#allocation2 + $0x50] sm:$0xff] %vm273, 0.0
        %285 = vst.msk [vmem:[#allocation2 + $0x58] sm:$0xff] %vm273, 0.0
        %286 = vst.msk [vmem:[#allocation2 + $0x60] sm:$0xff] %vm273, 0.0
        %287 = vst.msk [vmem:[#allocation2 + $0x68] sm:$0xff] %vm273, 0.0
        %288 = vst.msk [vmem:[#allocation2 + $0x70] sm:$0xff] %vm273, 0.0
        %289 = vst.msk [vmem:[#allocation2 + $0x78] sm:$0xff] %vm273, 0.0
      $region40: #{adain_resblock_forward.15} parent=35 // pred_fallthru
        _
      %v290 = vld [vmem:[#allocation2] sm:$0xff]
      %v291 = vld [vmem:[#allocation2 + $0x8] sm:$0xff]
      %v292 = vld [vmem:[#allocation2 + $0x10] sm:$0xff]
      %v293 = vld [vmem:[#allocation2 + $0x18] sm:$0xff]
      %v294 = vld [vmem:[#allocation2 + $0x20] sm:$0xff]
      %v295 = vld [vmem:[#allocation2 + $0x28] sm:$0xff]
      %v296 = vld [vmem:[#allocation2 + $0x30] sm:$0xff]
      %v297 = vld [vmem:[#allocation2 + $0x38] sm:$0xff]
      %v298 = vld [vmem:[#allocation2 + $0x40] sm:$0xff]
      %v299 = vld [vmem:[#allocation2 + $0x48] sm:$0xff]
      %v300 = vld [vmem:[#allocation2 + $0x50] sm:$0xff]
      %v301 = vld [vmem:[#allocation2 + $0x58] sm:$0xff]
      %v302 = vld [vmem:[#allocation2 + $0x60] sm:$0xff]
      %v303 = vld [vmem:[#allocation2 + $0x68] sm:$0xff]
      %v304 = vld [vmem:[#allocation2 + $0x70] sm:$0xff]
      %v305 = vld [vmem:[#allocation2 + $0x78] sm:$0xff]
      %v306 = vld [vmem:[%s248] sm:$0xf]
      %v307 = vld [vmem:[%s248 + $0x4] sm:$0xf]
      %v308 = vld [vmem:[%s248 + $0x8] sm:$0xf]
      %v309 = vld [vmem:[%s248 + $0xc] sm:$0xf]
      %v310 = vld [vmem:[%s248 + $0x10] sm:$0xf]
      %v311 = vld [vmem:[%s248 + $0x14] sm:$0xf]
      %v312 = vld [vmem:[%s248 + $0x18] sm:$0xf]
      %v313 = vld [vmem:[%s248 + $0x1c] sm:$0xf]
      %v314 = vld [vmem:[%s248 + $0x20] sm:$0xf]
      %v315 = vld [vmem:[%s248 + $0x24] sm:$0xf]
      %v316 = vld [vmem:[%s248 + $0x28] sm:$0xf]
      %v317 = vld [vmem:[%s248 + $0x2c] sm:$0xf]
      %v318 = vld [vmem:[%s248 + $0x30] sm:$0xf]
      %v319 = vld [vmem:[%s248 + $0x34] sm:$0xf]
      %v320 = vld [vmem:[%s248 + $0x38] sm:$0xf]
      %v321 = vld [vmem:[%s248 + $0x3c] sm:$0xf]
      %v322 = vld [vmem:[%s254] sm:$0xf]
      %v323 = vld [vmem:[%s254 + $0x4] sm:$0xf]
      %v324 = vld [vmem:[%s254 + $0x8] sm:$0xf]
      %v325 = vld [vmem:[%s254 + $0xc] sm:$0xf]
      %v326 = vld [vmem:[%s254 + $0x10] sm:$0x3]
      %v343 = vunpack.c.l.b16 %v306
      %v344 = vunpack.c.l.b16 %v307
      %v345 = vunpack.c.l.b16 %v308
      %v346 = vunpack.c.l.b16 %v309
      %v347 = vunpack.c.l.b16 %v310
      %v348 = vunpack.c.l.b16 %v311
      %v349 = vunpack.c.l.b16 %v312
      %v350 = vunpack.c.l.b16 %v313
      %v351 = vunpack.c.l.b16 %v314
      %v352 = vunpack.c.l.b16 %v315
      %v353 = vunpack.c.l.b16 %v316
      %v354 = vunpack.c.l.b16 %v317
      %v355 = vunpack.c.l.b16 %v318
      %v356 = vunpack.c.l.b16 %v319
      %v357 = vunpack.c.l.b16 %v320
      %v358 = vunpack.c.l.b16 %v321
      %v359 = vpack.c.b16 %v344, %v343
      %v360 = vpack.c.b16 %v346, %v345
      %v361 = vpack.c.b16 %v348, %v347
      %v362 = vpack.c.b16 %v350, %v349
      %v363 = vpack.c.b16 %v352, %v351
      %v364 = vpack.c.b16 %v354, %v353
      %v365 = vpack.c.b16 %v356, %v355
      %v366 = vpack.c.b16 %v358, %v357
      %v372 = vunpack.c.l.b16 %v322
      %v373 = vunpack.c.l.b16 %v323
      %v374 = vunpack.c.l.b16 %v324
      %v375 = vunpack.c.l.b16 %v325
      %v376 = vunpack.c.l.b16 %v326
      %v377 = vpack.c.b16 %v373, %v372
      %v378 = vpack.c.b16 %v375, %v374
      %v379 = vpack.c.b16 %v376, %v376
      %vm382 = vcmask 293888
      %v384 = vsel %vm382, %v359, 0
      %v387 = vsel %vm382, %v360, 0
      %v390 = vsel %vm382, %v361, 0
      %v393 = vsel %vm382, %v362, 0
      %v396 = vsel %vm382, %v363, 0
      %v399 = vsel %vm382, %v364, 0
      %v402 = vsel %vm382, %v365, 0
      %v405 = vsel %vm382, %v366, 0
      %vm407 = vcmask 1041408
      %v409 = vsel %vm407, %v379, 0
      %411 = vmatprep.subr.bf16.mxu0 0
      %412 = vmatpush1.bf16.msra.mxu0 %v377
      %413 = vmatprep.subr.bf16.mxu0 0
      %414 = vmatpush1.bf16.msra.mxu0 %v378
      %415 = vmatprep.subr.bf16.mxu0 0
      %416 = vmatpush1.bf16.msra.mxu0 %v409
      %417 = vmatprep.subr.bf16.mxu0 0
      %418 = vmatpush1.bf16.msra.mxu0 0
      %419 = vmatprep.subr.bf16.mxu0 0
      %420 = vmatpush1.bf16.msra.mxu0 0
      %421 = vmatprep.subr.bf16.mxu0 0
      %422 = vmatpush1.bf16.msra.mxu0 0
      %423 = vmatprep.subr.bf16.mxu0 0
      %424 = vmatpush1.bf16.msra.mxu0 0
      %425 = vmatprep.subr.bf16.mxu0 0
      %426 = vmatpush1.bf16.msra.mxu0 0
      %427 = vmatprep.subr.bf16.mxu0 0
      %428 = vmatpush1.bf16.msra.mxu0 0
      %429 = vmatprep.subr.bf16.mxu0 0
      %430 = vmatpush1.bf16.msra.mxu0 0
      %431 = vmatprep.subr.bf16.mxu0 0
      %432 = vmatpush1.bf16.msra.mxu0 0
      %433 = vmatprep.subr.bf16.mxu0 0
      %434 = vmatpush1.bf16.msra.mxu0 0
      %435 = vmatprep.subr.bf16.mxu0 0
      %436 = vmatpush1.bf16.msra.mxu0 0
      %437 = vmatprep.subr.bf16.mxu0 0
      %438 = vmatpush1.bf16.msra.mxu0 0
      %439 = vmatprep.subr.bf16.mxu0 0
      %440 = vmatpush1.bf16.msra.mxu0 0
      %441 = vmatprep.subr.bf16.mxu0 0
      %442 = vmatpush1.bf16.msra.mxu0 0
      %443 = vmatprep.mubr.bf16.mxu0 0
      %444 = vmatmul.mubr.bf16.gmra.mrb[0].mxu0 %v384
      %v445 = vpop.f32.mrb[0].mxu0
      %v446 = vadd.f32 0.0, %v445
      %v447 = vpop.f32.mrb[0].mxu0
      %v448 = vpop.f32.mrb[0].mxu0
      %v449 = vadd.f32 0.0, %v448
      %v450 = vpop.f32.mrb[0].mxu0
      %451 = vmatprep.mubr.bf16.mxu0 0
      %452 = vmatmul.mubr.bf16.gmra.mrb[0].mxu0 %v387
      %v453 = vpop.f32.mrb[0].mxu0
      %v454 = vadd.f32 0.0, %v453
      %v455 = vpop.f32.mrb[0].mxu0
      %v456 = vpop.f32.mrb[0].mxu0
      %v457 = vadd.f32 0.0, %v456
      %v458 = vpop.f32.mrb[0].mxu0
      %459 = vmatprep.mubr.bf16.mxu0 0
      %460 = vmatmul.mubr.bf16.gmra.mrb[0].mxu0 %v390
      %v461 = vpop.f32.mrb[0].mxu0
      %v462 = vadd.f32 0.0, %v461
      %v463 = vpop.f32.mrb[0].mxu0
      %v464 = vpop.f32.mrb[0].mxu0
      %v465 = vadd.f32 0.0, %v464
      %v466 = vpop.f32.mrb[0].mxu0
      %467 = vmatprep.mubr.bf16.mxu0 0
      %468 = vmatmul.mubr.bf16.gmra.mrb[0].mxu0 %v393
      %v469 = vpop.f32.mrb[0].mxu0
      %v470 = vadd.f32 0.0, %v469
      %v471 = vpop.f32.mrb[0].mxu0
      %v472 = vpop.f32.mrb[0].mxu0
      %v473 = vadd.f32 0.0, %v472
      %v474 = vpop.f32.mrb[0].mxu0
      %475 = vmatprep.mubr.bf16.mxu0 0
      %476 = vmatmul.mubr.bf16.gmra.mrb[0].mxu0 %v396
      %v477 = vpop.f32.mrb[0].mxu0
      %v478 = vadd.f32 0.0, %v477
      %v479 = vpop.f32.mrb[0].mxu0
      %v480 = vpop.f32.mrb[0].mxu0
      %v481 = vadd.f32 0.0, %v480
      %v482 = vpop.f32.mrb[0].mxu0
      %483 = vmatprep.mubr.bf16.mxu0 0
      %484 = vmatmul.mubr.bf16.gmra.mrb[0].mxu0 %v399
      %v485 = vpop.f32.mrb[0].mxu0
      %v486 = vadd.f32 0.0, %v485
      %v487 = vpop.f32.mrb[0].mxu0
      %v488 = vpop.f32.mrb[0].mxu0
      %v489 = vadd.f32 0.0, %v488
      %v490 = vpop.f32.mrb[0].mxu0
      %491 = vmatprep.mubr.bf16.mxu0 0
      %492 = vmatmul.mubr.bf16.gmra.mrb[0].mxu0 %v402
      %v493 = vpop.f32.mrb[0].mxu0
      %v494 = vadd.f32 0.0, %v493
      %v495 = vpop.f32.mrb[0].mxu0
      %v496 = vpop.f32.mrb[0].mxu0
      %v497 = vadd.f32 0.0, %v496
      %v498 = vpop.f32.mrb[0].mxu0
      %499 = vmatprep.mubr.bf16.mxu0 0
      %500 = vmatmul.mubr.bf16.gmra.mrb[0].mxu0 %v405
      %v501 = vpop.f32.mrb[0].mxu0
      %v502 = vadd.f32 0.0, %v501
      %v503 = vpop.f32.mrb[0].mxu0
      %v504 = vpop.f32.mrb[0].mxu0
      %v505 = vadd.f32 0.0, %v504
      %v506 = vpop.f32.mrb[0].mxu0
      %507 = vdwg.mxu0
      %v508 = vadd.f32 %v290, %v446
      %v509 = vadd.f32 %v291, %v449
      %v510 = vadd.f32 %v292, %v454
      %v511 = vadd.f32 %v293, %v457
      %v512 = vadd.f32 %v294, %v462
      %v513 = vadd.f32 %v295, %v465
      %v514 = vadd.f32 %v296, %v470
      %v515 = vadd.f32 %v297, %v473
      %v516 = vadd.f32 %v298, %v478
      %v517 = vadd.f32 %v299, %v481
      %v518 = vadd.f32 %v300, %v486
      %v519 = vadd.f32 %v301, %v489
      %v520 = vadd.f32 %v302, %v494
      %v521 = vadd.f32 %v303, %v497
      %v522 = vadd.f32 %v304, %v502
      %v523 = vadd.f32 %v305, %v505
      %vm524 = vcmask 64512
      %525 = vst.msk [vmem:[#allocation2] sm:$0xff] %vm524, %v508
      %526 = vst.msk [vmem:[#allocation2 + $0x8] sm:$0xff] %vm524, %v509
      %527 = vst.msk [vmem:[#allocation2 + $0x10] sm:$0xff] %vm524, %v510
      %528 = vst.msk [vmem:[#allocation2 + $0x18] sm:$0xff] %vm524, %v511
      %529 = vst.msk [vmem:[#allocation2 + $0x20] sm:$0xff] %vm524, %v512
      %530 = vst.msk [vmem:[#allocation2 + $0x28] sm:$0xff] %vm524, %v513
      %531 = vst.msk [vmem:[#allocation2 + $0x30] sm:$0xff] %vm524, %v514
      %532 = vst.msk [vmem:[#allocation2 + $0x38] sm:$0xff] %vm524, %v515
      %533 = vst.msk [vmem:[#allocation2 + $0x40] sm:$0xff] %vm524, %v516
      %534 = vst.msk [vmem:[#allocation2 + $0x48] sm:$0xff] %vm524, %v517
      %535 = vst.msk [vmem:[#allocation2 + $0x50] sm:$0xff] %vm524, %v518
      %536 = vst.msk [vmem:[#allocation2 + $0x58] sm:$0xff] %vm524, %v519
      %537 = vst.msk [vmem:[#allocation2 + $0x60] sm:$0xff] %vm524, %v520
      %538 = vst.msk [vmem:[#allocation2 + $0x68] sm:$0xff] %vm524, %v521
      %539 = vst.msk [vmem:[#allocation2 + $0x70] sm:$0xff] %vm524, %v522
      %540 = vst.msk [vmem:[#allocation2 + $0x78] sm:$0xff] %vm524, %v523
      // Predicated region
      $region41: #{adain_resblock_forward.15} parent=35 // pred_check
        %p541 = pneg %p269
      $region42: #{adain_resblock_forward.15} parent=35 // pred_check_branch
        %543 = sbr.rel (%p541) target = $region44
      $region43: #{adain_resblock_forward.15} parent=35 // pred_region
        %v544 = vld [vmem:[#allocation2] sm:$0xff]
        %v545 = vld [vmem:[#allocation2 + $0x8] sm:$0xff]
        %v546 = vld [vmem:[#allocation2 + $0x10] sm:$0xff]
        %v547 = vld [vmem:[#allocation2 + $0x18] sm:$0xff]
        %v548 = vld [vmem:[#allocation2 + $0x20] sm:$0xff]
        %v549 = vld [vmem:[#allocation2 + $0x28] sm:$0xff]
        %v550 = vld [vmem:[#allocation2 + $0x30] sm:$0xff]
        %v551 = vld [vmem:[#allocation2 + $0x38] sm:$0xff]
        %v552 = vld [vmem:[#allocation2 + $0x40] sm:$0xff]
        %v553 = vld [vmem:[#allocation2 + $0x48] sm:$0xff]
        %v554 = vld [vmem:[#allocation2 + $0x50] sm:$0xff]
        %v555 = vld [vmem:[#allocation2 + $0x58] sm:$0xff]
        %v556 = vld [vmem:[#allocation2 + $0x60] sm:$0xff]
        %v557 = vld [vmem:[#allocation2 + $0x68] sm:$0xff]
        %v558 = vld [vmem:[#allocation2 + $0x70] sm:$0xff]
        %v559 = vld [vmem:[#allocation2 + $0x78] sm:$0xff]
        %v560 = vld [vmem:[%s2] sm:$0x1]
        %v562 = vlaneseq
        %v563 = vshrl.u32 %v562, 7
        %v564 = vsub.s32 0, %v563
        %v565 = vrot.slane %v560, %v564
        %v567 = vadd.f32 %v544, %v565
        %v568 = vadd.f32 %v545, %v565
        %v569 = vadd.f32 %v546, %v565
        %v570 = vadd.f32 %v547, %v565
        %v571 = vadd.f32 %v548, %v565
        %v572 = vadd.f32 %v549, %v565
        %v573 = vadd.f32 %v550, %v565
        %v574 = vadd.f32 %v551, %v565
        %v575 = vadd.f32 %v552, %v565
        %v576 = vadd.f32 %v553, %v565
        %v577 = vadd.f32 %v554, %v565
        %v578 = vadd.f32 %v555, %v565
        %v579 = vadd.f32 %v556, %v565
        %v580 = vadd.f32 %v557, %v565
        %v581 = vadd.f32 %v558, %v565
        %v582 = vadd.f32 %v559, %v565
        %v583 = vld [vmem:[%s260] sm:$0xff]
        %v584 = vld [vmem:[%s260 + $0x8] sm:$0xff]
        %v585 = vld [vmem:[%s260 + $0x10] sm:$0xff]
        %v586 = vld [vmem:[%s260 + $0x18] sm:$0xff]
        %v587 = vld [vmem:[%s260 + $0x20] sm:$0xff]
        %v588 = vld [vmem:[%s260 + $0x28] sm:$0xff]
        %v589 = vld [vmem:[%s260 + $0x30] sm:$0xff]
        %v590 = vld [vmem:[%s260 + $0x38] sm:$0xff]
        %v591 = vld [vmem:[%s260 + $0x40] sm:$0xff]
        %v592 = vld [vmem:[%s260 + $0x48] sm:$0xff]
        %v593 = vld [vmem:[%s260 + $0x50] sm:$0xff]
        %v594 = vld [vmem:[%s260 + $0x58] sm:$0xff]
        %v595 = vld [vmem:[%s260 + $0x60] sm:$0xff]
        %v596 = vld [vmem:[%s260 + $0x68] sm:$0xff]
        %v597 = vld [vmem:[%s260 + $0x70] sm:$0xff]
        %v598 = vld [vmem:[%s260 + $0x78] sm:$0xff]
        %v599 = vadd.f32 %v567, %v583
        %v600 = vadd.f32 %v568, %v584
        %v601 = vadd.f32 %v569, %v585
        %v602 = vadd.f32 %v570, %v586
        %v603 = vadd.f32 %v571, %v587
        %v604 = vadd.f32 %v572, %v588
        %v605 = vadd.f32 %v573, %v589
        %v606 = vadd.f32 %v574, %v590
        %v607 = vadd.f32 %v575, %v591
        %v608 = vadd.f32 %v576, %v592
        %v609 = vadd.f32 %v577, %v593
        %v610 = vadd.f32 %v578, %v594
        %v611 = vadd.f32 %v579, %v595
        %v612 = vadd.f32 %v580, %v596
        %v613 = vadd.f32 %v581, %v597
        %v614 = vadd.f32 %v582, %v598
        %615 = vst.msk [vmem:[%s266] sm:$0xff] %vm524, %v599
        %616 = vst.msk [vmem:[%s266 + $0x8] sm:$0xff] %vm524, %v600
        %617 = vst.msk [vmem:[%s266 + $0x10] sm:$0xff] %vm524, %v601
        %618 = vst.msk [vmem:[%s266 + $0x18] sm:$0xff] %vm524, %v602
        %619 = vst.msk [vmem:[%s266 + $0x20] sm:$0xff] %vm524, %v603
        %620 = vst.msk [vmem:[%s266 + $0x28] sm:$0xff] %vm524, %v604
        %621 = vst.msk [vmem:[%s266 + $0x30] sm:$0xff] %vm524, %v605
        %622 = vst.msk [vmem:[%s266 + $0x38] sm:$0xff] %vm524, %v606
        %623 = vst.msk [vmem:[%s266 + $0x40] sm:$0xff] %vm524, %v607
        %624 = vst.msk [vmem:[%s266 + $0x48] sm:$0xff] %vm524, %v608
        %625 = vst.msk [vmem:[%s266 + $0x50] sm:$0xff] %vm524, %v609
        %626 = vst.msk [vmem:[%s266 + $0x58] sm:$0xff] %vm524, %v610
        %627 = vst.msk [vmem:[%s266 + $0x60] sm:$0xff] %vm524, %v611
        %628 = vst.msk [vmem:[%s266 + $0x68] sm:$0xff] %vm524, %v612
        %629 = vst.msk [vmem:[%s266 + $0x70] sm:$0xff] %vm524, %v613
        %630 = vst.msk [vmem:[%s266 + $0x78] sm:$0xff] %vm524, %v614
      $region44: #{adain_resblock_forward.15} parent=35 // pred_fallthru
        _
      %s631 = smul.u32 16, %s19
      %p632 = scmp.lt.s32.totalorder %s631, 63
      %s633 = scalar_select %p632, %s631, 63
      %s634 = smul.addr %s633, 8
      %s635 = scalar_lea.vmem %s4, %s634
      // Predicated region
      $region45: #{adain_resblock_forward.15} parent=35 // pred_check
        %p636 = pneg %p146
      $region46: #{adain_resblock_forward.15} parent=35 // pred_check_branch
        %638 = sbr.rel (%p636) target = $region48
      $region47: #{adain_resblock_forward.15} parent=35 // pred_region
        %s639 = smul.u32 16, %s19
      $region48: #{adain_resblock_forward.15} parent=35 // pred_fallthru
        _
    $region36: #{adain_resblock_forward.15} parent=5 // pred_fallthru
      _
    %p640 = scmp.le.s32.totalorder 2, %s10
    // Predicated region
    $region49: #{adain_resblock_forward.15} parent=5 // pred_check
      %p641 = pneg %p640
    $region50: #{adain_resblock_forward.15} parent=5 // pred_check_branch
      %643 = sbr.rel (%p641) target = $region52
    $region51: #{adain_resblock_forward.15} parent=5 // pred_region
      %s644 = ssub.s32 %s10, 2
      // Predicated region
      $region53: #{adain_resblock_forward.15} parent=51 // pred_check
        %p645 = pneg %p152
      $region54: #{adain_resblock_forward.15} parent=51 // pred_check_branch
        %647 = sbr.rel (%p645) target = $region56
      $region55: #{adain_resblock_forward.15} parent=51 // pred_region
        %s648 = smul.u32 16, %s21
        %p649 = scmp.lt.s32.totalorder %s648, 63
        %s650 = scalar_select %p649, %s648, 63
        %s651 = smul.addr %s650, 8
        %s652 = scalar_lea.vmem %s4, %s651
      $region56: #{adain_resblock_forward.15} parent=51 // pred_fallthru
        _
    $region52: #{adain_resblock_forward.15} parent=5 // pred_fallthru
      _
  $region6: #{adain_resblock_forward.15} parent=0 // loop_footer
    %s14 = sadd.s32 1, %s10
  $region7: #{adain_resblock_forward.15} parent=0 // loop_footer_branch
    %9 = sbr.rel target = $region3
  $region8: #{adain_resblock_forward.15} parent=0 // loop_exit
    _

</llo_original>
